<compile_context>
chip_gen: v6e
topology: v6e:2x2x1
jax: 0.10.0
libtpu: 0.0.40
codegen_flags: <defaults>
</compile_context>

<pallas_src>
import jax
import jax.numpy as jnp
from jax.experimental import pallas as pl
from jax.experimental.pallas import tpu as pltpu

# ----------------------------- model configuration -----------------------------
EMBED_DIM   = 32
NUM_HEADS   = 4
HEAD_DIM    = EMBED_DIM // NUM_HEADS
DEPTH       = 4
MULTI_DEPTH = 2
NUM_BLOCKS  = DEPTH - MULTI_DEPTH            # unimodal blocks executed by forward()
MLP_HIDDEN  = int(EMBED_DIM * 4.0)           # 128
PATCH       = 16
FSTRIDE = TSTRIDE = 16
INPUT_FDIM  = 32
INPUT_TDIM  = 64
F_DIM       = (INPUT_FDIM - PATCH) // FSTRIDE + 1     # 2
T_DIM       = (INPUT_TDIM - PATCH) // TSTRIDE + 1     # 4
NUM_PATCHES = F_DIM * T_DIM                           # 8
SEQ         = NUM_PATCHES + 1                         # +1 cls token -> 9
LN_EPS      = 1e-6
SCALE       = HEAD_DIM ** -0.5
NEG_INF     = -1e30
PP          = PATCH * PATCH                           # 256
LANES       = 128

# --- packed-slab row layout (all static) ---
VEC_PER_BLOCK = 8            # ln1_g, ln1_b, b_qkv, b_proj, ln2_g, ln2_b, b1, b2
NORM_ROW      = NUM_BLOCKS * VEC_PER_BLOCK            # 16
ADD_ROW       = NORM_ROW + 2                          # 18 (addterm rows follow)
W_PER_BLOCK   = 3 * EMBED_DIM + MLP_HIDDEN            # 224 rows per block


# ----------------------------- in-kernel helpers -----------------------------
def _erf(x):
    # Exact-GELU needs erf; Abramowitz & Stegun 7.1.26 (|err| < 1.5e-7).
    a1, a2, a3, a4, a5 = 0.254829592, -0.284496736, 1.421413741, -1.453152027, 1.061405429
    p = 0.3275911
    ax = jnp.abs(x)
    t = 1.0 / (1.0 + p * ax)
    poly = ((((a5 * t + a4) * t + a3) * t + a2) * t + a1) * t
    y = 1.0 - poly * jnp.exp(-ax * ax)
    return jnp.where(x >= 0, y, -y)


def _ln(x, g, b):
    mu = jnp.mean(x, axis=-1, keepdims=True)
    xc = x - mu
    var = jnp.mean(xc * xc, axis=-1, keepdims=True)
    return xc * jax.lax.rsqrt(var + LN_EPS) * g + b


# ----------------------------- fused Pallas kernel -----------------------------
def fused_kernel(patches_ref, wslab_ref, vslab_ref, o_ref):
    f32 = jnp.float32
    rows = patches_ref.shape[0]          # B*SEQ (static)
    batch = rows // SEQ

    # Patch embed: (rows, 256) @ (256, 32).  The cls rows of `patches` are zero
    # so they only pick up cls_token + pos_embed from the additive term; patch
    # rows pick up proj bias + pos_embed.  Result is already (rows, D).
    proj_w = wslab_ref[0:PP, 0:EMBED_DIM]                          # (256, 32)
    addterm = vslab_ref[ADD_ROW:ADD_ROW + rows, 0:EMBED_DIM]       # (rows, 32)
    tok = jnp.dot(patches_ref[...], proj_w,
                  preferred_element_type=f32) + addterm

    # Block-diagonal mask generated in-kernel (VPU compares are free);
    # static Python loop over batch avoids integer division.
    rid = jax.lax.broadcasted_iota(jnp.int32, (rows, rows), 0)
    cid = jax.lax.broadcasted_iota(jnp.int32, (rows, rows), 1)
    same = None
    for b in range(batch):
        hit = ((rid >= b * SEQ) & (rid < (b + 1) * SEQ) &
               (cid >= b * SEQ) & (cid < (b + 1) * SEQ))
        same = hit if same is None else (same | hit)
    mask = jnp.where(same, 0.0, NEG_INF).astype(f32)

    for blk in range(NUM_BLOCKS):                                  # static unroll (2)
        vb = blk * VEC_PER_BLOCK
        wb = PP + blk * W_PER_BLOCK

        ln1_g  = vslab_ref[vb + 0:vb + 1, 0:EMBED_DIM]
        ln1_b  = vslab_ref[vb + 1:vb + 2, 0:EMBED_DIM]
        b_qkv  = vslab_ref[vb + 2:vb + 3, :]          # (1,128); lanes >=96 are zero
        b_proj = vslab_ref[vb + 3:vb + 4, 0:EMBED_DIM]
        ln2_g  = vslab_ref[vb + 4:vb + 5, 0:EMBED_DIM]
        ln2_b  = vslab_ref[vb + 5:vb + 6, 0:EMBED_DIM]
        b1     = vslab_ref[vb + 6:vb + 7, 0:MLP_HIDDEN]
        b2     = vslab_ref[vb + 7:vb + 8, 0:EMBED_DIM]

        # --- Attention: LN1 -> ONE fused qkv matmul (lane-dense 128-wide) ---
        xn = _ln(tok, ln1_g, ln1_b)
        w_qkv = wslab_ref[wb:wb + EMBED_DIM, :]                    # (32, 128), zero-padded
        qkv = jnp.dot(xn, w_qkv, preferred_element_type=f32) + b_qkv   # (rows, 128)

        heads = []
        for h in range(NUM_HEADS):                                 # static unroll (4)
            q = qkv[:, h * HEAD_DIM:(h + 1) * HEAD_DIM]
            k = qkv[:, EMBED_DIM + h * HEAD_DIM:EMBED_DIM + (h + 1) * HEAD_DIM]
            v = qkv[:, 2 * EMBED_DIM + h * HEAD_DIM:2 * EMBED_DIM + (h + 1) * HEAD_DIM]
            logits = jax.lax.dot_general(q, k, (((1,), (1,)), ((), ())),
                                         preferred_element_type=f32) * SCALE + mask
            logits = logits - jnp.max(logits, axis=-1, keepdims=True)
            e = jnp.exp(logits)
            denom = jnp.sum(e, axis=-1, keepdims=True)
            r = pl.reciprocal(denom, approx=True)
            r = r * (2.0 - denom * r)          # one Newton step -> ~f32-exact, VPU is idle
            heads.append(jnp.dot(e * r, v, preferred_element_type=f32))   # (rows, 8)

        # Concat over heads (lane axis), then ONE merged output projection.
        head_cat = jnp.concatenate(heads, axis=-1)                 # (rows, 32)
        w_proj = wslab_ref[wb + EMBED_DIM:wb + 2 * EMBED_DIM, 0:EMBED_DIM]
        tok = tok + jnp.dot(head_cat, w_proj, preferred_element_type=f32) + b_proj

        # --- MLP: LN2 -> fc1 -> exact GELU -> fc2 ---
        xn2 = _ln(tok, ln2_g, ln2_b)
        w1 = wslab_ref[wb + 2 * EMBED_DIM:wb + 3 * EMBED_DIM, :]   # (32, 128)
        h1 = jnp.dot(xn2, w1, preferred_element_type=f32) + b1
        h1 = 0.5 * h1 * (1.0 + _erf(h1 * 0.7071067811865476))
        w2 = wslab_ref[wb + 3 * EMBED_DIM:wb + 3 * EMBED_DIM + MLP_HIDDEN, 0:EMBED_DIM]
        tok = tok + jnp.dot(h1, w2, preferred_element_type=f32) + b2

    # Final LayerNorm and the single store of the whole result.
    norm_g = vslab_ref[NORM_ROW:NORM_ROW + 1, 0:EMBED_DIM]
    norm_b = vslab_ref[NORM_ROW + 1:NORM_ROW + 2, 0:EMBED_DIM]
    o_ref[...] = _ln(tok, norm_g, norm_b)


def fused_forward_call(patches_padded, wslab, vslab):
    rows = patches_padded.shape[0]
    return pl.pallas_call(
        fused_kernel,
        out_shape=jax.ShapeDtypeStruct((rows, EMBED_DIM), jnp.float32),
        compiler_params=pltpu.CompilerParams(vmem_limit_bytes=32 * 1024 * 1024),
    )(patches_padded, wslab, vslab)


# ----------------------------- wrapper-side parameter packing -----------------------------
def _pad_lanes(x):
    return jnp.pad(x, ((0, 0), (0, LANES - x.shape[1])))


def pack_param_slabs(params, batch):
    """Pack all small parameters into two lane-dense (rows, 128) f32 slabs."""
    # Vector slab: per-block bias/gain rows, final-norm rows, then addterm rows.
    vrows = []
    for p in params["blocks"]:
        vrows += [p["ln1_g"], p["ln1_b"], p["b_qkv"], p["b_proj"],
                  p["ln2_g"], p["ln2_b"], p["b1"], p["b2"]]
    vrows += [params["norm_g"], params["norm_b"]]
    cls_add = params["cls_token"][0] + params["pos_embed"][0, 0:1]      # (1, D)
    patch_add = params["proj_b"] + params["pos_embed"][0, 1:]           # (Np, D)
    addterm = jnp.tile(jnp.concatenate([cls_add, patch_add], axis=0), (batch, 1))
    vrows += [addterm]
    vslab = jnp.concatenate([_pad_lanes(r) for r in vrows], axis=0)     # (36, 128)

    # Weight slab: proj_w then, per block, w_qkv / w_proj / w1 / w2 row-stacked.
    wrows = [params["proj_w"]]
    for p in params["blocks"]:
        wrows += [p["w_qkv"], p["w_proj"], p["w1"], p["w2"]]
    wslab = jnp.concatenate([_pad_lanes(w) for w in wrows], axis=0)     # (704, 128)
    return wslab, vslab


# ----------------------------- parameters (deterministic, synthetic) -----------------------------
def init_params(key):
    ks = jax.random.split(key, 4 + NUM_BLOCKS)
    nrm = lambda k, shape, std: std * jax.random.normal(k, shape, dtype=jnp.float32)
    params = {
        # Conv2d(1, D, kernel=16, stride=(16,16)) flattened as (P*P, D) matmul weight.
        "proj_w": nrm(ks[0], (PP, EMBED_DIM), 0.02),
        "proj_b": nrm(jax.random.fold_in(ks[0], 1), (1, EMBED_DIM), 0.02),
        "cls_token": nrm(ks[1], (1, 1, EMBED_DIM), 1e-6),
        "pos_embed": 0.02 * jax.random.truncated_normal(
            ks[2], -2.0, 2.0, (1, SEQ, EMBED_DIM), dtype=jnp.float32),
        "norm_g": jnp.ones((1, EMBED_DIM), jnp.float32),
        "norm_b": jnp.zeros((1, EMBED_DIM), jnp.float32),
    }
    blocks = []
    for i in range(NUM_BLOCKS):
        bk = jax.random.split(ks[3 + i], 8)
        blocks.append(dict(
            ln1_g=jnp.ones((1, EMBED_DIM), jnp.float32),
            ln1_b=jnp.zeros((1, EMBED_DIM), jnp.float32),
            w_qkv=nrm(bk[0], (EMBED_DIM, 3 * EMBED_DIM), 0.02),
            b_qkv=nrm(bk[1], (1, 3 * EMBED_DIM), 0.02),      # qkv_bias=True
            w_proj=nrm(bk[2], (EMBED_DIM, EMBED_DIM), 0.02),
            b_proj=nrm(bk[3], (1, EMBED_DIM), 0.02),
            ln2_g=jnp.ones((1, EMBED_DIM), jnp.float32),
            ln2_b=jnp.zeros((1, EMBED_DIM), jnp.float32),
            w1=nrm(bk[4], (EMBED_DIM, MLP_HIDDEN), 0.02),
            b1=nrm(bk[5], (1, MLP_HIDDEN), 0.02),
            w2=nrm(bk[6], (MLP_HIDDEN, EMBED_DIM), 0.02),
            b2=nrm(bk[7], (1, EMBED_DIM), 0.02),
        ))
    params["blocks"] = blocks
    return params


# ----------------------------- forward (modality='uni_A') -----------------------------
def mbt_unimodal_forward(a, v, params):
    B = a.shape[0]
    a = jnp.swapaxes(a, 2, 3)                              # a.transpose(2, 3)
    # Non-overlapping 16x16 patch extraction (kernel == stride) — wrapper-side layout only.
    patches = a.reshape(B, 1, F_DIM, PATCH, T_DIM, PATCH).transpose(0, 2, 4, 1, 3, 5)
    patches = patches.reshape(B, NUM_PATCHES, PP)
    # Zero row per batch where the cls token goes -> matmul output already (B*SEQ, D).
    patches_padded = jnp.concatenate(
        [jnp.zeros((B, 1, PP), jnp.float32), patches], axis=1).reshape(B * SEQ, PP)

    wslab, vslab = pack_param_slabs(params, B)
    out = fused_forward_call(patches_padded, wslab, vslab)
    return out.reshape(B, SEQ, EMBED_DIM), v               # v returned untouched (uni_A)


# ----------------------------- pure-JAX reference -----------------------------
def ref_forward(a, v, params):
    B = a.shape[0]
    a = jnp.swapaxes(a, 2, 3)
    x = a.reshape(B, 1, F_DIM, PATCH, T_DIM, PATCH).transpose(0, 2, 4, 1, 3, 5)
    x = x.reshape(B, NUM_PATCHES, PP)
    tok = x @ params["proj_w"] + params["proj_b"]
    cls = jnp.broadcast_to(params["cls_token"], (B, 1, EMBED_DIM))
    tok = jnp.concatenate([cls, tok], axis=1) + params["pos_embed"]

    def ln(t, g, b):
        mu = t.mean(-1, keepdims=True)
        var = ((t - mu) ** 2).mean(-1, keepdims=True)
        return (t - mu) / jnp.sqrt(var + LN_EPS) * g + b

    for p in params["blocks"]:
        xn = ln(tok, p["ln1_g"], p["ln1_b"])
        qkv = xn @ p["w_qkv"] + p["b_qkv"]
        q, k, vv = jnp.split(qkv, 3, axis=-1)
        h = lambda t: t.reshape(B, SEQ, NUM_HEADS, HEAD_DIM).transpose(0, 2, 1, 3)
        q, k, vv = h(q), h(k), h(vv)
        att = jax.nn.softmax((q @ jnp.swapaxes(k, -1, -2)) * SCALE, axis=-1)
        out = (att @ vv).transpose(0, 2, 1, 3).reshape(B, SEQ, EMBED_DIM)
        tok = tok + out @ p["w_proj"] + p["b_proj"]
        xn2 = ln(tok, p["ln2_g"], p["ln2_b"])
        hid = jax.nn.gelu(xn2 @ p["w1"] + p["b1"], approximate=False)
        tok = tok + hid @ p["w2"] + p["b2"]
    tok = ln(tok, params["norm_g"], params["norm_b"])
    return tok, v


# ----------------------------- main -----------------------------
if __name__ == "__main__":
    key = jax.random.PRNGKey(0)
    ka, kv, kp = jax.random.split(key, 3)
    # audio: (B, 1, input_tdim, input_fdim) NCHW ; video: unused for uni_A
    a = jax.random.normal(ka, (2, 1, INPUT_TDIM, INPUT_FDIM), dtype=jnp.float32)
    v = jax.random.normal(kv, (2, 3, 2, 16, 16), dtype=jnp.float32)
    params = init_params(kp)

    out_a, out_v = jax.jit(mbt_unimodal_forward)(a, v, params)
    out_a = jax.block_until_ready(out_a)

    ref_a, _ = ref_forward(a, v, params)
    max_err = float(jnp.max(jnp.abs(out_a - ref_a)))
    assert out_a.shape == (2, SEQ, EMBED_DIM), out_a.shape
    # Tolerance re-tightened (was 2e-3): the Newton-refined reciprocal removes
    # the approx-EUP softmax error; observed error is ~1e-5 level in f32.
    assert max_err < 5e-4, f"max abs error {max_err}"
    print("KERNEL_OK")
</pallas_src>

<mosaic_0001>
module attributes {stable_mosaic.version = 11 : i64} {
  func.func @fused_kernel(%arg0: memref<18x256xf32, #tpu.memory_space<vmem>>, %arg1: memref<704x128xf32, #tpu.memory_space<vmem>>, %arg2: memref<36x128xf32, #tpu.memory_space<vmem>>, %arg3: memref<18x32xf32, #tpu.memory_space<vmem>>) attributes {dimension_semantics = [], scalar_prefetch = 0 : i64, scratch_operands = 0 : i64, tpu.core_type = #tpu.core_type<tc>} {
    %c0 = arith.constant 0 : index
    %c0_0 = arith.constant 0 : index
    %0 = vector.load %arg1[%c0, %c0_0] : memref<704x128xf32, #tpu.memory_space<vmem>>, vector<256x32xf32>
    %c18 = arith.constant 18 : index
    %c0_1 = arith.constant 0 : index
    %1 = vector.load %arg2[%c18, %c0_1] : memref<36x128xf32, #tpu.memory_space<vmem>>, vector<18x32xf32>
    %c0_2 = arith.constant 0 : index
    %c0_3 = arith.constant 0 : index
    %2 = vector.load %arg0[%c0_2, %c0_3] : memref<18x256xf32, #tpu.memory_space<vmem>>, vector<18x256xf32>
    %cst = arith.constant dense<0.000000e+00> : vector<18x32xf32>
    %3 = tpu.matmul %2, %0, %cst {dimension_numbers = #tpu.dot_dimension_numbers<[1], [0], [0], [1], [0, 0, 1, 1], [], []>} : vector<18x256xf32>, vector<256x32xf32>, vector<18x32xf32> -> vector<18x32xf32>
    %4 = arith.addf %3, %1 : vector<18x32xf32>
    %5 = tpu.iota {dimensions = array<i32: 0>} : vector<18x18xi32>
    %6 = tpu.iota {dimensions = array<i32: 1>} : vector<18x18xi32>
    %c0_i32 = arith.constant 0 : i32
    %7 = vector.broadcast %c0_i32 : i32 to vector<18x18xi32>
    %8 = arith.cmpi sge, %5, %7 : vector<18x18xi32>
    %c9_i32 = arith.constant 9 : i32
    %9 = vector.broadcast %c9_i32 : i32 to vector<18x18xi32>
    %10 = arith.cmpi slt, %5, %9 : vector<18x18xi32>
    %11 = arith.andi %8, %10 : vector<18x18xi1>
    %c0_i32_4 = arith.constant 0 : i32
    %12 = vector.broadcast %c0_i32_4 : i32 to vector<18x18xi32>
    %13 = arith.cmpi sge, %6, %12 : vector<18x18xi32>
    %14 = arith.andi %11, %13 : vector<18x18xi1>
    %c9_i32_5 = arith.constant 9 : i32
    %15 = vector.broadcast %c9_i32_5 : i32 to vector<18x18xi32>
    %16 = arith.cmpi slt, %6, %15 : vector<18x18xi32>
    %17 = arith.andi %14, %16 : vector<18x18xi1>
    %c9_i32_6 = arith.constant 9 : i32
    %18 = vector.broadcast %c9_i32_6 : i32 to vector<18x18xi32>
    %19 = arith.cmpi sge, %5, %18 : vector<18x18xi32>
    %c18_i32 = arith.constant 18 : i32
    %20 = vector.broadcast %c18_i32 : i32 to vector<18x18xi32>
    %21 = arith.cmpi slt, %5, %20 : vector<18x18xi32>
    %22 = arith.andi %19, %21 : vector<18x18xi1>
    %c9_i32_7 = arith.constant 9 : i32
    %23 = vector.broadcast %c9_i32_7 : i32 to vector<18x18xi32>
    %24 = arith.cmpi sge, %6, %23 : vector<18x18xi32>
    %25 = arith.andi %22, %24 : vector<18x18xi1>
    %c18_i32_8 = arith.constant 18 : i32
    %26 = vector.broadcast %c18_i32_8 : i32 to vector<18x18xi32>
    %27 = arith.cmpi slt, %6, %26 : vector<18x18xi32>
    %28 = arith.andi %25, %27 : vector<18x18xi1>
    %29 = arith.ori %17, %28 : vector<18x18xi1>
    %cst_9 = arith.constant 0.000000e+00 : f32
    %cst_10 = arith.constant -1.000000e+30 : f32
    %30 = vector.broadcast %cst_9 : f32 to vector<18x18xf32>
    %31 = vector.broadcast %cst_10 : f32 to vector<18x18xf32>
    %32 = arith.select %29, %30, %31 : vector<18x18xi1>, vector<18x18xf32>
    %c0_11 = arith.constant 0 : index
    %c0_12 = arith.constant 0 : index
    %33 = vector.load %arg2[%c0_11, %c0_12] : memref<36x128xf32, #tpu.memory_space<vmem>>, vector<1x32xf32>
    %c1 = arith.constant 1 : index
    %c0_13 = arith.constant 0 : index
    %34 = vector.load %arg2[%c1, %c0_13] : memref<36x128xf32, #tpu.memory_space<vmem>>, vector<1x32xf32>
    %c2 = arith.constant 2 : index
    %c0_14 = arith.constant 0 : index
    %35 = vector.load %arg2[%c2, %c0_14] : memref<36x128xf32, #tpu.memory_space<vmem>>, vector<1x128xf32>
    %c3 = arith.constant 3 : index
    %c0_15 = arith.constant 0 : index
    %36 = vector.load %arg2[%c3, %c0_15] : memref<36x128xf32, #tpu.memory_space<vmem>>, vector<1x32xf32>
    %c4 = arith.constant 4 : index
    %c0_16 = arith.constant 0 : index
    %37 = vector.load %arg2[%c4, %c0_16] : memref<36x128xf32, #tpu.memory_space<vmem>>, vector<1x32xf32>
    %c5 = arith.constant 5 : index
    %c0_17 = arith.constant 0 : index
    %38 = vector.load %arg2[%c5, %c0_17] : memref<36x128xf32, #tpu.memory_space<vmem>>, vector<1x32xf32>
    %c6 = arith.constant 6 : index
    %c0_18 = arith.constant 0 : index
    %39 = vector.load %arg2[%c6, %c0_18] : memref<36x128xf32, #tpu.memory_space<vmem>>, vector<1x128xf32>
    %c7 = arith.constant 7 : index
    %c0_19 = arith.constant 0 : index
    %40 = vector.load %arg2[%c7, %c0_19] : memref<36x128xf32, #tpu.memory_space<vmem>>, vector<1x32xf32>
    %cst_20 = arith.constant dense<0.000000e+00> : vector<18xf32>
    %41 = vector.multi_reduction <add>, %4, %cst_20 [1] : vector<18x32xf32> to vector<18xf32>
    %42 = vector.shape_cast %41 : vector<18xf32> to vector<18x1xf32>
    %cst_21 = arith.constant 3.200000e+01 : f32
    %43 = vector.broadcast %cst_21 : f32 to vector<18x1xf32>
    %44 = arith.divf %42, %43 : vector<18x1xf32>
    %45 = vector.broadcast %44 : vector<18x1xf32> to vector<18x32xf32>
    %46 = arith.subf %4, %45 : vector<18x32xf32>
    %47 = arith.mulf %46, %46 : vector<18x32xf32>
    %cst_22 = arith.constant dense<0.000000e+00> : vector<18xf32>
    %48 = vector.multi_reduction <add>, %47, %cst_22 [1] : vector<18x32xf32> to vector<18xf32>
    %49 = vector.shape_cast %48 : vector<18xf32> to vector<18x1xf32>
    %cst_23 = arith.constant 3.200000e+01 : f32
    %50 = vector.broadcast %cst_23 : f32 to vector<18x1xf32>
    %51 = arith.divf %49, %50 : vector<18x1xf32>
    %cst_24 = arith.constant 9.99999997E-7 : f32
    %52 = vector.broadcast %cst_24 : f32 to vector<18x1xf32>
    %53 = arith.addf %51, %52 : vector<18x1xf32>
    %54 = math.rsqrt %53 : vector<18x1xf32>
    %55 = vector.broadcast %54 : vector<18x1xf32> to vector<18x32xf32>
    %56 = arith.mulf %46, %55 : vector<18x32xf32>
    %57 = vector.broadcast %33 : vector<1x32xf32> to vector<18x32xf32>
    %58 = arith.mulf %56, %57 : vector<18x32xf32>
    %59 = vector.broadcast %34 : vector<1x32xf32> to vector<18x32xf32>
    %60 = arith.addf %58, %59 : vector<18x32xf32>
    %c256 = arith.constant 256 : index
    %c0_25 = arith.constant 0 : index
    %61 = vector.load %arg1[%c256, %c0_25] : memref<704x128xf32, #tpu.memory_space<vmem>>, vector<32x128xf32>
    %cst_26 = arith.constant dense<0.000000e+00> : vector<18x128xf32>
    %62 = tpu.matmul %60, %61, %cst_26 {dimension_numbers = #tpu.dot_dimension_numbers<[1], [0], [0], [1], [0, 0, 1, 1], [], []>} : vector<18x32xf32>, vector<32x128xf32>, vector<18x128xf32> -> vector<18x128xf32>
    %63 = vector.broadcast %35 : vector<1x128xf32> to vector<18x128xf32>
    %64 = arith.addf %62, %63 : vector<18x128xf32>
    %65 = vector.extract_strided_slice %64 {offsets = [0, 0], sizes = [18, 8], strides = [1, 1]} : vector<18x128xf32> to vector<18x8xf32>
    %66 = vector.extract_strided_slice %64 {offsets = [0, 32], sizes = [18, 8], strides = [1, 1]} : vector<18x128xf32> to vector<18x8xf32>
    %67 = vector.extract_strided_slice %64 {offsets = [0, 64], sizes = [18, 8], strides = [1, 1]} : vector<18x128xf32> to vector<18x8xf32>
    %cst_27 = arith.constant dense<0.000000e+00> : vector<18x18xf32>
    %68 = tpu.matmul %65, %66, %cst_27 {dimension_numbers = #tpu.dot_dimension_numbers<[1], [1], [0], [0], [0, 0, 1, 0], [], []>} : vector<18x8xf32>, vector<18x8xf32>, vector<18x18xf32> -> vector<18x18xf32>
    %cst_28 = arith.constant 0.353553385 : f32
    %69 = vector.broadcast %cst_28 : f32 to vector<18x18xf32>
    %70 = arith.mulf %68, %69 : vector<18x18xf32>
    %71 = arith.addf %70, %32 : vector<18x18xf32>
    %cst_29 = arith.constant dense<0xFF800000> : vector<18xf32>
    %72 = vector.multi_reduction <maximumf>, %71, %cst_29 [1] : vector<18x18xf32> to vector<18xf32>
    %73 = vector.shape_cast %72 : vector<18xf32> to vector<18x1xf32>
    %74 = vector.broadcast %73 : vector<18x1xf32> to vector<18x18xf32>
    %75 = arith.subf %71, %74 : vector<18x18xf32>
    %76 = math.exp %75 : vector<18x18xf32>
    %cst_30 = arith.constant dense<0.000000e+00> : vector<18xf32>
    %77 = vector.multi_reduction <add>, %76, %cst_30 [1] : vector<18x18xf32> to vector<18xf32>
    %78 = vector.shape_cast %77 : vector<18xf32> to vector<18x1xf32>
    %79 = tpu.reciprocal %78 {approx = true} : vector<18x1xf32> -> vector<18x1xf32>
    %80 = arith.mulf %78, %79 : vector<18x1xf32>
    %cst_31 = arith.constant 2.000000e+00 : f32
    %81 = vector.broadcast %cst_31 : f32 to vector<18x1xf32>
    %82 = arith.subf %81, %80 : vector<18x1xf32>
    %83 = arith.mulf %79, %82 : vector<18x1xf32>
    %84 = vector.broadcast %83 : vector<18x1xf32> to vector<18x18xf32>
    %85 = arith.mulf %76, %84 : vector<18x18xf32>
    %cst_32 = arith.constant dense<0.000000e+00> : vector<18x8xf32>
    %86 = tpu.matmul %85, %67, %cst_32 {dimension_numbers = #tpu.dot_dimension_numbers<[1], [0], [0], [1], [0, 0, 1, 1], [], []>} : vector<18x18xf32>, vector<18x8xf32>, vector<18x8xf32> -> vector<18x8xf32>
    %87 = vector.extract_strided_slice %64 {offsets = [0, 8], sizes = [18, 8], strides = [1, 1]} : vector<18x128xf32> to vector<18x8xf32>
    %88 = vector.extract_strided_slice %64 {offsets = [0, 40], sizes = [18, 8], strides = [1, 1]} : vector<18x128xf32> to vector<18x8xf32>
    %89 = vector.extract_strided_slice %64 {offsets = [0, 72], sizes = [18, 8], strides = [1, 1]} : vector<18x128xf32> to vector<18x8xf32>
    %cst_33 = arith.constant dense<0.000000e+00> : vector<18x18xf32>
    %90 = tpu.matmul %87, %88, %cst_33 {dimension_numbers = #tpu.dot_dimension_numbers<[1], [1], [0], [0], [0, 0, 1, 0], [], []>} : vector<18x8xf32>, vector<18x8xf32>, vector<18x18xf32> -> vector<18x18xf32>
    %cst_34 = arith.constant 0.353553385 : f32
    %91 = vector.broadcast %cst_34 : f32 to vector<18x18xf32>
    %92 = arith.mulf %90, %91 : vector<18x18xf32>
    %93 = arith.addf %92, %32 : vector<18x18xf32>
    %cst_35 = arith.constant dense<0xFF800000> : vector<18xf32>
    %94 = vector.multi_reduction <maximumf>, %93, %cst_35 [1] : vector<18x18xf32> to vector<18xf32>
    %95 = vector.shape_cast %94 : vector<18xf32> to vector<18x1xf32>
    %96 = vector.broadcast %95 : vector<18x1xf32> to vector<18x18xf32>
    %97 = arith.subf %93, %96 : vector<18x18xf32>
    %98 = math.exp %97 : vector<18x18xf32>
    %cst_36 = arith.constant dense<0.000000e+00> : vector<18xf32>
    %99 = vector.multi_reduction <add>, %98, %cst_36 [1] : vector<18x18xf32> to vector<18xf32>
    %100 = vector.shape_cast %99 : vector<18xf32> to vector<18x1xf32>
    %101 = tpu.reciprocal %100 {approx = true} : vector<18x1xf32> -> vector<18x1xf32>
    %102 = arith.mulf %100, %101 : vector<18x1xf32>
    %cst_37 = arith.constant 2.000000e+00 : f32
    %103 = vector.broadcast %cst_37 : f32 to vector<18x1xf32>
    %104 = arith.subf %103, %102 : vector<18x1xf32>
    %105 = arith.mulf %101, %104 : vector<18x1xf32>
    %106 = vector.broadcast %105 : vector<18x1xf32> to vector<18x18xf32>
    %107 = arith.mulf %98, %106 : vector<18x18xf32>
    %cst_38 = arith.constant dense<0.000000e+00> : vector<18x8xf32>
    %108 = tpu.matmul %107, %89, %cst_38 {dimension_numbers = #tpu.dot_dimension_numbers<[1], [0], [0], [1], [0, 0, 1, 1], [], []>} : vector<18x18xf32>, vector<18x8xf32>, vector<18x8xf32> -> vector<18x8xf32>
    %109 = vector.extract_strided_slice %64 {offsets = [0, 16], sizes = [18, 8], strides = [1, 1]} : vector<18x128xf32> to vector<18x8xf32>
    %110 = vector.extract_strided_slice %64 {offsets = [0, 48], sizes = [18, 8], strides = [1, 1]} : vector<18x128xf32> to vector<18x8xf32>
    %111 = vector.extract_strided_slice %64 {offsets = [0, 80], sizes = [18, 8], strides = [1, 1]} : vector<18x128xf32> to vector<18x8xf32>
    %cst_39 = arith.constant dense<0.000000e+00> : vector<18x18xf32>
    %112 = tpu.matmul %109, %110, %cst_39 {dimension_numbers = #tpu.dot_dimension_numbers<[1], [1], [0], [0], [0, 0, 1, 0], [], []>} : vector<18x8xf32>, vector<18x8xf32>, vector<18x18xf32> -> vector<18x18xf32>
    %cst_40 = arith.constant 0.353553385 : f32
    %113 = vector.broadcast %cst_40 : f32 to vector<18x18xf32>
    %114 = arith.mulf %112, %113 : vector<18x18xf32>
    %115 = arith.addf %114, %32 : vector<18x18xf32>
    %cst_41 = arith.constant dense<0xFF800000> : vector<18xf32>
    %116 = vector.multi_reduction <maximumf>, %115, %cst_41 [1] : vector<18x18xf32> to vector<18xf32>
    %117 = vector.shape_cast %116 : vector<18xf32> to vector<18x1xf32>
    %118 = vector.broadcast %117 : vector<18x1xf32> to vector<18x18xf32>
    %119 = arith.subf %115, %118 : vector<18x18xf32>
    %120 = math.exp %119 : vector<18x18xf32>
    %cst_42 = arith.constant dense<0.000000e+00> : vector<18xf32>
    %121 = vector.multi_reduction <add>, %120, %cst_42 [1] : vector<18x18xf32> to vector<18xf32>
    %122 = vector.shape_cast %121 : vector<18xf32> to vector<18x1xf32>
    %123 = tpu.reciprocal %122 {approx = true} : vector<18x1xf32> -> vector<18x1xf32>
    %124 = arith.mulf %122, %123 : vector<18x1xf32>
    %cst_43 = arith.constant 2.000000e+00 : f32
    %125 = vector.broadcast %cst_43 : f32 to vector<18x1xf32>
    %126 = arith.subf %125, %124 : vector<18x1xf32>
    %127 = arith.mulf %123, %126 : vector<18x1xf32>
    %128 = vector.broadcast %127 : vector<18x1xf32> to vector<18x18xf32>
    %129 = arith.mulf %120, %128 : vector<18x18xf32>
    %cst_44 = arith.constant dense<0.000000e+00> : vector<18x8xf32>
    %130 = tpu.matmul %129, %111, %cst_44 {dimension_numbers = #tpu.dot_dimension_numbers<[1], [0], [0], [1], [0, 0, 1, 1], [], []>} : vector<18x18xf32>, vector<18x8xf32>, vector<18x8xf32> -> vector<18x8xf32>
    %131 = vector.extract_strided_slice %64 {offsets = [0, 24], sizes = [18, 8], strides = [1, 1]} : vector<18x128xf32> to vector<18x8xf32>
    %132 = vector.extract_strided_slice %64 {offsets = [0, 56], sizes = [18, 8], strides = [1, 1]} : vector<18x128xf32> to vector<18x8xf32>
    %133 = vector.extract_strided_slice %64 {offsets = [0, 88], sizes = [18, 8], strides = [1, 1]} : vector<18x128xf32> to vector<18x8xf32>
    %cst_45 = arith.constant dense<0.000000e+00> : vector<18x18xf32>
    %134 = tpu.matmul %131, %132, %cst_45 {dimension_numbers = #tpu.dot_dimension_numbers<[1], [1], [0], [0], [0, 0, 1, 0], [], []>} : vector<18x8xf32>, vector<18x8xf32>, vector<18x18xf32> -> vector<18x18xf32>
    %cst_46 = arith.constant 0.353553385 : f32
    %135 = vector.broadcast %cst_46 : f32 to vector<18x18xf32>
    %136 = arith.mulf %134, %135 : vector<18x18xf32>
    %137 = arith.addf %136, %32 : vector<18x18xf32>
    %cst_47 = arith.constant dense<0xFF800000> : vector<18xf32>
    %138 = vector.multi_reduction <maximumf>, %137, %cst_47 [1] : vector<18x18xf32> to vector<18xf32>
    %139 = vector.shape_cast %138 : vector<18xf32> to vector<18x1xf32>
    %140 = vector.broadcast %139 : vector<18x1xf32> to vector<18x18xf32>
    %141 = arith.subf %137, %140 : vector<18x18xf32>
    %142 = math.exp %141 : vector<18x18xf32>
    %cst_48 = arith.constant dense<0.000000e+00> : vector<18xf32>
    %143 = vector.multi_reduction <add>, %142, %cst_48 [1] : vector<18x18xf32> to vector<18xf32>
    %144 = vector.shape_cast %143 : vector<18xf32> to vector<18x1xf32>
    %145 = tpu.reciprocal %144 {approx = true} : vector<18x1xf32> -> vector<18x1xf32>
    %146 = arith.mulf %144, %145 : vector<18x1xf32>
    %cst_49 = arith.constant 2.000000e+00 : f32
    %147 = vector.broadcast %cst_49 : f32 to vector<18x1xf32>
    %148 = arith.subf %147, %146 : vector<18x1xf32>
    %149 = arith.mulf %145, %148 : vector<18x1xf32>
    %150 = vector.broadcast %149 : vector<18x1xf32> to vector<18x18xf32>
    %151 = arith.mulf %142, %150 : vector<18x18xf32>
    %cst_50 = arith.constant dense<0.000000e+00> : vector<18x8xf32>
    %152 = tpu.matmul %151, %133, %cst_50 {dimension_numbers = #tpu.dot_dimension_numbers<[1], [0], [0], [1], [0, 0, 1, 1], [], []>} : vector<18x18xf32>, vector<18x8xf32>, vector<18x8xf32> -> vector<18x8xf32>
    %153 = tpu.concatenate %86, %108, %130, %152 in 1 : vector<18x8xf32>, vector<18x8xf32>, vector<18x8xf32>, vector<18x8xf32> -> vector<18x32xf32>
    %c288 = arith.constant 288 : index
    %c0_51 = arith.constant 0 : index
    %154 = vector.load %arg1[%c288, %c0_51] : memref<704x128xf32, #tpu.memory_space<vmem>>, vector<32x32xf32>
    %cst_52 = arith.constant dense<0.000000e+00> : vector<18x32xf32>
    %155 = tpu.matmul %153, %154, %cst_52 {dimension_numbers = #tpu.dot_dimension_numbers<[1], [0], [0], [1], [0, 0, 1, 1], [], []>} : vector<18x32xf32>, vector<32x32xf32>, vector<18x32xf32> -> vector<18x32xf32>
    %156 = arith.addf %4, %155 : vector<18x32xf32>
    %157 = vector.broadcast %36 : vector<1x32xf32> to vector<18x32xf32>
    %158 = arith.addf %156, %157 : vector<18x32xf32>
    %cst_53 = arith.constant dense<0.000000e+00> : vector<18xf32>
    %159 = vector.multi_reduction <add>, %158, %cst_53 [1] : vector<18x32xf32> to vector<18xf32>
    %160 = vector.shape_cast %159 : vector<18xf32> to vector<18x1xf32>
    %cst_54 = arith.constant 3.200000e+01 : f32
    %161 = vector.broadcast %cst_54 : f32 to vector<18x1xf32>
    %162 = arith.divf %160, %161 : vector<18x1xf32>
    %163 = vector.broadcast %162 : vector<18x1xf32> to vector<18x32xf32>
    %164 = arith.subf %158, %163 : vector<18x32xf32>
    %165 = arith.mulf %164, %164 : vector<18x32xf32>
    %cst_55 = arith.constant dense<0.000000e+00> : vector<18xf32>
    %166 = vector.multi_reduction <add>, %165, %cst_55 [1] : vector<18x32xf32> to vector<18xf32>
    %167 = vector.shape_cast %166 : vector<18xf32> to vector<18x1xf32>
    %cst_56 = arith.constant 3.200000e+01 : f32
    %168 = vector.broadcast %cst_56 : f32 to vector<18x1xf32>
    %169 = arith.divf %167, %168 : vector<18x1xf32>
    %cst_57 = arith.constant 9.99999997E-7 : f32
    %170 = vector.broadcast %cst_57 : f32 to vector<18x1xf32>
    %171 = arith.addf %169, %170 : vector<18x1xf32>
    %172 = math.rsqrt %171 : vector<18x1xf32>
    %173 = vector.broadcast %172 : vector<18x1xf32> to vector<18x32xf32>
    %174 = arith.mulf %164, %173 : vector<18x32xf32>
    %175 = vector.broadcast %37 : vector<1x32xf32> to vector<18x32xf32>
    %176 = arith.mulf %174, %175 : vector<18x32xf32>
    %177 = vector.broadcast %38 : vector<1x32xf32> to vector<18x32xf32>
    %178 = arith.addf %176, %177 : vector<18x32xf32>
    %c320 = arith.constant 320 : index
    %c0_58 = arith.constant 0 : index
    %179 = vector.load %arg1[%c320, %c0_58] : memref<704x128xf32, #tpu.memory_space<vmem>>, vector<32x128xf32>
    %cst_59 = arith.constant dense<0.000000e+00> : vector<18x128xf32>
    %180 = tpu.matmul %178, %179, %cst_59 {dimension_numbers = #tpu.dot_dimension_numbers<[1], [0], [0], [1], [0, 0, 1, 1], [], []>} : vector<18x32xf32>, vector<32x128xf32>, vector<18x128xf32> -> vector<18x128xf32>
    %181 = vector.broadcast %39 : vector<1x128xf32> to vector<18x128xf32>
    %182 = arith.addf %180, %181 : vector<18x128xf32>
    %cst_60 = arith.constant 5.000000e-01 : f32
    %183 = vector.broadcast %cst_60 : f32 to vector<18x128xf32>
    %184 = arith.mulf %183, %182 : vector<18x128xf32>
    %cst_61 = arith.constant 0.707106769 : f32
    %185 = vector.broadcast %cst_61 : f32 to vector<18x128xf32>
    %186 = arith.mulf %182, %185 : vector<18x128xf32>
    %187 = math.absf %186 : vector<18x128xf32>
    %cst_62 = arith.constant 0.327591091 : f32
    %188 = vector.broadcast %cst_62 : f32 to vector<18x128xf32>
    %189 = arith.mulf %188, %187 : vector<18x128xf32>
    %cst_63 = arith.constant 1.000000e+00 : f32
    %190 = vector.broadcast %cst_63 : f32 to vector<18x128xf32>
    %191 = arith.addf %190, %189 : vector<18x128xf32>
    %cst_64 = arith.constant 1.000000e+00 : f32
    %192 = vector.broadcast %cst_64 : f32 to vector<18x128xf32>
    %193 = arith.divf %192, %191 : vector<18x128xf32>
    %cst_65 = arith.constant 1.06140542 : f32
    %194 = vector.broadcast %cst_65 : f32 to vector<18x128xf32>
    %195 = arith.mulf %194, %193 : vector<18x128xf32>
    %cst_66 = arith.constant -1.45315206 : f32
    %196 = vector.broadcast %cst_66 : f32 to vector<18x128xf32>
    %197 = arith.addf %195, %196 : vector<18x128xf32>
    %198 = arith.mulf %197, %193 : vector<18x128xf32>
    %cst_67 = arith.constant 1.42141378 : f32
    %199 = vector.broadcast %cst_67 : f32 to vector<18x128xf32>
    %200 = arith.addf %198, %199 : vector<18x128xf32>
    %201 = arith.mulf %200, %193 : vector<18x128xf32>
    %cst_68 = arith.constant -0.284496725 : f32
    %202 = vector.broadcast %cst_68 : f32 to vector<18x128xf32>
    %203 = arith.addf %201, %202 : vector<18x128xf32>
    %204 = arith.mulf %203, %193 : vector<18x128xf32>
    %cst_69 = arith.constant 0.254829586 : f32
    %205 = vector.broadcast %cst_69 : f32 to vector<18x128xf32>
    %206 = arith.addf %204, %205 : vector<18x128xf32>
    %207 = arith.mulf %206, %193 : vector<18x128xf32>
    %cst_70 = arith.constant 0.000000e+00 : f32
    %208 = vector.broadcast %cst_70 : f32 to vector<18x128xf32>
    %209 = arith.subf %208, %187 : vector<18x128xf32>
    %210 = arith.mulf %209, %187 : vector<18x128xf32>
    %211 = math.exp %210 : vector<18x128xf32>
    %212 = arith.mulf %207, %211 : vector<18x128xf32>
    %cst_71 = arith.constant 1.000000e+00 : f32
    %213 = vector.broadcast %cst_71 : f32 to vector<18x128xf32>
    %214 = arith.subf %213, %212 : vector<18x128xf32>
    %cst_72 = arith.constant 0.000000e+00 : f32
    %215 = vector.broadcast %cst_72 : f32 to vector<18x128xf32>
    %216 = arith.cmpf oge, %186, %215 : vector<18x128xf32>
    %cst_73 = arith.constant 0.000000e+00 : f32
    %217 = vector.broadcast %cst_73 : f32 to vector<18x128xf32>
    %218 = arith.subf %217, %214 : vector<18x128xf32>
    %219 = arith.select %216, %214, %218 : vector<18x128xi1>, vector<18x128xf32>
    %cst_74 = arith.constant 1.000000e+00 : f32
    %220 = vector.broadcast %cst_74 : f32 to vector<18x128xf32>
    %221 = arith.addf %220, %219 : vector<18x128xf32>
    %222 = arith.mulf %184, %221 : vector<18x128xf32>
    %c352 = arith.constant 352 : index
    %c0_75 = arith.constant 0 : index
    %223 = vector.load %arg1[%c352, %c0_75] : memref<704x128xf32, #tpu.memory_space<vmem>>, vector<128x32xf32>
    %cst_76 = arith.constant dense<0.000000e+00> : vector<18x32xf32>
    %224 = tpu.matmul %222, %223, %cst_76 {dimension_numbers = #tpu.dot_dimension_numbers<[1], [0], [0], [1], [0, 0, 1, 1], [], []>} : vector<18x128xf32>, vector<128x32xf32>, vector<18x32xf32> -> vector<18x32xf32>
    %225 = arith.addf %158, %224 : vector<18x32xf32>
    %226 = vector.broadcast %40 : vector<1x32xf32> to vector<18x32xf32>
    %227 = arith.addf %225, %226 : vector<18x32xf32>
    %c8 = arith.constant 8 : index
    %c0_77 = arith.constant 0 : index
    %228 = vector.load %arg2[%c8, %c0_77] : memref<36x128xf32, #tpu.memory_space<vmem>>, vector<1x32xf32>
    %c9 = arith.constant 9 : index
    %c0_78 = arith.constant 0 : index
    %229 = vector.load %arg2[%c9, %c0_78] : memref<36x128xf32, #tpu.memory_space<vmem>>, vector<1x32xf32>
    %c10 = arith.constant 10 : index
    %c0_79 = arith.constant 0 : index
    %230 = vector.load %arg2[%c10, %c0_79] : memref<36x128xf32, #tpu.memory_space<vmem>>, vector<1x128xf32>
    %c11 = arith.constant 11 : index
    %c0_80 = arith.constant 0 : index
    %231 = vector.load %arg2[%c11, %c0_80] : memref<36x128xf32, #tpu.memory_space<vmem>>, vector<1x32xf32>
    %c12 = arith.constant 12 : index
    %c0_81 = arith.constant 0 : index
    %232 = vector.load %arg2[%c12, %c0_81] : memref<36x128xf32, #tpu.memory_space<vmem>>, vector<1x32xf32>
    %c13 = arith.constant 13 : index
    %c0_82 = arith.constant 0 : index
    %233 = vector.load %arg2[%c13, %c0_82] : memref<36x128xf32, #tpu.memory_space<vmem>>, vector<1x32xf32>
    %c14 = arith.constant 14 : index
    %c0_83 = arith.constant 0 : index
    %234 = vector.load %arg2[%c14, %c0_83] : memref<36x128xf32, #tpu.memory_space<vmem>>, vector<1x128xf32>
    %c15 = arith.constant 15 : index
    %c0_84 = arith.constant 0 : index
    %235 = vector.load %arg2[%c15, %c0_84] : memref<36x128xf32, #tpu.memory_space<vmem>>, vector<1x32xf32>
    %cst_85 = arith.constant dense<0.000000e+00> : vector<18xf32>
    %236 = vector.multi_reduction <add>, %227, %cst_85 [1] : vector<18x32xf32> to vector<18xf32>
    %237 = vector.shape_cast %236 : vector<18xf32> to vector<18x1xf32>
    %cst_86 = arith.constant 3.200000e+01 : f32
    %238 = vector.broadcast %cst_86 : f32 to vector<18x1xf32>
    %239 = arith.divf %237, %238 : vector<18x1xf32>
    %240 = vector.broadcast %239 : vector<18x1xf32> to vector<18x32xf32>
    %241 = arith.subf %227, %240 : vector<18x32xf32>
    %242 = arith.mulf %241, %241 : vector<18x32xf32>
    %cst_87 = arith.constant dense<0.000000e+00> : vector<18xf32>
    %243 = vector.multi_reduction <add>, %242, %cst_87 [1] : vector<18x32xf32> to vector<18xf32>
    %244 = vector.shape_cast %243 : vector<18xf32> to vector<18x1xf32>
    %cst_88 = arith.constant 3.200000e+01 : f32
    %245 = vector.broadcast %cst_88 : f32 to vector<18x1xf32>
    %246 = arith.divf %244, %245 : vector<18x1xf32>
    %cst_89 = arith.constant 9.99999997E-7 : f32
    %247 = vector.broadcast %cst_89 : f32 to vector<18x1xf32>
    %248 = arith.addf %246, %247 : vector<18x1xf32>
    %249 = math.rsqrt %248 : vector<18x1xf32>
    %250 = vector.broadcast %249 : vector<18x1xf32> to vector<18x32xf32>
    %251 = arith.mulf %241, %250 : vector<18x32xf32>
    %252 = vector.broadcast %228 : vector<1x32xf32> to vector<18x32xf32>
    %253 = arith.mulf %251, %252 : vector<18x32xf32>
    %254 = vector.broadcast %229 : vector<1x32xf32> to vector<18x32xf32>
    %255 = arith.addf %253, %254 : vector<18x32xf32>
    %c480 = arith.constant 480 : index
    %c0_90 = arith.constant 0 : index
    %256 = vector.load %arg1[%c480, %c0_90] : memref<704x128xf32, #tpu.memory_space<vmem>>, vector<32x128xf32>
    %cst_91 = arith.constant dense<0.000000e+00> : vector<18x128xf32>
    %257 = tpu.matmul %255, %256, %cst_91 {dimension_numbers = #tpu.dot_dimension_numbers<[1], [0], [0], [1], [0, 0, 1, 1], [], []>} : vector<18x32xf32>, vector<32x128xf32>, vector<18x128xf32> -> vector<18x128xf32>
    %258 = vector.broadcast %230 : vector<1x128xf32> to vector<18x128xf32>
    %259 = arith.addf %257, %258 : vector<18x128xf32>
    %260 = vector.extract_strided_slice %259 {offsets = [0, 0], sizes = [18, 8], strides = [1, 1]} : vector<18x128xf32> to vector<18x8xf32>
    %261 = vector.extract_strided_slice %259 {offsets = [0, 32], sizes = [18, 8], strides = [1, 1]} : vector<18x128xf32> to vector<18x8xf32>
    %262 = vector.extract_strided_slice %259 {offsets = [0, 64], sizes = [18, 8], strides = [1, 1]} : vector<18x128xf32> to vector<18x8xf32>
    %cst_92 = arith.constant dense<0.000000e+00> : vector<18x18xf32>
    %263 = tpu.matmul %260, %261, %cst_92 {dimension_numbers = #tpu.dot_dimension_numbers<[1], [1], [0], [0], [0, 0, 1, 0], [], []>} : vector<18x8xf32>, vector<18x8xf32>, vector<18x18xf32> -> vector<18x18xf32>
    %cst_93 = arith.constant 0.353553385 : f32
    %264 = vector.broadcast %cst_93 : f32 to vector<18x18xf32>
    %265 = arith.mulf %263, %264 : vector<18x18xf32>
    %266 = arith.addf %265, %32 : vector<18x18xf32>
    %cst_94 = arith.constant dense<0xFF800000> : vector<18xf32>
    %267 = vector.multi_reduction <maximumf>, %266, %cst_94 [1] : vector<18x18xf32> to vector<18xf32>
    %268 = vector.shape_cast %267 : vector<18xf32> to vector<18x1xf32>
    %269 = vector.broadcast %268 : vector<18x1xf32> to vector<18x18xf32>
    %270 = arith.subf %266, %269 : vector<18x18xf32>
    %271 = math.exp %270 : vector<18x18xf32>
    %cst_95 = arith.constant dense<0.000000e+00> : vector<18xf32>
    %272 = vector.multi_reduction <add>, %271, %cst_95 [1] : vector<18x18xf32> to vector<18xf32>
    %273 = vector.shape_cast %272 : vector<18xf32> to vector<18x1xf32>
    %274 = tpu.reciprocal %273 {approx = true} : vector<18x1xf32> -> vector<18x1xf32>
    %275 = arith.mulf %273, %274 : vector<18x1xf32>
    %cst_96 = arith.constant 2.000000e+00 : f32
    %276 = vector.broadcast %cst_96 : f32 to vector<18x1xf32>
    %277 = arith.subf %276, %275 : vector<18x1xf32>
    %278 = arith.mulf %274, %277 : vector<18x1xf32>
    %279 = vector.broadcast %278 : vector<18x1xf32> to vector<18x18xf32>
    %280 = arith.mulf %271, %279 : vector<18x18xf32>
    %cst_97 = arith.constant dense<0.000000e+00> : vector<18x8xf32>
    %281 = tpu.matmul %280, %262, %cst_97 {dimension_numbers = #tpu.dot_dimension_numbers<[1], [0], [0], [1], [0, 0, 1, 1], [], []>} : vector<18x18xf32>, vector<18x8xf32>, vector<18x8xf32> -> vector<18x8xf32>
    %282 = vector.extract_strided_slice %259 {offsets = [0, 8], sizes = [18, 8], strides = [1, 1]} : vector<18x128xf32> to vector<18x8xf32>
    %283 = vector.extract_strided_slice %259 {offsets = [0, 40], sizes = [18, 8], strides = [1, 1]} : vector<18x128xf32> to vector<18x8xf32>
    %284 = vector.extract_strided_slice %259 {offsets = [0, 72], sizes = [18, 8], strides = [1, 1]} : vector<18x128xf32> to vector<18x8xf32>
    %cst_98 = arith.constant dense<0.000000e+00> : vector<18x18xf32>
    %285 = tpu.matmul %282, %283, %cst_98 {dimension_numbers = #tpu.dot_dimension_numbers<[1], [1], [0], [0], [0, 0, 1, 0], [], []>} : vector<18x8xf32>, vector<18x8xf32>, vector<18x18xf32> -> vector<18x18xf32>
    %cst_99 = arith.constant 0.353553385 : f32
    %286 = vector.broadcast %cst_99 : f32 to vector<18x18xf32>
    %287 = arith.mulf %285, %286 : vector<18x18xf32>
    %288 = arith.addf %287, %32 : vector<18x18xf32>
    %cst_100 = arith.constant dense<0xFF800000> : vector<18xf32>
    %289 = vector.multi_reduction <maximumf>, %288, %cst_100 [1] : vector<18x18xf32> to vector<18xf32>
    %290 = vector.shape_cast %289 : vector<18xf32> to vector<18x1xf32>
    %291 = vector.broadcast %290 : vector<18x1xf32> to vector<18x18xf32>
    %292 = arith.subf %288, %291 : vector<18x18xf32>
    %293 = math.exp %292 : vector<18x18xf32>
    %cst_101 = arith.constant dense<0.000000e+00> : vector<18xf32>
    %294 = vector.multi_reduction <add>, %293, %cst_101 [1] : vector<18x18xf32> to vector<18xf32>
    %295 = vector.shape_cast %294 : vector<18xf32> to vector<18x1xf32>
    %296 = tpu.reciprocal %295 {approx = true} : vector<18x1xf32> -> vector<18x1xf32>
    %297 = arith.mulf %295, %296 : vector<18x1xf32>
    %cst_102 = arith.constant 2.000000e+00 : f32
    %298 = vector.broadcast %cst_102 : f32 to vector<18x1xf32>
    %299 = arith.subf %298, %297 : vector<18x1xf32>
    %300 = arith.mulf %296, %299 : vector<18x1xf32>
    %301 = vector.broadcast %300 : vector<18x1xf32> to vector<18x18xf32>
    %302 = arith.mulf %293, %301 : vector<18x18xf32>
    %cst_103 = arith.constant dense<0.000000e+00> : vector<18x8xf32>
    %303 = tpu.matmul %302, %284, %cst_103 {dimension_numbers = #tpu.dot_dimension_numbers<[1], [0], [0], [1], [0, 0, 1, 1], [], []>} : vector<18x18xf32>, vector<18x8xf32>, vector<18x8xf32> -> vector<18x8xf32>
    %304 = vector.extract_strided_slice %259 {offsets = [0, 16], sizes = [18, 8], strides = [1, 1]} : vector<18x128xf32> to vector<18x8xf32>
    %305 = vector.extract_strided_slice %259 {offsets = [0, 48], sizes = [18, 8], strides = [1, 1]} : vector<18x128xf32> to vector<18x8xf32>
    %306 = vector.extract_strided_slice %259 {offsets = [0, 80], sizes = [18, 8], strides = [1, 1]} : vector<18x128xf32> to vector<18x8xf32>
    %cst_104 = arith.constant dense<0.000000e+00> : vector<18x18xf32>
    %307 = tpu.matmul %304, %305, %cst_104 {dimension_numbers = #tpu.dot_dimension_numbers<[1], [1], [0], [0], [0, 0, 1, 0], [], []>} : vector<18x8xf32>, vector<18x8xf32>, vector<18x18xf32> -> vector<18x18xf32>
    %cst_105 = arith.constant 0.353553385 : f32
    %308 = vector.broadcast %cst_105 : f32 to vector<18x18xf32>
    %309 = arith.mulf %307, %308 : vector<18x18xf32>
    %310 = arith.addf %309, %32 : vector<18x18xf32>
    %cst_106 = arith.constant dense<0xFF800000> : vector<18xf32>
    %311 = vector.multi_reduction <maximumf>, %310, %cst_106 [1] : vector<18x18xf32> to vector<18xf32>
    %312 = vector.shape_cast %311 : vector<18xf32> to vector<18x1xf32>
    %313 = vector.broadcast %312 : vector<18x1xf32> to vector<18x18xf32>
    %314 = arith.subf %310, %313 : vector<18x18xf32>
    %315 = math.exp %314 : vector<18x18xf32>
    %cst_107 = arith.constant dense<0.000000e+00> : vector<18xf32>
    %316 = vector.multi_reduction <add>, %315, %cst_107 [1] : vector<18x18xf32> to vector<18xf32>
    %317 = vector.shape_cast %316 : vector<18xf32> to vector<18x1xf32>
    %318 = tpu.reciprocal %317 {approx = true} : vector<18x1xf32> -> vector<18x1xf32>
    %319 = arith.mulf %317, %318 : vector<18x1xf32>
    %cst_108 = arith.constant 2.000000e+00 : f32
    %320 = vector.broadcast %cst_108 : f32 to vector<18x1xf32>
    %321 = arith.subf %320, %319 : vector<18x1xf32>
    %322 = arith.mulf %318, %321 : vector<18x1xf32>
    %323 = vector.broadcast %322 : vector<18x1xf32> to vector<18x18xf32>
    %324 = arith.mulf %315, %323 : vector<18x18xf32>
    %cst_109 = arith.constant dense<0.000000e+00> : vector<18x8xf32>
    %325 = tpu.matmul %324, %306, %cst_109 {dimension_numbers = #tpu.dot_dimension_numbers<[1], [0], [0], [1], [0, 0, 1, 1], [], []>} : vector<18x18xf32>, vector<18x8xf32>, vector<18x8xf32> -> vector<18x8xf32>
    %326 = vector.extract_strided_slice %259 {offsets = [0, 24], sizes = [18, 8], strides = [1, 1]} : vector<18x128xf32> to vector<18x8xf32>
    %327 = vector.extract_strided_slice %259 {offsets = [0, 56], sizes = [18, 8], strides = [1, 1]} : vector<18x128xf32> to vector<18x8xf32>
    %328 = vector.extract_strided_slice %259 {offsets = [0, 88], sizes = [18, 8], strides = [1, 1]} : vector<18x128xf32> to vector<18x8xf32>
    %cst_110 = arith.constant dense<0.000000e+00> : vector<18x18xf32>
    %329 = tpu.matmul %326, %327, %cst_110 {dimension_numbers = #tpu.dot_dimension_numbers<[1], [1], [0], [0], [0, 0, 1, 0], [], []>} : vector<18x8xf32>, vector<18x8xf32>, vector<18x18xf32> -> vector<18x18xf32>
    %cst_111 = arith.constant 0.353553385 : f32
    %330 = vector.broadcast %cst_111 : f32 to vector<18x18xf32>
    %331 = arith.mulf %329, %330 : vector<18x18xf32>
    %332 = arith.addf %331, %32 : vector<18x18xf32>
    %cst_112 = arith.constant dense<0xFF800000> : vector<18xf32>
    %333 = vector.multi_reduction <maximumf>, %332, %cst_112 [1] : vector<18x18xf32> to vector<18xf32>
    %334 = vector.shape_cast %333 : vector<18xf32> to vector<18x1xf32>
    %335 = vector.broadcast %334 : vector<18x1xf32> to vector<18x18xf32>
    %336 = arith.subf %332, %335 : vector<18x18xf32>
    %337 = math.exp %336 : vector<18x18xf32>
    %cst_113 = arith.constant dense<0.000000e+00> : vector<18xf32>
    %338 = vector.multi_reduction <add>, %337, %cst_113 [1] : vector<18x18xf32> to vector<18xf32>
    %339 = vector.shape_cast %338 : vector<18xf32> to vector<18x1xf32>
    %340 = tpu.reciprocal %339 {approx = true} : vector<18x1xf32> -> vector<18x1xf32>
    %341 = arith.mulf %339, %340 : vector<18x1xf32>
    %cst_114 = arith.constant 2.000000e+00 : f32
    %342 = vector.broadcast %cst_114 : f32 to vector<18x1xf32>
    %343 = arith.subf %342, %341 : vector<18x1xf32>
    %344 = arith.mulf %340, %343 : vector<18x1xf32>
    %345 = vector.broadcast %344 : vector<18x1xf32> to vector<18x18xf32>
    %346 = arith.mulf %337, %345 : vector<18x18xf32>
    %cst_115 = arith.constant dense<0.000000e+00> : vector<18x8xf32>
    %347 = tpu.matmul %346, %328, %cst_115 {dimension_numbers = #tpu.dot_dimension_numbers<[1], [0], [0], [1], [0, 0, 1, 1], [], []>} : vector<18x18xf32>, vector<18x8xf32>, vector<18x8xf32> -> vector<18x8xf32>
    %348 = tpu.concatenate %281, %303, %325, %347 in 1 : vector<18x8xf32>, vector<18x8xf32>, vector<18x8xf32>, vector<18x8xf32> -> vector<18x32xf32>
    %c512 = arith.constant 512 : index
    %c0_116 = arith.constant 0 : index
    %349 = vector.load %arg1[%c512, %c0_116] : memref<704x128xf32, #tpu.memory_space<vmem>>, vector<32x32xf32>
    %cst_117 = arith.constant dense<0.000000e+00> : vector<18x32xf32>
    %350 = tpu.matmul %348, %349, %cst_117 {dimension_numbers = #tpu.dot_dimension_numbers<[1], [0], [0], [1], [0, 0, 1, 1], [], []>} : vector<18x32xf32>, vector<32x32xf32>, vector<18x32xf32> -> vector<18x32xf32>
    %351 = arith.addf %227, %350 : vector<18x32xf32>
    %352 = vector.broadcast %231 : vector<1x32xf32> to vector<18x32xf32>
    %353 = arith.addf %351, %352 : vector<18x32xf32>
    %cst_118 = arith.constant dense<0.000000e+00> : vector<18xf32>
    %354 = vector.multi_reduction <add>, %353, %cst_118 [1] : vector<18x32xf32> to vector<18xf32>
    %355 = vector.shape_cast %354 : vector<18xf32> to vector<18x1xf32>
    %cst_119 = arith.constant 3.200000e+01 : f32
    %356 = vector.broadcast %cst_119 : f32 to vector<18x1xf32>
    %357 = arith.divf %355, %356 : vector<18x1xf32>
    %358 = vector.broadcast %357 : vector<18x1xf32> to vector<18x32xf32>
    %359 = arith.subf %353, %358 : vector<18x32xf32>
    %360 = arith.mulf %359, %359 : vector<18x32xf32>
    %cst_120 = arith.constant dense<0.000000e+00> : vector<18xf32>
    %361 = vector.multi_reduction <add>, %360, %cst_120 [1] : vector<18x32xf32> to vector<18xf32>
    %362 = vector.shape_cast %361 : vector<18xf32> to vector<18x1xf32>
    %cst_121 = arith.constant 3.200000e+01 : f32
    %363 = vector.broadcast %cst_121 : f32 to vector<18x1xf32>
    %364 = arith.divf %362, %363 : vector<18x1xf32>
    %cst_122 = arith.constant 9.99999997E-7 : f32
    %365 = vector.broadcast %cst_122 : f32 to vector<18x1xf32>
    %366 = arith.addf %364, %365 : vector<18x1xf32>
    %367 = math.rsqrt %366 : vector<18x1xf32>
    %368 = vector.broadcast %367 : vector<18x1xf32> to vector<18x32xf32>
    %369 = arith.mulf %359, %368 : vector<18x32xf32>
    %370 = vector.broadcast %232 : vector<1x32xf32> to vector<18x32xf32>
    %371 = arith.mulf %369, %370 : vector<18x32xf32>
    %372 = vector.broadcast %233 : vector<1x32xf32> to vector<18x32xf32>
    %373 = arith.addf %371, %372 : vector<18x32xf32>
    %c544 = arith.constant 544 : index
    %c0_123 = arith.constant 0 : index
    %374 = vector.load %arg1[%c544, %c0_123] : memref<704x128xf32, #tpu.memory_space<vmem>>, vector<32x128xf32>
    %cst_124 = arith.constant dense<0.000000e+00> : vector<18x128xf32>
    %375 = tpu.matmul %373, %374, %cst_124 {dimension_numbers = #tpu.dot_dimension_numbers<[1], [0], [0], [1], [0, 0, 1, 1], [], []>} : vector<18x32xf32>, vector<32x128xf32>, vector<18x128xf32> -> vector<18x128xf32>
    %376 = vector.broadcast %234 : vector<1x128xf32> to vector<18x128xf32>
    %377 = arith.addf %375, %376 : vector<18x128xf32>
    %cst_125 = arith.constant 5.000000e-01 : f32
    %378 = vector.broadcast %cst_125 : f32 to vector<18x128xf32>
    %379 = arith.mulf %378, %377 : vector<18x128xf32>
    %cst_126 = arith.constant 0.707106769 : f32
    %380 = vector.broadcast %cst_126 : f32 to vector<18x128xf32>
    %381 = arith.mulf %377, %380 : vector<18x128xf32>
    %382 = math.absf %381 : vector<18x128xf32>
    %cst_127 = arith.constant 0.327591091 : f32
    %383 = vector.broadcast %cst_127 : f32 to vector<18x128xf32>
    %384 = arith.mulf %383, %382 : vector<18x128xf32>
    %cst_128 = arith.constant 1.000000e+00 : f32
    %385 = vector.broadcast %cst_128 : f32 to vector<18x128xf32>
    %386 = arith.addf %385, %384 : vector<18x128xf32>
    %cst_129 = arith.constant 1.000000e+00 : f32
    %387 = vector.broadcast %cst_129 : f32 to vector<18x128xf32>
    %388 = arith.divf %387, %386 : vector<18x128xf32>
    %cst_130 = arith.constant 1.06140542 : f32
    %389 = vector.broadcast %cst_130 : f32 to vector<18x128xf32>
    %390 = arith.mulf %389, %388 : vector<18x128xf32>
    %cst_131 = arith.constant -1.45315206 : f32
    %391 = vector.broadcast %cst_131 : f32 to vector<18x128xf32>
    %392 = arith.addf %390, %391 : vector<18x128xf32>
    %393 = arith.mulf %392, %388 : vector<18x128xf32>
    %cst_132 = arith.constant 1.42141378 : f32
    %394 = vector.broadcast %cst_132 : f32 to vector<18x128xf32>
    %395 = arith.addf %393, %394 : vector<18x128xf32>
    %396 = arith.mulf %395, %388 : vector<18x128xf32>
    %cst_133 = arith.constant -0.284496725 : f32
    %397 = vector.broadcast %cst_133 : f32 to vector<18x128xf32>
    %398 = arith.addf %396, %397 : vector<18x128xf32>
    %399 = arith.mulf %398, %388 : vector<18x128xf32>
    %cst_134 = arith.constant 0.254829586 : f32
    %400 = vector.broadcast %cst_134 : f32 to vector<18x128xf32>
    %401 = arith.addf %399, %400 : vector<18x128xf32>
    %402 = arith.mulf %401, %388 : vector<18x128xf32>
    %cst_135 = arith.constant 0.000000e+00 : f32
    %403 = vector.broadcast %cst_135 : f32 to vector<18x128xf32>
    %404 = arith.subf %403, %382 : vector<18x128xf32>
    %405 = arith.mulf %404, %382 : vector<18x128xf32>
    %406 = math.exp %405 : vector<18x128xf32>
    %407 = arith.mulf %402, %406 : vector<18x128xf32>
    %cst_136 = arith.constant 1.000000e+00 : f32
    %408 = vector.broadcast %cst_136 : f32 to vector<18x128xf32>
    %409 = arith.subf %408, %407 : vector<18x128xf32>
    %cst_137 = arith.constant 0.000000e+00 : f32
    %410 = vector.broadcast %cst_137 : f32 to vector<18x128xf32>
    %411 = arith.cmpf oge, %381, %410 : vector<18x128xf32>
    %cst_138 = arith.constant 0.000000e+00 : f32
    %412 = vector.broadcast %cst_138 : f32 to vector<18x128xf32>
    %413 = arith.subf %412, %409 : vector<18x128xf32>
    %414 = arith.select %411, %409, %413 : vector<18x128xi1>, vector<18x128xf32>
    %cst_139 = arith.constant 1.000000e+00 : f32
    %415 = vector.broadcast %cst_139 : f32 to vector<18x128xf32>
    %416 = arith.addf %415, %414 : vector<18x128xf32>
    %417 = arith.mulf %379, %416 : vector<18x128xf32>
    %c576 = arith.constant 576 : index
    %c0_140 = arith.constant 0 : index
    %418 = vector.load %arg1[%c576, %c0_140] : memref<704x128xf32, #tpu.memory_space<vmem>>, vector<128x32xf32>
    %cst_141 = arith.constant dense<0.000000e+00> : vector<18x32xf32>
    %419 = tpu.matmul %417, %418, %cst_141 {dimension_numbers = #tpu.dot_dimension_numbers<[1], [0], [0], [1], [0, 0, 1, 1], [], []>} : vector<18x128xf32>, vector<128x32xf32>, vector<18x32xf32> -> vector<18x32xf32>
    %420 = arith.addf %353, %419 : vector<18x32xf32>
    %421 = vector.broadcast %235 : vector<1x32xf32> to vector<18x32xf32>
    %422 = arith.addf %420, %421 : vector<18x32xf32>
    %c16 = arith.constant 16 : index
    %c0_142 = arith.constant 0 : index
    %423 = vector.load %arg2[%c16, %c0_142] : memref<36x128xf32, #tpu.memory_space<vmem>>, vector<1x32xf32>
    %c17 = arith.constant 17 : index
    %c0_143 = arith.constant 0 : index
    %424 = vector.load %arg2[%c17, %c0_143] : memref<36x128xf32, #tpu.memory_space<vmem>>, vector<1x32xf32>
    %cst_144 = arith.constant dense<0.000000e+00> : vector<18xf32>
    %425 = vector.multi_reduction <add>, %422, %cst_144 [1] : vector<18x32xf32> to vector<18xf32>
    %426 = vector.shape_cast %425 : vector<18xf32> to vector<18x1xf32>
    %cst_145 = arith.constant 3.200000e+01 : f32
    %427 = vector.broadcast %cst_145 : f32 to vector<18x1xf32>
    %428 = arith.divf %426, %427 : vector<18x1xf32>
    %429 = vector.broadcast %428 : vector<18x1xf32> to vector<18x32xf32>
    %430 = arith.subf %422, %429 : vector<18x32xf32>
    %431 = arith.mulf %430, %430 : vector<18x32xf32>
    %cst_146 = arith.constant dense<0.000000e+00> : vector<18xf32>
    %432 = vector.multi_reduction <add>, %431, %cst_146 [1] : vector<18x32xf32> to vector<18xf32>
    %433 = vector.shape_cast %432 : vector<18xf32> to vector<18x1xf32>
    %cst_147 = arith.constant 3.200000e+01 : f32
    %434 = vector.broadcast %cst_147 : f32 to vector<18x1xf32>
    %435 = arith.divf %433, %434 : vector<18x1xf32>
    %cst_148 = arith.constant 9.99999997E-7 : f32
    %436 = vector.broadcast %cst_148 : f32 to vector<18x1xf32>
    %437 = arith.addf %435, %436 : vector<18x1xf32>
    %438 = math.rsqrt %437 : vector<18x1xf32>
    %439 = vector.broadcast %438 : vector<18x1xf32> to vector<18x32xf32>
    %440 = arith.mulf %430, %439 : vector<18x32xf32>
    %441 = vector.broadcast %423 : vector<1x32xf32> to vector<18x32xf32>
    %442 = arith.mulf %440, %441 : vector<18x32xf32>
    %443 = vector.broadcast %424 : vector<1x32xf32> to vector<18x32xf32>
    %444 = arith.addf %442, %443 : vector<18x32xf32>
    %c0_149 = arith.constant 0 : index
    %c0_150 = arith.constant 0 : index
    %445 = vector.load %arg3[%c0_149, %c0_150] : memref<18x32xf32, #tpu.memory_space<vmem>>, vector<18x32xf32>
    tpu.vector_store %arg3[%c0_149, %c0_150], %444 {strides = array<i32>} : memref<18x32xf32, #tpu.memory_space<vmem>>, vector<18x32xf32>,
    return
  }
}

</mosaic_0001>

<llo_original>
// kernel: tile.9
$region0: #{tile.9}
  %s0 = inlined_call_operand.vmem [shape: f32[2,9,32], index: 0, kind: input, shape index: {}]
  %s1 = inlined_call_operand.vmem [shape: f32[18,32], index: 1, kind: output, shape index: {}]
  %v2 = vld [vmem:[%s0] sm:$0xff]
  %vm3 = vcmask 261120
  %4 = vst.msk [vmem:[%s1] sm:$0xff] %vm3, %v2
  %s5 = scalar_lea.vmem %s0, 8
  %s6 = smov 3
  %v7 = vld [vmem:[%s5] ss:$8 sm:%s6]
  %vm8 = vcmask 261120
  %s9 = scalar_lea.vmem %s1, 8
  %10 = vst.msk [vmem:[%s9] sm:$0x3] %vm8, %v7
  %s11 = scalar_lea.vmem %s0, 17
  %v12 = vld [vmem:[%s11] sm:$0xff]
  %vm13 = vcmask 261120
  %s14 = scalar_lea.vmem %s1, 10
  %15 = vst.msk [vmem:[%s14] sm:$0xff] %vm13, %v12

// kernel: mbt_unimodal_forward.1
$region0: #{mbt_unimodal_forward.1}
  #allocation0 [shape = 'u32[]', space=smem, size = 0x4, offset = 0x4, fixed_abs, tag = 'smem constant byte address 0x4 - core index']
  #allocation1 [shape = 'u32[144,128]{1,0:T(1,128)}', space=vmem, size = 0x12000, scoped, tag = 'internal scratch']
  %s0 = inlined_call_operand.vmem [shape: f32[18,256], index: 0, kind: input, shape index: {}]
  %s1 = inlined_call_operand.vmem [shape: f32[704,128], index: 1, kind: input, shape index: {}]
  %s2 = inlined_call_operand.vmem [shape: f32[36,128], index: 2, kind: input, shape index: {}]
  %s3 = inlined_call_operand.vmem [shape: f32[18,32], index: 3, kind: output, shape index: {}]
  %s4 = sld [smem:[#allocation0]]
  $region22: #{mbt_unimodal_forward.1} parent=0
    _
  %s6 = ssub.s32 1, %s4
  %s7 = scalar_select 0, %s6, %s4
  // Predicated region
  $region2: #{mbt_unimodal_forward.1} parent=0 // pred_check
    _
  $region3: #{mbt_unimodal_forward.1} parent=0 // pred_check_branch
    %9 = sbr.rel (0) target = $region5
  $region4: #{mbt_unimodal_forward.1} parent=0 // pred_region
    _
  $region5: #{mbt_unimodal_forward.1} parent=0 // pred_fallthru
    _
  // Predicated region
  $region6: #{mbt_unimodal_forward.1} parent=0 // pred_check
    _
  $region7: #{mbt_unimodal_forward.1} parent=0 // pred_check_branch
    %11 = sbr.rel (0) target = $region9
  $region8: #{mbt_unimodal_forward.1} parent=0 // pred_region
    _
  $region9: #{mbt_unimodal_forward.1} parent=0 // pred_fallthru
    _
  // Predicated region
  $region10: #{mbt_unimodal_forward.1} parent=0 // pred_check
    _
  $region11: #{mbt_unimodal_forward.1} parent=0 // pred_check_branch
    %13 = sbr.rel (0) target = $region13
  $region12: #{mbt_unimodal_forward.1} parent=0 // pred_region
    _
  $region13: #{mbt_unimodal_forward.1} parent=0 // pred_fallthru
    _
  %v14 = vld [vmem:[%s1] sm:$0xff]
  %v15 = vld [vmem:[%s1 + $0x8] sm:$0xff]
  %v16 = vld [vmem:[%s1 + $0x10] sm:$0xff]
  %v17 = vld [vmem:[%s1 + $0x18] sm:$0xff]
  %v18 = vld [vmem:[%s1 + $0x20] sm:$0xff]
  %v19 = vld [vmem:[%s1 + $0x28] sm:$0xff]
  %v20 = vld [vmem:[%s1 + $0x30] sm:$0xff]
  %v21 = vld [vmem:[%s1 + $0x38] sm:$0xff]
  %v22 = vld [vmem:[%s1 + $0x40] sm:$0xff]
  %v23 = vld [vmem:[%s1 + $0x48] sm:$0xff]
  %v24 = vld [vmem:[%s1 + $0x50] sm:$0xff]
  %v25 = vld [vmem:[%s1 + $0x58] sm:$0xff]
  %v26 = vld [vmem:[%s1 + $0x60] sm:$0xff]
  %v27 = vld [vmem:[%s1 + $0x68] sm:$0xff]
  %v28 = vld [vmem:[%s1 + $0x70] sm:$0xff]
  %v29 = vld [vmem:[%s1 + $0x78] sm:$0xff]
  %v30 = vld [vmem:[%s1 + $0x80] sm:$0xff]
  %v31 = vld [vmem:[%s1 + $0x88] sm:$0xff]
  %v32 = vld [vmem:[%s1 + $0x90] sm:$0xff]
  %v33 = vld [vmem:[%s1 + $0x98] sm:$0xff]
  %v34 = vld [vmem:[%s1 + $0xa0] sm:$0xff]
  %v35 = vld [vmem:[%s1 + $0xa8] sm:$0xff]
  %v36 = vld [vmem:[%s1 + $0xb0] sm:$0xff]
  %v37 = vld [vmem:[%s1 + $0xb8] sm:$0xff]
  %v38 = vld [vmem:[%s1 + $0xc0] sm:$0xff]
  %v39 = vld [vmem:[%s1 + $0xc8] sm:$0xff]
  %v40 = vld [vmem:[%s1 + $0xd0] sm:$0xff]
  %v41 = vld [vmem:[%s1 + $0xd8] sm:$0xff]
  %v42 = vld [vmem:[%s1 + $0xe0] sm:$0xff]
  %v43 = vld [vmem:[%s1 + $0xe8] sm:$0xff]
  %v44 = vld [vmem:[%s1 + $0xf0] sm:$0xff]
  %v45 = vld [vmem:[%s1 + $0xf8] sm:$0xff]
  %v46 = vld [vmem:[%s2 + $0x12] sm:$0xff]
  %v47 = vld [vmem:[%s2 + $0x1a] sm:$0xff]
  %v48 = vld [vmem:[%s2 + $0x22] sm:$0x3]
  %v49 = vld [vmem:[%s0] sm:$0xff]
  %v50 = vld [vmem:[%s0 + $0x8] sm:$0xff]
  %v51 = vld [vmem:[%s0 + $0x10] sm:$0xff]
  %v52 = vld [vmem:[%s0 + $0x18] sm:$0xff]
  %v53 = vld [vmem:[%s0 + $0x20] sm:$0x3]
  %v54 = vld [vmem:[%s0 + $0x28] sm:$0x3]
  %55 = vmatprep.subr.mxu0 0.0
  %56 = vmatpush1.msra.mxu0 %v29
  %57 = vmatprep.subr.mxu0 0.0
  %58 = vmatpush1.msra.mxu0 %v28
  %59 = vmatprep.subr.mxu0 0.0
  %60 = vmatpush1.msra.mxu0 %v27
  %61 = vmatprep.subr.mxu0 0.0
  %62 = vmatpush1.msra.mxu0 %v26
  %63 = vmatprep.subr.mxu0 0.0
  %64 = vmatpush1.msra.mxu0 %v25
  %65 = vmatprep.subr.mxu0 0.0
  %66 = vmatpush1.msra.mxu0 %v24
  %67 = vmatprep.subr.mxu0 0.0
  %68 = vmatpush1.msra.mxu0 %v23
  %69 = vmatprep.subr.mxu0 0.0
  %70 = vmatpush1.msra.mxu0 %v22
  %71 = vmatprep.subr.mxu0 0.0
  %72 = vmatpush1.msra.mxu0 %v21
  %73 = vmatprep.subr.mxu0 0.0
  %74 = vmatpush1.msra.mxu0 %v20
  %75 = vmatprep.subr.mxu0 0.0
  %76 = vmatpush1.msra.mxu0 %v19
  %77 = vmatprep.subr.mxu0 0.0
  %78 = vmatpush1.msra.mxu0 %v18
  %79 = vmatprep.subr.mxu0 0.0
  %80 = vmatpush1.msra.mxu0 %v17
  %81 = vmatprep.subr.mxu0 0.0
  %82 = vmatpush1.msra.mxu0 %v16
  %83 = vmatprep.subr.mxu0 0.0
  %84 = vmatpush1.msra.mxu0 %v15
  %85 = vmatprep.subr.mxu0 0.0
  %86 = vmatpush1.msra.mxu0 %v14
  %87 = vmatprep.subr.mxu0 0.0
  %88 = vmatpush2.msra.mxu0 %v45
  %89 = vmatprep.subr.mxu0 0.0
  %90 = vmatpush2.msra.mxu0 %v44
  %91 = vmatprep.subr.mxu0 0.0
  %92 = vmatpush2.msra.mxu0 %v43
  %93 = vmatprep.subr.mxu0 0.0
  %94 = vmatpush2.msra.mxu0 %v42
  %95 = vmatprep.subr.mxu0 0.0
  %96 = vmatpush2.msra.mxu0 %v41
  %97 = vmatprep.subr.mxu0 0.0
  %98 = vmatpush2.msra.mxu0 %v40
  %99 = vmatprep.subr.mxu0 0.0
  %100 = vmatpush2.msra.mxu0 %v39
  %101 = vmatprep.subr.mxu0 0.0
  %102 = vmatpush2.msra.mxu0 %v38
  %103 = vmatprep.subr.mxu0 0.0
  %104 = vmatpush2.msra.mxu0 %v37
  %105 = vmatprep.subr.mxu0 0.0
  %106 = vmatpush2.msra.mxu0 %v36
  %107 = vmatprep.subr.mxu0 0.0
  %108 = vmatpush2.msra.mxu0 %v35
  %109 = vmatprep.subr.mxu0 0.0
  %110 = vmatpush2.msra.mxu0 %v34
  %111 = vmatprep.subr.mxu0 0.0
  %112 = vmatpush2.msra.mxu0 %v33
  %113 = vmatprep.subr.mxu0 0.0
  %114 = vmatpush2.msra.mxu0 %v32
  %115 = vmatprep.subr.mxu0 0.0
  %116 = vmatpush2.msra.mxu0 %v31
  %117 = vmatprep.subr.mxu0 0.0
  %118 = vmatpush2.msra.mxu0 %v30
  %119 = vmatprep.mubr.f32.mxu0 %v50
  %120 = vmatmul.mubr.f32.gmra.mxu0 %v49
  %v121 = vpop.f32.mrf.mxu0
  %v122 = vadd.f32 %v46, %v121
  %v123 = vpop.f32.mrf.mxu0
  %124 = vmatprep.mubr.f32.mxu0 %v52
  %125 = vmatmul.mubr.f32.gmra.mxu0 %v51
  %v126 = vpop.f32.mrf.mxu0
  %v127 = vadd.f32 %v47, %v126
  %v128 = vpop.f32.mrf.mxu0
  %129 = vmatprep.mubr.f32.mxu0 %v54
  %130 = vmatmul.mubr.f32.gmra.mxu0 %v53
  %v131 = vpop.f32.mrf.mxu0
  %v132 = vadd.f32 %v48, %v131
  %v133 = vpop.f32.mrf.mxu0
  %134 = vdwg.mxu0
  %v135 = vlaneseq
  %v136 = vshrl.u32 %v135, 7
  %v137 = vadd.s32 %v136, 8
  %v138 = vadd.s32 %v136, 16
  %v139 = vlaneseq
  %v140 = vand.u32 %v139, 127
  %vm141 = vcmp.ge.s32.totalorder %v136, 0
  %vm142 = vcmp.ge.s32.totalorder %v137, 0
  %vm143 = vcmp.ge.s32.totalorder %v138, 0
  %vm144 = vcmp.lt.s32.totalorder %v136, 9
  %vm145 = vcmp.lt.s32.totalorder %v137, 9
  %vm146 = vcmp.lt.s32.totalorder %v138, 9
  %vm147 = vmand %vm141, %vm144
  %vm148 = vmand %vm142, %vm145
  %vm149 = vmand %vm143, %vm146
  %vm150 = vcmp.ge.s32.totalorder %v140, 0
  %vm151 = vmand %vm147, %vm150
  %vm152 = vmand %vm148, %vm150
  %vm153 = vmand %vm149, %vm150
  %vm154 = vcmp.lt.s32.totalorder %v140, 9
  %vm155 = vmand %vm151, %vm154
  %vm156 = vmand %vm152, %vm154
  %vm157 = vmand %vm153, %vm154
  %vm158 = vcmp.ge.s32.totalorder %v136, 9
  %vm159 = vcmp.ge.s32.totalorder %v137, 9
  %vm160 = vcmp.ge.s32.totalorder %v138, 9
  %vm161 = vcmp.lt.s32.totalorder %v136, 18
  %vm162 = vcmp.lt.s32.totalorder %v137, 18
  %vm163 = vcmp.lt.s32.totalorder %v138, 18
  %vm164 = vmand %vm158, %vm161
  %vm165 = vmand %vm159, %vm162
  %vm166 = vmand %vm160, %vm163
  %vm167 = vcmp.ge.s32.totalorder %v140, 9
  %vm168 = vmand %vm164, %vm167
  %vm169 = vmand %vm165, %vm167
  %vm170 = vmand %vm166, %vm167
  %vm171 = vcmp.lt.s32.totalorder %v140, 18
  %vm172 = vmand %vm168, %vm171
  %vm173 = vmand %vm169, %vm171
  %vm174 = vmand %vm170, %vm171
  %vm175 = vmor %vm155, %vm172
  %vm176 = vmor %vm156, %vm173
  %vm177 = vmor %vm157, %vm174
  %v178 = vsel %vm175, 0.0, -1e+30
  %v179 = vsel %vm176, 0.0, -1e+30
  %v180 = vsel %vm177, 0.0, -1e+30
  %v181 = vld [vmem:[%s2] sm:$0x1]
  %v182 = vld [vmem:[%s2 + $0x1] sm:$0x1]
  %v183 = vld [vmem:[%s2 + $0x2] sm:$0x1]
  %v184 = vld [vmem:[%s2 + $0x3] sm:$0x1]
  %v185 = vld [vmem:[%s2 + $0x4] sm:$0x1]
  %v186 = vld [vmem:[%s2 + $0x5] sm:$0x1]
  %v187 = vld [vmem:[%s2 + $0x6] sm:$0x1]
  %v188 = vld [vmem:[%s2 + $0x7] sm:$0x1]
  %vm189 = vcmask 261120
  %v190 = vsel %vm189, %v122, 0.0
  %191 = vadd.xlane.f32.xlu0 %v190
  %v192 = vpop.xlane.xlu0 %191
  %v193 = vsel %vm189, %v127, 0.0
  %194 = vadd.xlane.f32.xlu0 %v193
  %v195 = vpop.xlane.xlu0 %194
  %vm196 = vcmask 254976
  %v197 = vsel %vm196, %v132, 0.0
  %198 = vadd.xlane.f32.xlu0 %v197
  %v199 = vpop.xlane.xlu0 %198
  %v200 = vrcp.pop 32.0
  %v201 = vmul.f32 %v192, %v200
  %v202 = vmul.f32 %v195, %v200
  %v203 = vmul.f32 %v199, %v200
  %v204 = vsub.f32 %v122, %v201
  %v205 = vsub.f32 %v127, %v202
  %v206 = vsub.f32 %v132, %v203
  %v207 = vmul.f32 %v204, %v204
  %v208 = vmul.f32 %v205, %v205
  %v209 = vmul.f32 %v206, %v206
  %v210 = vsel %vm189, %v207, 0.0
  %211 = vadd.xlane.f32.xlu0 %v210
  %v212 = vpop.xlane.xlu0 %211
  %v213 = vsel %vm189, %v208, 0.0
  %214 = vadd.xlane.f32.xlu0 %v213
  %v215 = vpop.xlane.xlu0 %214
  %v216 = vsel %vm196, %v209, 0.0
  %217 = vadd.xlane.f32.xlu0 %v216
  %v218 = vpop.xlane.xlu0 %217
  %v219 = vmul.f32 %v212, %v200
  %v220 = vmul.f32 %v215, %v200
  %v221 = vmul.f32 %v218, %v200
  %v222 = vadd.f32 %v219, 1e-06
  %v223 = vadd.f32 %v220, 1e-06
  %v224 = vadd.f32 %v221, 1e-06
  %v225 = vrsqrt.pop %v222
  %v226 = vrsqrt.pop %v223
  %v227 = vrsqrt.pop %v224
  %v228 = vmul.f32 %v204, %v225
  %v229 = vmul.f32 %v205, %v226
  %v230 = vmul.f32 %v206, %v227
  %v231 = vlaneseq
  %v232 = vshrl.u32 %v231, 7
  %v233 = vsub.s32 0, %v232
  %v234 = vrot.slane %v181, %v233
  %v235 = vmul.f32 %v228, %v234
  %v236 = vmul.f32 %v229, %v234
  %v237 = vmul.f32 %v230, %v234
  %v238 = vlaneseq
  %v239 = vshrl.u32 %v238, 7
  %v240 = vsub.s32 0, %v239
  %v241 = vrot.slane %v182, %v240
  %v242 = vadd.f32 %v235, %v241
  %v243 = vadd.f32 %v236, %v241
  %v244 = vadd.f32 %v237, %v241
  %v245 = vld [vmem:[%s1 + $0x100] sm:$0xff]
  %v246 = vld [vmem:[%s1 + $0x108] sm:$0xff]
  %v247 = vld [vmem:[%s1 + $0x110] sm:$0xff]
  %v248 = vld [vmem:[%s1 + $0x118] sm:$0xff]
  %v249 = vlaneseq
  %v250 = vshrl.u32 %v249, 7
  %v251 = vsub.s32 0, %v250
  %v252 = vrot.slane %v183, %v251
  %v254 = vsel %vm189, %v242, 0
  %v257 = vsel %vm189, %v243, 0
  %v260 = vsel %vm189, %v244, 0
  %262 = vmatprep.subr.mxu0 0.0
  %263 = vmatpush1.msra.mxu0 0.0
  %264 = vmatprep.subr.mxu0 0.0
  %265 = vmatpush1.msra.mxu0 0.0
  %266 = vmatprep.subr.mxu0 0.0
  %267 = vmatpush1.msra.mxu0 0.0
  %268 = vmatprep.subr.mxu0 0.0
  %269 = vmatpush1.msra.mxu0 0.0
  %270 = vmatprep.subr.mxu0 0.0
  %271 = vmatpush1.msra.mxu0 0.0
  %272 = vmatprep.subr.mxu0 0.0
  %273 = vmatpush1.msra.mxu0 0.0
  %274 = vmatprep.subr.mxu0 0.0
  %275 = vmatpush1.msra.mxu0 0.0
  %276 = vmatprep.subr.mxu0 0.0
  %277 = vmatpush1.msra.mxu0 0.0
  %278 = vmatprep.subr.mxu0 0.0
  %279 = vmatpush1.msra.mxu0 0.0
  %280 = vmatprep.subr.mxu0 0.0
  %281 = vmatpush1.msra.mxu0 0.0
  %282 = vmatprep.subr.mxu0 0.0
  %283 = vmatpush1.msra.mxu0 0.0
  %284 = vmatprep.subr.mxu0 0.0
  %285 = vmatpush1.msra.mxu0 0.0
  %286 = vmatprep.subr.mxu0 0.0
  %287 = vmatpush1.msra.mxu0 %v248
  %288 = vmatprep.subr.mxu0 0.0
  %289 = vmatpush1.msra.mxu0 %v247
  %290 = vmatprep.subr.mxu0 0.0
  %291 = vmatpush1.msra.mxu0 %v246
  %292 = vmatprep.subr.mxu0 0.0
  %293 = vmatpush1.msra.mxu0 %v245
  %294 = vmatprep.subr.mxu0 0.0
  %295 = vmatpush2.msra.mxu0 0.0
  %296 = vmatprep.subr.mxu0 0.0
  %297 = vmatpush2.msra.mxu0 0.0
  %298 = vmatprep.subr.mxu0 0.0
  %299 = vmatpush2.msra.mxu0 0.0
  %300 = vmatprep.subr.mxu0 0.0
  %301 = vmatpush2.msra.mxu0 0.0
  %302 = vmatprep.subr.mxu0 0.0
  %303 = vmatpush2.msra.mxu0 0.0
  %304 = vmatprep.subr.mxu0 0.0
  %305 = vmatpush2.msra.mxu0 0.0
  %306 = vmatprep.subr.mxu0 0.0
  %307 = vmatpush2.msra.mxu0 0.0
  %308 = vmatprep.subr.mxu0 0.0
  %309 = vmatpush2.msra.mxu0 0.0
  %310 = vmatprep.subr.mxu0 0.0
  %311 = vmatpush2.msra.mxu0 0.0
  %312 = vmatprep.subr.mxu0 0.0
  %313 = vmatpush2.msra.mxu0 0.0
  %314 = vmatprep.subr.mxu0 0.0
  %315 = vmatpush2.msra.mxu0 0.0
  %316 = vmatprep.subr.mxu0 0.0
  %317 = vmatpush2.msra.mxu0 0.0
  %318 = vmatprep.subr.mxu0 0.0
  %319 = vmatpush2.msra.mxu0 0.0
  %320 = vmatprep.subr.mxu0 0.0
  %321 = vmatpush2.msra.mxu0 0.0
  %322 = vmatprep.subr.mxu0 0.0
  %323 = vmatpush2.msra.mxu0 0.0
  %324 = vmatprep.subr.mxu0 0.0
  %325 = vmatpush2.msra.mxu0 0.0
  %326 = vmatprep.mubr.f32.mxu0 0.0
  %327 = vmatmul.mubr.f32.gmra.mxu0 %v254
  %v328 = vpop.f32.mrf.mxu0
  %v329 = vadd.f32 %v252, %v328
  %v330 = vpop.f32.mrf.mxu0
  %331 = vmatprep.mubr.f32.mxu0 0.0
  %332 = vmatmul.mubr.f32.gmra.mxu0 %v257
  %v333 = vpop.f32.mrf.mxu0
  %v334 = vadd.f32 %v252, %v333
  %v335 = vpop.f32.mrf.mxu0
  %336 = vmatprep.mubr.f32.mxu0 0.0
  %337 = vmatmul.mubr.f32.gmra.mxu0 %v260
  %v338 = vpop.f32.mrf.mxu0
  %v339 = vadd.f32 %v252, %v338
  %v340 = vpop.f32.mrf.mxu0
  %341 = vdwg.mxu0
  %345 = vrot.lane.b32.xlu0 %v329, 96
  %v346 = vpop.permute.xlu0 %345
  %347 = vrot.lane.b32.xlu0 %v334, 96
  %v348 = vpop.permute.xlu0 %347
  %349 = vrot.lane.b32.xlu0 %v339, 96
  %v350 = vpop.permute.xlu0 %349
  %vm351 = vcmask 64512
  %v352 = vsel %vm351, %v329, 0
  %v354 = vsel %vm351, %v334, 0
  %v356 = vsel %vm351, %v339, 0
  %v358 = vsel %vm351, %v346, 0
  %v360 = vsel %vm351, %v348, 0
  %v362 = vsel %vm351, %v350, 0
  %364 = vmatprep.subr.mxu0 0.0
  %365 = vmatpush1.xpose.msra.mxu0 0.0
  %366 = vmatprep.subr.mxu0 0.0
  %367 = vmatpush1.xpose.msra.mxu0 0.0
  %368 = vmatprep.subr.mxu0 0.0
  %369 = vmatpush1.xpose.msra.mxu0 0.0
  %370 = vmatprep.subr.mxu0 0.0
  %371 = vmatpush1.xpose.msra.mxu0 0.0
  %372 = vmatprep.subr.mxu0 0.0
  %373 = vmatpush1.xpose.msra.mxu0 0.0
  %374 = vmatprep.subr.mxu0 0.0
  %375 = vmatpush1.xpose.msra.mxu0 0.0
  %376 = vmatprep.subr.mxu0 0.0
  %377 = vmatpush1.xpose.msra.mxu0 0.0
  %378 = vmatprep.subr.mxu0 0.0
  %379 = vmatpush1.xpose.msra.mxu0 0.0
  %380 = vmatprep.subr.mxu0 0.0
  %381 = vmatpush1.xpose.msra.mxu0 0.0
  %382 = vmatprep.subr.mxu0 0.0
  %383 = vmatpush1.xpose.msra.mxu0 0.0
  %384 = vmatprep.subr.mxu0 0.0
  %385 = vmatpush1.xpose.msra.mxu0 0.0
  %386 = vmatprep.subr.mxu0 0.0
  %387 = vmatpush1.xpose.msra.mxu0 0.0
  %388 = vmatprep.subr.mxu0 0.0
  %389 = vmatpush1.xpose.msra.mxu0 0.0
  %390 = vmatprep.subr.mxu0 0.0
  %391 = vmatpush1.xpose.msra.mxu0 %v362
  %392 = vmatprep.subr.mxu0 0.0
  %393 = vmatpush1.xpose.msra.mxu0 %v360
  %394 = vmatprep.subr.mxu0 0.0
  %395 = vmatpush1.xpose.msra.mxu0 %v358
  %396 = vmatprep.subr.mxu0 0.0
  %397 = vmatpush2.xpose.msra.mxu0 0.0
  %398 = vmatprep.subr.mxu0 0.0
  %399 = vmatpush2.xpose.msra.mxu0 0.0
  %400 = vmatprep.subr.mxu0 0.0
  %401 = vmatpush2.xpose.msra.mxu0 0.0
  %402 = vmatprep.subr.mxu0 0.0
  %403 = vmatpush2.xpose.msra.mxu0 0.0
  %404 = vmatprep.subr.mxu0 0.0
  %405 = vmatpush2.xpose.msra.mxu0 0.0
  %406 = vmatprep.subr.mxu0 0.0
  %407 = vmatpush2.xpose.msra.mxu0 0.0
  %408 = vmatprep.subr.mxu0 0.0
  %409 = vmatpush2.xpose.msra.mxu0 0.0
  %410 = vmatprep.subr.mxu0 0.0
  %411 = vmatpush2.xpose.msra.mxu0 0.0
  %412 = vmatprep.subr.mxu0 0.0
  %413 = vmatpush2.xpose.msra.mxu0 0.0
  %414 = vmatprep.subr.mxu0 0.0
  %415 = vmatpush2.xpose.msra.mxu0 0.0
  %416 = vmatprep.subr.mxu0 0.0
  %417 = vmatpush2.xpose.msra.mxu0 0.0
  %418 = vmatprep.subr.mxu0 0.0
  %419 = vmatpush2.xpose.msra.mxu0 0.0
  %420 = vmatprep.subr.mxu0 0.0
  %421 = vmatpush2.xpose.msra.mxu0 0.0
  %422 = vmatprep.subr.mxu0 0.0
  %423 = vmatpush2.xpose.msra.mxu0 0.0
  %424 = vmatprep.subr.mxu0 0.0
  %425 = vmatpush2.xpose.msra.mxu0 0.0
  %426 = vmatprep.subr.mxu0 0.0
  %427 = vmatpush2.xpose.msra.mxu0 0.0
  %428 = vmatprep.mubr.f32.mxu0 0.0
  %429 = vmatmul.mubr.f32.gmra.mxu0 %v352
  %v430 = vpop.f32.mrf.mxu0
  %v431 = vadd.f32 0.0, %v430
  %v432 = vpop.f32.mrf.mxu0
  %433 = vmatprep.mubr.f32.mxu0 0.0
  %434 = vmatmul.mubr.f32.gmra.mxu0 %v354
  %v435 = vpop.f32.mrf.mxu0
  %v436 = vadd.f32 0.0, %v435
  %v437 = vpop.f32.mrf.mxu0
  %438 = vmatprep.mubr.f32.mxu0 0.0
  %439 = vmatmul.mubr.f32.gmra.mxu0 %v356
  %v440 = vpop.f32.mrf.mxu0
  %v441 = vadd.f32 0.0, %v440
  %v442 = vpop.f32.mrf.mxu0
  %443 = vdwg.mxu0
  %v444 = vmul.f32 %v431, 0.35355338
  %v445 = vmul.f32 %v436, 0.35355338
  %v446 = vmul.f32 %v441, 0.35355338
  %v447 = vadd.f32 %v444, %v178
  %v448 = vadd.f32 %v445, %v179
  %v449 = vadd.f32 %v446, %v180
  %vm450 = vcmask 146432
  %v451 = vsel %vm450, %v447, -inf
  %452 = vmax.xlane.f32.xlu0 %v451
  %v453 = vpop.xlane.xlu0 %452
  %v454 = vsel %vm450, %v448, -inf
  %455 = vmax.xlane.f32.xlu0 %v454
  %v456 = vpop.xlane.xlu0 %455
  %vm457 = vcmask 140288
  %v458 = vsel %vm457, %v449, -inf
  %459 = vmax.xlane.f32.xlu0 %v458
  %v460 = vpop.xlane.xlu0 %459
  %v461 = vsub.f32 %v447, %v453
  %v462 = vsub.f32 %v448, %v456
  %v463 = vsub.f32 %v449, %v460
  %v464 = vmul.f32 %v461, 1.442695
  %v465 = vpow.pop %v464
  %v466 = vmul.f32 %v462, 1.442695
  %v467 = vpow.pop %v466
  %v468 = vmul.f32 %v463, 1.442695
  %v469 = vpow.pop %v468
  %v470 = vsel %vm450, %v465, 0.0
  %471 = vadd.xlane.f32.xlu0 %v470
  %v472 = vpop.xlane.xlu0 %471
  %v473 = vsel %vm450, %v467, 0.0
  %474 = vadd.xlane.f32.xlu0 %v473
  %v475 = vpop.xlane.xlu0 %474
  %v476 = vsel %vm457, %v469, 0.0
  %477 = vadd.xlane.f32.xlu0 %v476
  %v478 = vpop.xlane.xlu0 %477
  %v479 = vrcp.pop %v472
  %v480 = vrcp.pop %v475
  %v481 = vrcp.pop %v478
  %v482 = vmul.f32 %v472, %v479
  %v483 = vmul.f32 %v475, %v480
  %v484 = vmul.f32 %v478, %v481
  %v485 = vsub.f32 2.0, %v482
  %v486 = vsub.f32 2.0, %v483
  %v487 = vsub.f32 2.0, %v484
  %v488 = vmul.f32 %v479, %v485
  %v489 = vmul.f32 %v480, %v486
  %v490 = vmul.f32 %v481, %v487
  %v491 = vmul.f32 %v465, %v488
  %v492 = vmul.f32 %v467, %v489
  %v493 = vmul.f32 %v469, %v490
  %494 = vrot.lane.b32.xlu0 %v329, 64
  %v495 = vpop.permute.xlu0 %494
  %496 = vrot.lane.b32.xlu0 %v334, 64
  %v497 = vpop.permute.xlu0 %496
  %498 = vrot.lane.b32.xlu0 %v339, 64
  %v499 = vpop.permute.xlu0 %498
  %v503 = vsel %vm450, %v491, 0
  %v506 = vsel %vm450, %v492, 0
  %v509 = vsel %vm450, %v493, 0
  %vm511 = vcmask 1041408
  %v512 = vsel %vm511, %v499, 0
  %514 = vmatprep.subr.mxu0 0.0
  %515 = vmatpush1.msra.mxu0 0.0
  %516 = vmatprep.subr.mxu0 0.0
  %517 = vmatpush1.msra.mxu0 0.0
  %518 = vmatprep.subr.mxu0 0.0
  %519 = vmatpush1.msra.mxu0 0.0
  %520 = vmatprep.subr.mxu0 0.0
  %521 = vmatpush1.msra.mxu0 0.0
  %522 = vmatprep.subr.mxu0 0.0
  %523 = vmatpush1.msra.mxu0 0.0
  %524 = vmatprep.subr.mxu0 0.0
  %525 = vmatpush1.msra.mxu0 0.0
  %526 = vmatprep.subr.mxu0 0.0
  %527 = vmatpush1.msra.mxu0 0.0
  %528 = vmatprep.subr.mxu0 0.0
  %529 = vmatpush1.msra.mxu0 0.0
  %530 = vmatprep.subr.mxu0 0.0
  %531 = vmatpush1.msra.mxu0 0.0
  %532 = vmatprep.subr.mxu0 0.0
  %533 = vmatpush1.msra.mxu0 0.0
  %534 = vmatprep.subr.mxu0 0.0
  %535 = vmatpush1.msra.mxu0 0.0
  %536 = vmatprep.subr.mxu0 0.0
  %537 = vmatpush1.msra.mxu0 0.0
  %538 = vmatprep.subr.mxu0 0.0
  %539 = vmatpush1.msra.mxu0 0.0
  %540 = vmatprep.subr.mxu0 0.0
  %541 = vmatpush1.msra.mxu0 %v512
  %542 = vmatprep.subr.mxu0 0.0
  %543 = vmatpush1.msra.mxu0 %v497
  %544 = vmatprep.subr.mxu0 0.0
  %545 = vmatpush1.msra.mxu0 %v495
  %546 = vmatprep.subr.mxu0 0.0
  %547 = vmatpush2.msra.mxu0 0.0
  %548 = vmatprep.subr.mxu0 0.0
  %549 = vmatpush2.msra.mxu0 0.0
  %550 = vmatprep.subr.mxu0 0.0
  %551 = vmatpush2.msra.mxu0 0.0
  %552 = vmatprep.subr.mxu0 0.0
  %553 = vmatpush2.msra.mxu0 0.0
  %554 = vmatprep.subr.mxu0 0.0
  %555 = vmatpush2.msra.mxu0 0.0
  %556 = vmatprep.subr.mxu0 0.0
  %557 = vmatpush2.msra.mxu0 0.0
  %558 = vmatprep.subr.mxu0 0.0
  %559 = vmatpush2.msra.mxu0 0.0
  %560 = vmatprep.subr.mxu0 0.0
  %561 = vmatpush2.msra.mxu0 0.0
  %562 = vmatprep.subr.mxu0 0.0
  %563 = vmatpush2.msra.mxu0 0.0
  %564 = vmatprep.subr.mxu0 0.0
  %565 = vmatpush2.msra.mxu0 0.0
  %566 = vmatprep.subr.mxu0 0.0
  %567 = vmatpush2.msra.mxu0 0.0
  %568 = vmatprep.subr.mxu0 0.0
  %569 = vmatpush2.msra.mxu0 0.0
  %570 = vmatprep.subr.mxu0 0.0
  %571 = vmatpush2.msra.mxu0 0.0
  %572 = vmatprep.subr.mxu0 0.0
  %573 = vmatpush2.msra.mxu0 0.0
  %574 = vmatprep.subr.mxu0 0.0
  %575 = vmatpush2.msra.mxu0 0.0
  %576 = vmatprep.subr.mxu0 0.0
  %577 = vmatpush2.msra.mxu0 0.0
  %578 = vmatprep.mubr.f32.mxu0 0.0
  %579 = vmatmul.mubr.f32.gmra.mxu0 %v503
  %v580 = vpop.f32.mrf.mxu0
  %v581 = vadd.f32 0.0, %v580
  %v582 = vpop.f32.mrf.mxu0
  %583 = vmatprep.mubr.f32.mxu0 0.0
  %584 = vmatmul.mubr.f32.gmra.mxu0 %v506
  %v585 = vpop.f32.mrf.mxu0
  %v586 = vadd.f32 0.0, %v585
  %v587 = vpop.f32.mrf.mxu0
  %588 = vmatprep.mubr.f32.mxu0 0.0
  %589 = vmatmul.mubr.f32.gmra.mxu0 %v509
  %v590 = vpop.f32.mrf.mxu0
  %v591 = vadd.f32 0.0, %v590
  %v592 = vpop.f32.mrf.mxu0
  %593 = vdwg.mxu0
  %594 = vrot.lane.b32.xlu0 %v329, 120
  %v595 = vpop.permute.xlu0 %594
  %596 = vrot.lane.b32.xlu0 %v334, 120
  %v597 = vpop.permute.xlu0 %596
  %598 = vrot.lane.b32.xlu0 %v339, 120
  %v599 = vpop.permute.xlu0 %598
  %600 = vrot.lane.b32.xlu0 %v329, 88
  %v601 = vpop.permute.xlu0 %600
  %602 = vrot.lane.b32.xlu0 %v334, 88
  %v603 = vpop.permute.xlu0 %602
  %604 = vrot.lane.b32.xlu0 %v339, 88
  %v605 = vpop.permute.xlu0 %604
  %v606 = vsel %vm351, %v595, 0
  %v608 = vsel %vm351, %v597, 0
  %v610 = vsel %vm351, %v599, 0
  %v612 = vsel %vm351, %v601, 0
  %v614 = vsel %vm351, %v603, 0
  %v616 = vsel %vm351, %v605, 0
  %618 = vmatprep.subr.mxu0 0.0
  %619 = vmatpush1.xpose.msra.mxu0 0.0
  %620 = vmatprep.subr.mxu0 0.0
  %621 = vmatpush1.xpose.msra.mxu0 0.0
  %622 = vmatprep.subr.mxu0 0.0
  %623 = vmatpush1.xpose.msra.mxu0 0.0
  %624 = vmatprep.subr.mxu0 0.0
  %625 = vmatpush1.xpose.msra.mxu0 0.0
  %626 = vmatprep.subr.mxu0 0.0
  %627 = vmatpush1.xpose.msra.mxu0 0.0
  %628 = vmatprep.subr.mxu0 0.0
  %629 = vmatpush1.xpose.msra.mxu0 0.0
  %630 = vmatprep.subr.mxu0 0.0
  %631 = vmatpush1.xpose.msra.mxu0 0.0
  %632 = vmatprep.subr.mxu0 0.0
  %633 = vmatpush1.xpose.msra.mxu0 0.0
  %634 = vmatprep.subr.mxu0 0.0
  %635 = vmatpush1.xpose.msra.mxu0 0.0
  %636 = vmatprep.subr.mxu0 0.0
  %637 = vmatpush1.xpose.msra.mxu0 0.0
  %638 = vmatprep.subr.mxu0 0.0
  %639 = vmatpush1.xpose.msra.mxu0 0.0
  %640 = vmatprep.subr.mxu0 0.0
  %641 = vmatpush1.xpose.msra.mxu0 0.0
  %642 = vmatprep.subr.mxu0 0.0
  %643 = vmatpush1.xpose.msra.mxu0 0.0
  %644 = vmatprep.subr.mxu0 0.0
  %645 = vmatpush1.xpose.msra.mxu0 %v616
  %646 = vmatprep.subr.mxu0 0.0
  %647 = vmatpush1.xpose.msra.mxu0 %v614
  %648 = vmatprep.subr.mxu0 0.0
  %649 = vmatpush1.xpose.msra.mxu0 %v612
  %650 = vmatprep.subr.mxu0 0.0
  %651 = vmatpush2.xpose.msra.mxu0 0.0
  %652 = vmatprep.subr.mxu0 0.0
  %653 = vmatpush2.xpose.msra.mxu0 0.0
  %654 = vmatprep.subr.mxu0 0.0
  %655 = vmatpush2.xpose.msra.mxu0 0.0
  %656 = vmatprep.subr.mxu0 0.0
  %657 = vmatpush2.xpose.msra.mxu0 0.0
  %658 = vmatprep.subr.mxu0 0.0
  %659 = vmatpush2.xpose.msra.mxu0 0.0
  %660 = vmatprep.subr.mxu0 0.0
  %661 = vmatpush2.xpose.msra.mxu0 0.0
  %662 = vmatprep.subr.mxu0 0.0
  %663 = vmatpush2.xpose.msra.mxu0 0.0
  %664 = vmatprep.subr.mxu0 0.0
  %665 = vmatpush2.xpose.msra.mxu0 0.0
  %666 = vmatprep.subr.mxu0 0.0
  %667 = vmatpush2.xpose.msra.mxu0 0.0
  %668 = vmatprep.subr.mxu0 0.0
  %669 = vmatpush2.xpose.msra.mxu0 0.0
  %670 = vmatprep.subr.mxu0 0.0
  %671 = vmatpush2.xpose.msra.mxu0 0.0
  %672 = vmatprep.subr.mxu0 0.0
  %673 = vmatpush2.xpose.msra.mxu0 0.0
  %674 = vmatprep.subr.mxu0 0.0
  %675 = vmatpush2.xpose.msra.mxu0 0.0
  %676 = vmatprep.subr.mxu0 0.0
  %677 = vmatpush2.xpose.msra.mxu0 0.0
  %678 = vmatprep.subr.mxu0 0.0
  %679 = vmatpush2.xpose.msra.mxu0 0.0
  %680 = vmatprep.subr.mxu0 0.0
  %681 = vmatpush2.xpose.msra.mxu0 0.0
  %682 = vmatprep.mubr.f32.mxu0 0.0
  %683 = vmatmul.mubr.f32.gmra.mxu0 %v606
  %v684 = vpop.f32.mrf.mxu0
  %v685 = vadd.f32 0.0, %v684
  %v686 = vpop.f32.mrf.mxu0
  %687 = vmatprep.mubr.f32.mxu0 0.0
  %688 = vmatmul.mubr.f32.gmra.mxu0 %v608
  %v689 = vpop.f32.mrf.mxu0
  %v690 = vadd.f32 0.0, %v689
  %v691 = vpop.f32.mrf.mxu0
  %692 = vmatprep.mubr.f32.mxu0 0.0
  %693 = vmatmul.mubr.f32.gmra.mxu0 %v610
  %v694 = vpop.f32.mrf.mxu0
  %v695 = vadd.f32 0.0, %v694
  %v696 = vpop.f32.mrf.mxu0
  %697 = vdwg.mxu0
  %v698 = vmul.f32 %v685, 0.35355338
  %v699 = vmul.f32 %v690, 0.35355338
  %v700 = vmul.f32 %v695, 0.35355338
  %v701 = vadd.f32 %v698, %v178
  %v702 = vadd.f32 %v699, %v179
  %v703 = vadd.f32 %v700, %v180
  %v704 = vsel %vm450, %v701, -inf
  %705 = vmax.xlane.f32.xlu0 %v704
  %v706 = vpop.xlane.xlu0 %705
  %v707 = vsel %vm450, %v702, -inf
  %708 = vmax.xlane.f32.xlu0 %v707
  %v709 = vpop.xlane.xlu0 %708
  %v710 = vsel %vm457, %v703, -inf
  %711 = vmax.xlane.f32.xlu0 %v710
  %v712 = vpop.xlane.xlu0 %711
  %v713 = vsub.f32 %v701, %v706
  %v714 = vsub.f32 %v702, %v709
  %v715 = vsub.f32 %v703, %v712
  %v716 = vmul.f32 %v713, 1.442695
  %v717 = vpow.pop %v716
  %v718 = vmul.f32 %v714, 1.442695
  %v719 = vpow.pop %v718
  %v720 = vmul.f32 %v715, 1.442695
  %v721 = vpow.pop %v720
  %v722 = vsel %vm450, %v717, 0.0
  %723 = vadd.xlane.f32.xlu0 %v722
  %v724 = vpop.xlane.xlu0 %723
  %v725 = vsel %vm450, %v719, 0.0
  %726 = vadd.xlane.f32.xlu0 %v725
  %v727 = vpop.xlane.xlu0 %726
  %v728 = vsel %vm457, %v721, 0.0
  %729 = vadd.xlane.f32.xlu0 %v728
  %v730 = vpop.xlane.xlu0 %729
  %v731 = vrcp.pop %v724
  %v732 = vrcp.pop %v727
  %v733 = vrcp.pop %v730
  %v734 = vmul.f32 %v724, %v731
  %v735 = vmul.f32 %v727, %v732
  %v736 = vmul.f32 %v730, %v733
  %v737 = vsub.f32 2.0, %v734
  %v738 = vsub.f32 2.0, %v735
  %v739 = vsub.f32 2.0, %v736
  %v740 = vmul.f32 %v731, %v737
  %v741 = vmul.f32 %v732, %v738
  %v742 = vmul.f32 %v733, %v739
  %v743 = vmul.f32 %v717, %v740
  %v744 = vmul.f32 %v719, %v741
  %v745 = vmul.f32 %v721, %v742
  %746 = vrot.lane.b32.xlu0 %v329, 56
  %v747 = vpop.permute.xlu0 %746
  %748 = vrot.lane.b32.xlu0 %v334, 56
  %v749 = vpop.permute.xlu0 %748
  %750 = vrot.lane.b32.xlu0 %v339, 56
  %v751 = vpop.permute.xlu0 %750
  %v755 = vsel %vm450, %v743, 0
  %v758 = vsel %vm450, %v744, 0
  %v761 = vsel %vm450, %v745, 0
  %v763 = vsel %vm511, %v751, 0
  %765 = vmatprep.subr.mxu0 0.0
  %766 = vmatpush1.msra.mxu0 0.0
  %767 = vmatprep.subr.mxu0 0.0
  %768 = vmatpush1.msra.mxu0 0.0
  %769 = vmatprep.subr.mxu0 0.0
  %770 = vmatpush1.msra.mxu0 0.0
  %771 = vmatprep.subr.mxu0 0.0
  %772 = vmatpush1.msra.mxu0 0.0
  %773 = vmatprep.subr.mxu0 0.0
  %774 = vmatpush1.msra.mxu0 0.0
  %775 = vmatprep.subr.mxu0 0.0
  %776 = vmatpush1.msra.mxu0 0.0
  %777 = vmatprep.subr.mxu0 0.0
  %778 = vmatpush1.msra.mxu0 0.0
  %779 = vmatprep.subr.mxu0 0.0
  %780 = vmatpush1.msra.mxu0 0.0
  %781 = vmatprep.subr.mxu0 0.0
  %782 = vmatpush1.msra.mxu0 0.0
  %783 = vmatprep.subr.mxu0 0.0
  %784 = vmatpush1.msra.mxu0 0.0
  %785 = vmatprep.subr.mxu0 0.0
  %786 = vmatpush1.msra.mxu0 0.0
  %787 = vmatprep.subr.mxu0 0.0
  %788 = vmatpush1.msra.mxu0 0.0
  %789 = vmatprep.subr.mxu0 0.0
  %790 = vmatpush1.msra.mxu0 0.0
  %791 = vmatprep.subr.mxu0 0.0
  %792 = vmatpush1.msra.mxu0 %v763
  %793 = vmatprep.subr.mxu0 0.0
  %794 = vmatpush1.msra.mxu0 %v749
  %795 = vmatprep.subr.mxu0 0.0
  %796 = vmatpush1.msra.mxu0 %v747
  %797 = vmatprep.subr.mxu0 0.0
  %798 = vmatpush2.msra.mxu0 0.0
  %799 = vmatprep.subr.mxu0 0.0
  %800 = vmatpush2.msra.mxu0 0.0
  %801 = vmatprep.subr.mxu0 0.0
  %802 = vmatpush2.msra.mxu0 0.0
  %803 = vmatprep.subr.mxu0 0.0
  %804 = vmatpush2.msra.mxu0 0.0
  %805 = vmatprep.subr.mxu0 0.0
  %806 = vmatpush2.msra.mxu0 0.0
  %807 = vmatprep.subr.mxu0 0.0
  %808 = vmatpush2.msra.mxu0 0.0
  %809 = vmatprep.subr.mxu0 0.0
  %810 = vmatpush2.msra.mxu0 0.0
  %811 = vmatprep.subr.mxu0 0.0
  %812 = vmatpush2.msra.mxu0 0.0
  %813 = vmatprep.subr.mxu0 0.0
  %814 = vmatpush2.msra.mxu0 0.0
  %815 = vmatprep.subr.mxu0 0.0
  %816 = vmatpush2.msra.mxu0 0.0
  %817 = vmatprep.subr.mxu0 0.0
  %818 = vmatpush2.msra.mxu0 0.0
  %819 = vmatprep.subr.mxu0 0.0
  %820 = vmatpush2.msra.mxu0 0.0
  %821 = vmatprep.subr.mxu0 0.0
  %822 = vmatpush2.msra.mxu0 0.0
  %823 = vmatprep.subr.mxu0 0.0
  %824 = vmatpush2.msra.mxu0 0.0
  %825 = vmatprep.subr.mxu0 0.0
  %826 = vmatpush2.msra.mxu0 0.0
  %827 = vmatprep.subr.mxu0 0.0
  %828 = vmatpush2.msra.mxu0 0.0
  %829 = vmatprep.mubr.f32.mxu0 0.0
  %830 = vmatmul.mubr.f32.gmra.mxu0 %v755
  %v831 = vpop.f32.mrf.mxu0
  %v832 = vadd.f32 0.0, %v831
  %v833 = vpop.f32.mrf.mxu0
  %834 = vmatprep.mubr.f32.mxu0 0.0
  %835 = vmatmul.mubr.f32.gmra.mxu0 %v758
  %v836 = vpop.f32.mrf.mxu0
  %v837 = vadd.f32 0.0, %v836
  %v838 = vpop.f32.mrf.mxu0
  %839 = vmatprep.mubr.f32.mxu0 0.0
  %840 = vmatmul.mubr.f32.gmra.mxu0 %v761
  %v841 = vpop.f32.mrf.mxu0
  %v842 = vadd.f32 0.0, %v841
  %v843 = vpop.f32.mrf.mxu0
  %844 = vdwg.mxu0
  %845 = vrot.lane.b32.xlu0 %v329, 112
  %v846 = vpop.permute.xlu0 %845
  %847 = vrot.lane.b32.xlu0 %v334, 112
  %v848 = vpop.permute.xlu0 %847
  %849 = vrot.lane.b32.xlu0 %v339, 112
  %v850 = vpop.permute.xlu0 %849
  %851 = vrot.lane.b32.xlu0 %v329, 80
  %v852 = vpop.permute.xlu0 %851
  %853 = vrot.lane.b32.xlu0 %v334, 80
  %v854 = vpop.permute.xlu0 %853
  %855 = vrot.lane.b32.xlu0 %v339, 80
  %v856 = vpop.permute.xlu0 %855
  %v857 = vsel %vm351, %v846, 0
  %v859 = vsel %vm351, %v848, 0
  %v861 = vsel %vm351, %v850, 0
  %v863 = vsel %vm351, %v852, 0
  %v865 = vsel %vm351, %v854, 0
  %v867 = vsel %vm351, %v856, 0
  %869 = vmatprep.subr.mxu0 0.0
  %870 = vmatpush1.xpose.msra.mxu0 0.0
  %871 = vmatprep.subr.mxu0 0.0
  %872 = vmatpush1.xpose.msra.mxu0 0.0
  %873 = vmatprep.subr.mxu0 0.0
  %874 = vmatpush1.xpose.msra.mxu0 0.0
  %875 = vmatprep.subr.mxu0 0.0
  %876 = vmatpush1.xpose.msra.mxu0 0.0
  %877 = vmatprep.subr.mxu0 0.0
  %878 = vmatpush1.xpose.msra.mxu0 0.0
  %879 = vmatprep.subr.mxu0 0.0
  %880 = vmatpush1.xpose.msra.mxu0 0.0
  %881 = vmatprep.subr.mxu0 0.0
  %882 = vmatpush1.xpose.msra.mxu0 0.0
  %883 = vmatprep.subr.mxu0 0.0
  %884 = vmatpush1.xpose.msra.mxu0 0.0
  %885 = vmatprep.subr.mxu0 0.0
  %886 = vmatpush1.xpose.msra.mxu0 0.0
  %887 = vmatprep.subr.mxu0 0.0
  %888 = vmatpush1.xpose.msra.mxu0 0.0
  %889 = vmatprep.subr.mxu0 0.0
  %890 = vmatpush1.xpose.msra.mxu0 0.0
  %891 = vmatprep.subr.mxu0 0.0
  %892 = vmatpush1.xpose.msra.mxu0 0.0
  %893 = vmatprep.subr.mxu0 0.0
  %894 = vmatpush1.xpose.msra.mxu0 0.0
  %895 = vmatprep.subr.mxu0 0.0
  %896 = vmatpush1.xpose.msra.mxu0 %v867
  %897 = vmatprep.subr.mxu0 0.0
  %898 = vmatpush1.xpose.msra.mxu0 %v865
  %899 = vmatprep.subr.mxu0 0.0
  %900 = vmatpush1.xpose.msra.mxu0 %v863
  %901 = vmatprep.subr.mxu0 0.0
  %902 = vmatpush2.xpose.msra.mxu0 0.0
  %903 = vmatprep.subr.mxu0 0.0
  %904 = vmatpush2.xpose.msra.mxu0 0.0
  %905 = vmatprep.subr.mxu0 0.0
  %906 = vmatpush2.xpose.msra.mxu0 0.0
  %907 = vmatprep.subr.mxu0 0.0
  %908 = vmatpush2.xpose.msra.mxu0 0.0
  %909 = vmatprep.subr.mxu0 0.0
  %910 = vmatpush2.xpose.msra.mxu0 0.0
  %911 = vmatprep.subr.mxu0 0.0
  %912 = vmatpush2.xpose.msra.mxu0 0.0
  %913 = vmatprep.subr.mxu0 0.0
  %914 = vmatpush2.xpose.msra.mxu0 0.0
  %915 = vmatprep.subr.mxu0 0.0
  %916 = vmatpush2.xpose.msra.mxu0 0.0
  %917 = vmatprep.subr.mxu0 0.0
  %918 = vmatpush2.xpose.msra.mxu0 0.0
  %919 = vmatprep.subr.mxu0 0.0
  %920 = vmatpush2.xpose.msra.mxu0 0.0
  %921 = vmatprep.subr.mxu0 0.0
  %922 = vmatpush2.xpose.msra.mxu0 0.0
  %923 = vmatprep.subr.mxu0 0.0
  %924 = vmatpush2.xpose.msra.mxu0 0.0
  %925 = vmatprep.subr.mxu0 0.0
  %926 = vmatpush2.xpose.msra.mxu0 0.0
  %927 = vmatprep.subr.mxu0 0.0
  %928 = vmatpush2.xpose.msra.mxu0 0.0
  %929 = vmatprep.subr.mxu0 0.0
  %930 = vmatpush2.xpose.msra.mxu0 0.0
  %931 = vmatprep.subr.mxu0 0.0
  %932 = vmatpush2.xpose.msra.mxu0 0.0
  %933 = vmatprep.mubr.f32.mxu0 0.0
  %934 = vmatmul.mubr.f32.gmra.mxu0 %v857
  %v935 = vpop.f32.mrf.mxu0
  %v936 = vadd.f32 0.0, %v935
  %v937 = vpop.f32.mrf.mxu0
  %938 = vmatprep.mubr.f32.mxu0 0.0
  %939 = vmatmul.mubr.f32.gmra.mxu0 %v859
  %v940 = vpop.f32.mrf.mxu0
  %v941 = vadd.f32 0.0, %v940
  %v942 = vpop.f32.mrf.mxu0
  %943 = vmatprep.mubr.f32.mxu0 0.0
  %944 = vmatmul.mubr.f32.gmra.mxu0 %v861
  %v945 = vpop.f32.mrf.mxu0
  %v946 = vadd.f32 0.0, %v945
  %v947 = vpop.f32.mrf.mxu0
  %948 = vdwg.mxu0
  %v949 = vmul.f32 %v936, 0.35355338
  %v950 = vmul.f32 %v941, 0.35355338
  %v951 = vmul.f32 %v946, 0.35355338
  %v952 = vadd.f32 %v949, %v178
  %v953 = vadd.f32 %v950, %v179
  %v954 = vadd.f32 %v951, %v180
  %v955 = vsel %vm450, %v952, -inf
  %956 = vmax.xlane.f32.xlu0 %v955
  %v957 = vpop.xlane.xlu0 %956
  %v958 = vsel %vm450, %v953, -inf
  %959 = vmax.xlane.f32.xlu0 %v958
  %v960 = vpop.xlane.xlu0 %959
  %v961 = vsel %vm457, %v954, -inf
  %962 = vmax.xlane.f32.xlu0 %v961
  %v963 = vpop.xlane.xlu0 %962
  %v964 = vsub.f32 %v952, %v957
  %v965 = vsub.f32 %v953, %v960
  %v966 = vsub.f32 %v954, %v963
  %v967 = vmul.f32 %v964, 1.442695
  %v968 = vpow.pop %v967
  %v969 = vmul.f32 %v965, 1.442695
  %v970 = vpow.pop %v969
  %v971 = vmul.f32 %v966, 1.442695
  %v972 = vpow.pop %v971
  %v973 = vsel %vm450, %v968, 0.0
  %974 = vadd.xlane.f32.xlu0 %v973
  %v975 = vpop.xlane.xlu0 %974
  %v976 = vsel %vm450, %v970, 0.0
  %977 = vadd.xlane.f32.xlu0 %v976
  %v978 = vpop.xlane.xlu0 %977
  %v979 = vsel %vm457, %v972, 0.0
  %980 = vadd.xlane.f32.xlu0 %v979
  %v981 = vpop.xlane.xlu0 %980
  %v982 = vrcp.pop %v975
  %v983 = vrcp.pop %v978
  %v984 = vrcp.pop %v981
  %v985 = vmul.f32 %v975, %v982
  %v986 = vmul.f32 %v978, %v983
  %v987 = vmul.f32 %v981, %v984
  %v988 = vsub.f32 2.0, %v985
  %v989 = vsub.f32 2.0, %v986
  %v990 = vsub.f32 2.0, %v987
  %v991 = vmul.f32 %v982, %v988
  %v992 = vmul.f32 %v983, %v989
  %v993 = vmul.f32 %v984, %v990
  %v994 = vmul.f32 %v968, %v991
  %v995 = vmul.f32 %v970, %v992
  %v996 = vmul.f32 %v972, %v993
  %997 = vrot.lane.b32.xlu0 %v329, 48
  %v998 = vpop.permute.xlu0 %997
  %999 = vrot.lane.b32.xlu0 %v334, 48
  %v1000 = vpop.permute.xlu0 %999
  %1001 = vrot.lane.b32.xlu0 %v339, 48
  %v1002 = vpop.permute.xlu0 %1001
  %v1006 = vsel %vm450, %v994, 0
  %v1009 = vsel %vm450, %v995, 0
  %v1012 = vsel %vm450, %v996, 0
  %v1014 = vsel %vm511, %v1002, 0
  %1016 = vmatprep.subr.mxu0 0.0
  %1017 = vmatpush1.msra.mxu0 0.0
  %1018 = vmatprep.subr.mxu0 0.0
  %1019 = vmatpush1.msra.mxu0 0.0
  %1020 = vmatprep.subr.mxu0 0.0
  %1021 = vmatpush1.msra.mxu0 0.0
  %1022 = vmatprep.subr.mxu0 0.0
  %1023 = vmatpush1.msra.mxu0 0.0
  %1024 = vmatprep.subr.mxu0 0.0
  %1025 = vmatpush1.msra.mxu0 0.0
  %1026 = vmatprep.subr.mxu0 0.0
  %1027 = vmatpush1.msra.mxu0 0.0
  %1028 = vmatprep.subr.mxu0 0.0
  %1029 = vmatpush1.msra.mxu0 0.0
  %1030 = vmatprep.subr.mxu0 0.0
  %1031 = vmatpush1.msra.mxu0 0.0
  %1032 = vmatprep.subr.mxu0 0.0
  %1033 = vmatpush1.msra.mxu0 0.0
  %1034 = vmatprep.subr.mxu0 0.0
  %1035 = vmatpush1.msra.mxu0 0.0
  %1036 = vmatprep.subr.mxu0 0.0
  %1037 = vmatpush1.msra.mxu0 0.0
  %1038 = vmatprep.subr.mxu0 0.0
  %1039 = vmatpush1.msra.mxu0 0.0
  %1040 = vmatprep.subr.mxu0 0.0
  %1041 = vmatpush1.msra.mxu0 0.0
  %1042 = vmatprep.subr.mxu0 0.0
  %1043 = vmatpush1.msra.mxu0 %v1014
  %1044 = vmatprep.subr.mxu0 0.0
  %1045 = vmatpush1.msra.mxu0 %v1000
  %1046 = vmatprep.subr.mxu0 0.0
  %1047 = vmatpush1.msra.mxu0 %v998
  %1048 = vmatprep.subr.mxu0 0.0
  %1049 = vmatpush2.msra.mxu0 0.0
  %1050 = vmatprep.subr.mxu0 0.0
  %1051 = vmatpush2.msra.mxu0 0.0
  %1052 = vmatprep.subr.mxu0 0.0
  %1053 = vmatpush2.msra.mxu0 0.0
  %1054 = vmatprep.subr.mxu0 0.0
  %1055 = vmatpush2.msra.mxu0 0.0
  %1056 = vmatprep.subr.mxu0 0.0
  %1057 = vmatpush2.msra.mxu0 0.0
  %1058 = vmatprep.subr.mxu0 0.0
  %1059 = vmatpush2.msra.mxu0 0.0
  %1060 = vmatprep.subr.mxu0 0.0
  %1061 = vmatpush2.msra.mxu0 0.0
  %1062 = vmatprep.subr.mxu0 0.0
  %1063 = vmatpush2.msra.mxu0 0.0
  %1064 = vmatprep.subr.mxu0 0.0
  %1065 = vmatpush2.msra.mxu0 0.0
  %1066 = vmatprep.subr.mxu0 0.0
  %1067 = vmatpush2.msra.mxu0 0.0
  %1068 = vmatprep.subr.mxu0 0.0
  %1069 = vmatpush2.msra.mxu0 0.0
  %1070 = vmatprep.subr.mxu0 0.0
  %1071 = vmatpush2.msra.mxu0 0.0
  %1072 = vmatprep.subr.mxu0 0.0
  %1073 = vmatpush2.msra.mxu0 0.0
  %1074 = vmatprep.subr.mxu0 0.0
  %1075 = vmatpush2.msra.mxu0 0.0
  %1076 = vmatprep.subr.mxu0 0.0
  %1077 = vmatpush2.msra.mxu0 0.0
  %1078 = vmatprep.subr.mxu0 0.0
  %1079 = vmatpush2.msra.mxu0 0.0
  %1080 = vmatprep.mubr.f32.mxu0 0.0
  %1081 = vmatmul.mubr.f32.gmra.mxu0 %v1006
  %v1082 = vpop.f32.mrf.mxu0
  %v1083 = vadd.f32 0.0, %v1082
  %v1084 = vpop.f32.mrf.mxu0
  %1085 = vmatprep.mubr.f32.mxu0 0.0
  %1086 = vmatmul.mubr.f32.gmra.mxu0 %v1009
  %v1087 = vpop.f32.mrf.mxu0
  %v1088 = vadd.f32 0.0, %v1087
  %v1089 = vpop.f32.mrf.mxu0
  %1090 = vmatprep.mubr.f32.mxu0 0.0
  %1091 = vmatmul.mubr.f32.gmra.mxu0 %v1012
  %v1092 = vpop.f32.mrf.mxu0
  %v1093 = vadd.f32 0.0, %v1092
  %v1094 = vpop.f32.mrf.mxu0
  %1095 = vdwg.mxu0
  %1096 = vrot.lane.b32.xlu0 %v329, 104
  %v1097 = vpop.permute.xlu0 %1096
  %1098 = vrot.lane.b32.xlu0 %v334, 104
  %v1099 = vpop.permute.xlu0 %1098
  %1100 = vrot.lane.b32.xlu0 %v339, 104
  %v1101 = vpop.permute.xlu0 %1100
  %1102 = vrot.lane.b32.xlu0 %v329, 72
  %v1103 = vpop.permute.xlu0 %1102
  %1104 = vrot.lane.b32.xlu0 %v334, 72
  %v1105 = vpop.permute.xlu0 %1104
  %1106 = vrot.lane.b32.xlu0 %v339, 72
  %v1107 = vpop.permute.xlu0 %1106
  %v1108 = vsel %vm351, %v1097, 0
  %v1110 = vsel %vm351, %v1099, 0
  %v1112 = vsel %vm351, %v1101, 0
  %v1114 = vsel %vm351, %v1103, 0
  %v1116 = vsel %vm351, %v1105, 0
  %v1118 = vsel %vm351, %v1107, 0
  %1120 = vmatprep.subr.mxu0 0.0
  %1121 = vmatpush1.xpose.msra.mxu0 0.0
  %1122 = vmatprep.subr.mxu0 0.0
  %1123 = vmatpush1.xpose.msra.mxu0 0.0
  %1124 = vmatprep.subr.mxu0 0.0
  %1125 = vmatpush1.xpose.msra.mxu0 0.0
  %1126 = vmatprep.subr.mxu0 0.0
  %1127 = vmatpush1.xpose.msra.mxu0 0.0
  %1128 = vmatprep.subr.mxu0 0.0
  %1129 = vmatpush1.xpose.msra.mxu0 0.0
  %1130 = vmatprep.subr.mxu0 0.0
  %1131 = vmatpush1.xpose.msra.mxu0 0.0
  %1132 = vmatprep.subr.mxu0 0.0
  %1133 = vmatpush1.xpose.msra.mxu0 0.0
  %1134 = vmatprep.subr.mxu0 0.0
  %1135 = vmatpush1.xpose.msra.mxu0 0.0
  %1136 = vmatprep.subr.mxu0 0.0
  %1137 = vmatpush1.xpose.msra.mxu0 0.0
  %1138 = vmatprep.subr.mxu0 0.0
  %1139 = vmatpush1.xpose.msra.mxu0 0.0
  %1140 = vmatprep.subr.mxu0 0.0
  %1141 = vmatpush1.xpose.msra.mxu0 0.0
  %1142 = vmatprep.subr.mxu0 0.0
  %1143 = vmatpush1.xpose.msra.mxu0 0.0
  %1144 = vmatprep.subr.mxu0 0.0
  %1145 = vmatpush1.xpose.msra.mxu0 0.0
  %1146 = vmatprep.subr.mxu0 0.0
  %1147 = vmatpush1.xpose.msra.mxu0 %v1118
  %1148 = vmatprep.subr.mxu0 0.0
  %1149 = vmatpush1.xpose.msra.mxu0 %v1116
  %1150 = vmatprep.subr.mxu0 0.0
  %1151 = vmatpush1.xpose.msra.mxu0 %v1114
  %1152 = vmatprep.subr.mxu0 0.0
  %1153 = vmatpush2.xpose.msra.mxu0 0.0
  %1154 = vmatprep.subr.mxu0 0.0
  %1155 = vmatpush2.xpose.msra.mxu0 0.0
  %1156 = vmatprep.subr.mxu0 0.0
  %1157 = vmatpush2.xpose.msra.mxu0 0.0
  %1158 = vmatprep.subr.mxu0 0.0
  %1159 = vmatpush2.xpose.msra.mxu0 0.0
  %1160 = vmatprep.subr.mxu0 0.0
  %1161 = vmatpush2.xpose.msra.mxu0 0.0
  %1162 = vmatprep.subr.mxu0 0.0
  %1163 = vmatpush2.xpose.msra.mxu0 0.0
  %1164 = vmatprep.subr.mxu0 0.0
  %1165 = vmatpush2.xpose.msra.mxu0 0.0
  %1166 = vmatprep.subr.mxu0 0.0
  %1167 = vmatpush2.xpose.msra.mxu0 0.0
  %1168 = vmatprep.subr.mxu0 0.0
  %1169 = vmatpush2.xpose.msra.mxu0 0.0
  %1170 = vmatprep.subr.mxu0 0.0
  %1171 = vmatpush2.xpose.msra.mxu0 0.0
  %1172 = vmatprep.subr.mxu0 0.0
  %1173 = vmatpush2.xpose.msra.mxu0 0.0
  %1174 = vmatprep.subr.mxu0 0.0
  %1175 = vmatpush2.xpose.msra.mxu0 0.0
  %1176 = vmatprep.subr.mxu0 0.0
  %1177 = vmatpush2.xpose.msra.mxu0 0.0
  %1178 = vmatprep.subr.mxu0 0.0
  %1179 = vmatpush2.xpose.msra.mxu0 0.0
  %1180 = vmatprep.subr.mxu0 0.0
  %1181 = vmatpush2.xpose.msra.mxu0 0.0
  %1182 = vmatprep.subr.mxu0 0.0
  %1183 = vmatpush2.xpose.msra.mxu0 0.0
  %1184 = vmatprep.mubr.f32.mxu0 0.0
  %1185 = vmatmul.mubr.f32.gmra.mxu0 %v1108
  %v1186 = vpop.f32.mrf.mxu0
  %v1187 = vadd.f32 0.0, %v1186
  %v1188 = vpop.f32.mrf.mxu0
  %1189 = vmatprep.mubr.f32.mxu0 0.0
  %1190 = vmatmul.mubr.f32.gmra.mxu0 %v1110
  %v1191 = vpop.f32.mrf.mxu0
  %v1192 = vadd.f32 0.0, %v1191
  %v1193 = vpop.f32.mrf.mxu0
  %1194 = vmatprep.mubr.f32.mxu0 0.0
  %1195 = vmatmul.mubr.f32.gmra.mxu0 %v1112
  %v1196 = vpop.f32.mrf.mxu0
  %v1197 = vadd.f32 0.0, %v1196
  %v1198 = vpop.f32.mrf.mxu0
  %1199 = vdwg.mxu0
  %v1200 = vmul.f32 %v1187, 0.35355338
  %v1201 = vmul.f32 %v1192, 0.35355338
  %v1202 = vmul.f32 %v1197, 0.35355338
  %v1203 = vadd.f32 %v1200, %v178
  %v1204 = vadd.f32 %v1201, %v179
  %v1205 = vadd.f32 %v1202, %v180
  %v1206 = vsel %vm450, %v1203, -inf
  %1207 = vmax.xlane.f32.xlu0 %v1206
  %v1208 = vpop.xlane.xlu0 %1207
  %v1209 = vsel %vm450, %v1204, -inf
  %1210 = vmax.xlane.f32.xlu0 %v1209
  %v1211 = vpop.xlane.xlu0 %1210
  %v1212 = vsel %vm457, %v1205, -inf
  %1213 = vmax.xlane.f32.xlu0 %v1212
  %v1214 = vpop.xlane.xlu0 %1213
  %v1215 = vsub.f32 %v1203, %v1208
  %v1216 = vsub.f32 %v1204, %v1211
  %v1217 = vsub.f32 %v1205, %v1214
  %v1218 = vmul.f32 %v1215, 1.442695
  %v1219 = vpow.pop %v1218
  %v1220 = vmul.f32 %v1216, 1.442695
  %v1221 = vpow.pop %v1220
  %v1222 = vmul.f32 %v1217, 1.442695
  %v1223 = vpow.pop %v1222
  %v1224 = vsel %vm450, %v1219, 0.0
  %1225 = vadd.xlane.f32.xlu0 %v1224
  %v1226 = vpop.xlane.xlu0 %1225
  %v1227 = vsel %vm450, %v1221, 0.0
  %1228 = vadd.xlane.f32.xlu0 %v1227
  %v1229 = vpop.xlane.xlu0 %1228
  %v1230 = vsel %vm457, %v1223, 0.0
  %1231 = vadd.xlane.f32.xlu0 %v1230
  %v1232 = vpop.xlane.xlu0 %1231
  %v1233 = vrcp.pop %v1226
  %v1234 = vrcp.pop %v1229
  %v1235 = vrcp.pop %v1232
  %v1236 = vmul.f32 %v1226, %v1233
  %v1237 = vmul.f32 %v1229, %v1234
  %v1238 = vmul.f32 %v1232, %v1235
  %v1239 = vsub.f32 2.0, %v1236
  %v1240 = vsub.f32 2.0, %v1237
  %v1241 = vsub.f32 2.0, %v1238
  %v1242 = vmul.f32 %v1233, %v1239
  %v1243 = vmul.f32 %v1234, %v1240
  %v1244 = vmul.f32 %v1235, %v1241
  %v1245 = vmul.f32 %v1219, %v1242
  %v1246 = vmul.f32 %v1221, %v1243
  %v1247 = vmul.f32 %v1223, %v1244
  %1248 = vrot.lane.b32.xlu0 %v329, 40
  %v1249 = vpop.permute.xlu0 %1248
  %1250 = vrot.lane.b32.xlu0 %v334, 40
  %v1251 = vpop.permute.xlu0 %1250
  %1252 = vrot.lane.b32.xlu0 %v339, 40
  %v1253 = vpop.permute.xlu0 %1252
  %v1257 = vsel %vm450, %v1245, 0
  %v1260 = vsel %vm450, %v1246, 0
  %v1263 = vsel %vm450, %v1247, 0
  %v1265 = vsel %vm511, %v1253, 0
  %1267 = vmatprep.subr.mxu0 0.0
  %1268 = vmatpush1.msra.mxu0 0.0
  %1269 = vmatprep.subr.mxu0 0.0
  %1270 = vmatpush1.msra.mxu0 0.0
  %1271 = vmatprep.subr.mxu0 0.0
  %1272 = vmatpush1.msra.mxu0 0.0
  %1273 = vmatprep.subr.mxu0 0.0
  %1274 = vmatpush1.msra.mxu0 0.0
  %1275 = vmatprep.subr.mxu0 0.0
  %1276 = vmatpush1.msra.mxu0 0.0
  %1277 = vmatprep.subr.mxu0 0.0
  %1278 = vmatpush1.msra.mxu0 0.0
  %1279 = vmatprep.subr.mxu0 0.0
  %1280 = vmatpush1.msra.mxu0 0.0
  %1281 = vmatprep.subr.mxu0 0.0
  %1282 = vmatpush1.msra.mxu0 0.0
  %1283 = vmatprep.subr.mxu0 0.0
  %1284 = vmatpush1.msra.mxu0 0.0
  %1285 = vmatprep.subr.mxu0 0.0
  %1286 = vmatpush1.msra.mxu0 0.0
  %1287 = vmatprep.subr.mxu0 0.0
  %1288 = vmatpush1.msra.mxu0 0.0
  %1289 = vmatprep.subr.mxu0 0.0
  %1290 = vmatpush1.msra.mxu0 0.0
  %1291 = vmatprep.subr.mxu0 0.0
  %1292 = vmatpush1.msra.mxu0 0.0
  %1293 = vmatprep.subr.mxu0 0.0
  %1294 = vmatpush1.msra.mxu0 %v1265
  %1295 = vmatprep.subr.mxu0 0.0
  %1296 = vmatpush1.msra.mxu0 %v1251
  %1297 = vmatprep.subr.mxu0 0.0
  %1298 = vmatpush1.msra.mxu0 %v1249
  %1299 = vmatprep.subr.mxu0 0.0
  %1300 = vmatpush2.msra.mxu0 0.0
  %1301 = vmatprep.subr.mxu0 0.0
  %1302 = vmatpush2.msra.mxu0 0.0
  %1303 = vmatprep.subr.mxu0 0.0
  %1304 = vmatpush2.msra.mxu0 0.0
  %1305 = vmatprep.subr.mxu0 0.0
  %1306 = vmatpush2.msra.mxu0 0.0
  %1307 = vmatprep.subr.mxu0 0.0
  %1308 = vmatpush2.msra.mxu0 0.0
  %1309 = vmatprep.subr.mxu0 0.0
  %1310 = vmatpush2.msra.mxu0 0.0
  %1311 = vmatprep.subr.mxu0 0.0
  %1312 = vmatpush2.msra.mxu0 0.0
  %1313 = vmatprep.subr.mxu0 0.0
  %1314 = vmatpush2.msra.mxu0 0.0
  %1315 = vmatprep.subr.mxu0 0.0
  %1316 = vmatpush2.msra.mxu0 0.0
  %1317 = vmatprep.subr.mxu0 0.0
  %1318 = vmatpush2.msra.mxu0 0.0
  %1319 = vmatprep.subr.mxu0 0.0
  %1320 = vmatpush2.msra.mxu0 0.0
  %1321 = vmatprep.subr.mxu0 0.0
  %1322 = vmatpush2.msra.mxu0 0.0
  %1323 = vmatprep.subr.mxu0 0.0
  %1324 = vmatpush2.msra.mxu0 0.0
  %1325 = vmatprep.subr.mxu0 0.0
  %1326 = vmatpush2.msra.mxu0 0.0
  %1327 = vmatprep.subr.mxu0 0.0
  %1328 = vmatpush2.msra.mxu0 0.0
  %1329 = vmatprep.subr.mxu0 0.0
  %1330 = vmatpush2.msra.mxu0 0.0
  %1331 = vmatprep.mubr.f32.mxu0 0.0
  %1332 = vmatmul.mubr.f32.gmra.mxu0 %v1257
  %v1333 = vpop.f32.mrf.mxu0
  %v1334 = vadd.f32 0.0, %v1333
  %v1335 = vpop.f32.mrf.mxu0
  %1336 = vmatprep.mubr.f32.mxu0 0.0
  %1337 = vmatmul.mubr.f32.gmra.mxu0 %v1260
  %v1338 = vpop.f32.mrf.mxu0
  %v1339 = vadd.f32 0.0, %v1338
  %v1340 = vpop.f32.mrf.mxu0
  %1341 = vmatprep.mubr.f32.mxu0 0.0
  %1342 = vmatmul.mubr.f32.gmra.mxu0 %v1263
  %v1343 = vpop.f32.mrf.mxu0
  %v1344 = vadd.f32 0.0, %v1343
  %v1345 = vpop.f32.mrf.mxu0
  %1346 = vdwg.mxu0
  %1350 = vrot.lane.b32.xlu0 %v832, 8
  %v1351 = vpop.permute.xlu0 %1350
  %1352 = vrot.lane.b32.xlu0 %v837, 8
  %v1353 = vpop.permute.xlu0 %1352
  %1354 = vrot.lane.b32.xlu0 %v842, 8
  %v1355 = vpop.permute.xlu0 %1354
  %1362 = vrot.lane.b32.xlu0 %v1083, 16
  %v1363 = vpop.permute.xlu0 %1362
  %1364 = vrot.lane.b32.xlu0 %v1088, 16
  %v1365 = vpop.permute.xlu0 %1364
  %1366 = vrot.lane.b32.xlu0 %v1093, 16
  %v1367 = vpop.permute.xlu0 %1366
  %1374 = vrot.lane.b32.xlu0 %v1334, 24
  %v1375 = vpop.permute.xlu0 %1374
  %1376 = vrot.lane.b32.xlu0 %v1339, 24
  %v1377 = vpop.permute.xlu0 %1376
  %1378 = vrot.lane.b32.xlu0 %v1344, 24
  %v1379 = vpop.permute.xlu0 %1378
  %v1383 = vsel %vm351, %v581, %v1351
  %v1384 = vsel %vm351, %v586, %v1353
  %v1385 = vsel %vm351, %v591, %v1355
  %vm1386 = vcmask 130048
  %v1387 = vsel %vm1386, %v1383, %v1363
  %v1388 = vsel %vm1386, %v1384, %v1365
  %v1389 = vsel %vm1386, %v1385, %v1367
  %vm1390 = vcmask 195584
  %v1391 = vsel %vm1390, %v1387, %v1375
  %v1392 = vsel %vm1390, %v1388, %v1377
  %v1393 = vsel %vm1390, %v1389, %v1379
  %v1394 = vld [vmem:[%s1 + $0x120] sm:$0xff]
  %v1395 = vld [vmem:[%s1 + $0x128] sm:$0xff]
  %v1396 = vld [vmem:[%s1 + $0x130] sm:$0xff]
  %v1397 = vld [vmem:[%s1 + $0x138] sm:$0xff]
  %v1399 = vsel %vm189, %v1391, 0
  %v1402 = vsel %vm189, %v1392, 0
  %v1405 = vsel %vm189, %v1393, 0
  %1407 = vmatprep.subr.mxu0 0.0
  %1408 = vmatpush1.msra.mxu0 0.0
  %1409 = vmatprep.subr.mxu0 0.0
  %1410 = vmatpush1.msra.mxu0 0.0
  %1411 = vmatprep.subr.mxu0 0.0
  %1412 = vmatpush1.msra.mxu0 0.0
  %1413 = vmatprep.subr.mxu0 0.0
  %1414 = vmatpush1.msra.mxu0 0.0
  %1415 = vmatprep.subr.mxu0 0.0
  %1416 = vmatpush1.msra.mxu0 0.0
  %1417 = vmatprep.subr.mxu0 0.0
  %1418 = vmatpush1.msra.mxu0 0.0
  %1419 = vmatprep.subr.mxu0 0.0
  %1420 = vmatpush1.msra.mxu0 0.0
  %1421 = vmatprep.subr.mxu0 0.0
  %1422 = vmatpush1.msra.mxu0 0.0
  %1423 = vmatprep.subr.mxu0 0.0
  %1424 = vmatpush1.msra.mxu0 0.0
  %1425 = vmatprep.subr.mxu0 0.0
  %1426 = vmatpush1.msra.mxu0 0.0
  %1427 = vmatprep.subr.mxu0 0.0
  %1428 = vmatpush1.msra.mxu0 0.0
  %1429 = vmatprep.subr.mxu0 0.0
  %1430 = vmatpush1.msra.mxu0 0.0
  %1431 = vmatprep.subr.mxu0 0.0
  %1432 = vmatpush1.msra.mxu0 %v1397
  %1433 = vmatprep.subr.mxu0 0.0
  %1434 = vmatpush1.msra.mxu0 %v1396
  %1435 = vmatprep.subr.mxu0 0.0
  %1436 = vmatpush1.msra.mxu0 %v1395
  %1437 = vmatprep.subr.mxu0 0.0
  %1438 = vmatpush1.msra.mxu0 %v1394
  %1439 = vmatprep.subr.mxu0 0.0
  %1440 = vmatpush2.msra.mxu0 0.0
  %1441 = vmatprep.subr.mxu0 0.0
  %1442 = vmatpush2.msra.mxu0 0.0
  %1443 = vmatprep.subr.mxu0 0.0
  %1444 = vmatpush2.msra.mxu0 0.0
  %1445 = vmatprep.subr.mxu0 0.0
  %1446 = vmatpush2.msra.mxu0 0.0
  %1447 = vmatprep.subr.mxu0 0.0
  %1448 = vmatpush2.msra.mxu0 0.0
  %1449 = vmatprep.subr.mxu0 0.0
  %1450 = vmatpush2.msra.mxu0 0.0
  %1451 = vmatprep.subr.mxu0 0.0
  %1452 = vmatpush2.msra.mxu0 0.0
  %1453 = vmatprep.subr.mxu0 0.0
  %1454 = vmatpush2.msra.mxu0 0.0
  %1455 = vmatprep.subr.mxu0 0.0
  %1456 = vmatpush2.msra.mxu0 0.0
  %1457 = vmatprep.subr.mxu0 0.0
  %1458 = vmatpush2.msra.mxu0 0.0
  %1459 = vmatprep.subr.mxu0 0.0
  %1460 = vmatpush2.msra.mxu0 0.0
  %1461 = vmatprep.subr.mxu0 0.0
  %1462 = vmatpush2.msra.mxu0 0.0
  %1463 = vmatprep.subr.mxu0 0.0
  %1464 = vmatpush2.msra.mxu0 0.0
  %1465 = vmatprep.subr.mxu0 0.0
  %1466 = vmatpush2.msra.mxu0 0.0
  %1467 = vmatprep.subr.mxu0 0.0
  %1468 = vmatpush2.msra.mxu0 0.0
  %1469 = vmatprep.subr.mxu0 0.0
  %1470 = vmatpush2.msra.mxu0 0.0
  %1471 = vmatprep.mubr.f32.mxu0 0.0
  %1472 = vmatmul.mubr.f32.gmra.mxu0 %v1399
  %v1473 = vpop.f32.mrf.mxu0
  %v1474 = vadd.f32 0.0, %v1473
  %v1475 = vpop.f32.mrf.mxu0
  %1476 = vmatprep.mubr.f32.mxu0 0.0
  %1477 = vmatmul.mubr.f32.gmra.mxu0 %v1402
  %v1478 = vpop.f32.mrf.mxu0
  %v1479 = vadd.f32 0.0, %v1478
  %v1480 = vpop.f32.mrf.mxu0
  %1481 = vmatprep.mubr.f32.mxu0 0.0
  %1482 = vmatmul.mubr.f32.gmra.mxu0 %v1405
  %v1483 = vpop.f32.mrf.mxu0
  %v1484 = vadd.f32 0.0, %v1483
  %v1485 = vpop.f32.mrf.mxu0
  %1486 = vdwg.mxu0
  %v1487 = vadd.f32 %v122, %v1474
  %v1488 = vadd.f32 %v127, %v1479
  %v1489 = vadd.f32 %v132, %v1484
  %v1490 = vlaneseq
  %v1491 = vshrl.u32 %v1490, 7
  %v1492 = vsub.s32 0, %v1491
  %v1493 = vrot.slane %v184, %v1492
  %v1494 = vadd.f32 %v1487, %v1493
  %v1495 = vadd.f32 %v1488, %v1493
  %v1496 = vadd.f32 %v1489, %v1493
  %v1497 = vsel %vm189, %v1494, 0.0
  %1498 = vadd.xlane.f32.xlu0 %v1497
  %v1499 = vpop.xlane.xlu0 %1498
  %v1500 = vsel %vm189, %v1495, 0.0
  %1501 = vadd.xlane.f32.xlu0 %v1500
  %v1502 = vpop.xlane.xlu0 %1501
  %v1503 = vsel %vm196, %v1496, 0.0
  %1504 = vadd.xlane.f32.xlu0 %v1503
  %v1505 = vpop.xlane.xlu0 %1504
  %v1506 = vmul.f32 %v1499, %v200
  %v1507 = vmul.f32 %v1502, %v200
  %v1508 = vmul.f32 %v1505, %v200
  %v1509 = vsub.f32 %v1494, %v1506
  %v1510 = vsub.f32 %v1495, %v1507
  %v1511 = vsub.f32 %v1496, %v1508
  %v1512 = vmul.f32 %v1509, %v1509
  %v1513 = vmul.f32 %v1510, %v1510
  %v1514 = vmul.f32 %v1511, %v1511
  %v1515 = vsel %vm189, %v1512, 0.0
  %1516 = vadd.xlane.f32.xlu0 %v1515
  %v1517 = vpop.xlane.xlu0 %1516
  %v1518 = vsel %vm189, %v1513, 0.0
  %1519 = vadd.xlane.f32.xlu0 %v1518
  %v1520 = vpop.xlane.xlu0 %1519
  %v1521 = vsel %vm196, %v1514, 0.0
  %1522 = vadd.xlane.f32.xlu0 %v1521
  %v1523 = vpop.xlane.xlu0 %1522
  %v1524 = vmul.f32 %v1517, %v200
  %v1525 = vmul.f32 %v1520, %v200
  %v1526 = vmul.f32 %v1523, %v200
  %v1527 = vadd.f32 %v1524, 1e-06
  %v1528 = vadd.f32 %v1525, 1e-06
  %v1529 = vadd.f32 %v1526, 1e-06
  %v1530 = vrsqrt.pop %v1527
  %v1531 = vrsqrt.pop %v1528
  %v1532 = vrsqrt.pop %v1529
  %v1533 = vmul.f32 %v1509, %v1530
  %v1534 = vmul.f32 %v1510, %v1531
  %v1535 = vmul.f32 %v1511, %v1532
  %v1536 = vlaneseq
  %v1537 = vshrl.u32 %v1536, 7
  %v1538 = vsub.s32 0, %v1537
  %v1539 = vrot.slane %v185, %v1538
  %v1540 = vmul.f32 %v1533, %v1539
  %v1541 = vmul.f32 %v1534, %v1539
  %v1542 = vmul.f32 %v1535, %v1539
  %v1543 = vlaneseq
  %v1544 = vshrl.u32 %v1543, 7
  %v1545 = vsub.s32 0, %v1544
  %v1546 = vrot.slane %v186, %v1545
  %v1547 = vadd.f32 %v1540, %v1546
  %v1548 = vadd.f32 %v1541, %v1546
  %v1549 = vadd.f32 %v1542, %v1546
  %v1550 = vld [vmem:[%s1 + $0x140] sm:$0xff]
  %v1551 = vld [vmem:[%s1 + $0x148] sm:$0xff]
  %v1552 = vld [vmem:[%s1 + $0x150] sm:$0xff]
  %v1553 = vld [vmem:[%s1 + $0x158] sm:$0xff]
  %v1554 = vlaneseq
  %v1555 = vshrl.u32 %v1554, 7
  %v1556 = vsub.s32 0, %v1555
  %v1557 = vrot.slane %v187, %v1556
  %v1559 = vsel %vm189, %v1547, 0
  %v1562 = vsel %vm189, %v1548, 0
  %v1565 = vsel %vm189, %v1549, 0
  %1567 = vmatprep.subr.mxu0 0.0
  %1568 = vmatpush1.msra.mxu0 0.0
  %1569 = vmatprep.subr.mxu0 0.0
  %1570 = vmatpush1.msra.mxu0 0.0
  %1571 = vmatprep.subr.mxu0 0.0
  %1572 = vmatpush1.msra.mxu0 0.0
  %1573 = vmatprep.subr.mxu0 0.0
  %1574 = vmatpush1.msra.mxu0 0.0
  %1575 = vmatprep.subr.mxu0 0.0
  %1576 = vmatpush1.msra.mxu0 0.0
  %1577 = vmatprep.subr.mxu0 0.0
  %1578 = vmatpush1.msra.mxu0 0.0
  %1579 = vmatprep.subr.mxu0 0.0
  %1580 = vmatpush1.msra.mxu0 0.0
  %1581 = vmatprep.subr.mxu0 0.0
  %1582 = vmatpush1.msra.mxu0 0.0
  %1583 = vmatprep.subr.mxu0 0.0
  %1584 = vmatpush1.msra.mxu0 0.0
  %1585 = vmatprep.subr.mxu0 0.0
  %1586 = vmatpush1.msra.mxu0 0.0
  %1587 = vmatprep.subr.mxu0 0.0
  %1588 = vmatpush1.msra.mxu0 0.0
  %1589 = vmatprep.subr.mxu0 0.0
  %1590 = vmatpush1.msra.mxu0 0.0
  %1591 = vmatprep.subr.mxu0 0.0
  %1592 = vmatpush1.msra.mxu0 %v1553
  %1593 = vmatprep.subr.mxu0 0.0
  %1594 = vmatpush1.msra.mxu0 %v1552
  %1595 = vmatprep.subr.mxu0 0.0
  %1596 = vmatpush1.msra.mxu0 %v1551
  %1597 = vmatprep.subr.mxu0 0.0
  %1598 = vmatpush1.msra.mxu0 %v1550
  %1599 = vmatprep.subr.mxu0 0.0
  %1600 = vmatpush2.msra.mxu0 0.0
  %1601 = vmatprep.subr.mxu0 0.0
  %1602 = vmatpush2.msra.mxu0 0.0
  %1603 = vmatprep.subr.mxu0 0.0
  %1604 = vmatpush2.msra.mxu0 0.0
  %1605 = vmatprep.subr.mxu0 0.0
  %1606 = vmatpush2.msra.mxu0 0.0
  %1607 = vmatprep.subr.mxu0 0.0
  %1608 = vmatpush2.msra.mxu0 0.0
  %1609 = vmatprep.subr.mxu0 0.0
  %1610 = vmatpush2.msra.mxu0 0.0
  %1611 = vmatprep.subr.mxu0 0.0
  %1612 = vmatpush2.msra.mxu0 0.0
  %1613 = vmatprep.subr.mxu0 0.0
  %1614 = vmatpush2.msra.mxu0 0.0
  %1615 = vmatprep.subr.mxu0 0.0
  %1616 = vmatpush2.msra.mxu0 0.0
  %1617 = vmatprep.subr.mxu0 0.0
  %1618 = vmatpush2.msra.mxu0 0.0
  %1619 = vmatprep.subr.mxu0 0.0
  %1620 = vmatpush2.msra.mxu0 0.0
  %1621 = vmatprep.subr.mxu0 0.0
  %1622 = vmatpush2.msra.mxu0 0.0
  %1623 = vmatprep.subr.mxu0 0.0
  %1624 = vmatpush2.msra.mxu0 0.0
  %1625 = vmatprep.subr.mxu0 0.0
  %1626 = vmatpush2.msra.mxu0 0.0
  %1627 = vmatprep.subr.mxu0 0.0
  %1628 = vmatpush2.msra.mxu0 0.0
  %1629 = vmatprep.subr.mxu0 0.0
  %1630 = vmatpush2.msra.mxu0 0.0
  %1631 = vmatprep.mubr.f32.mxu0 0.0
  %1632 = vmatmul.mubr.f32.gmra.mxu0 %v1559
  %v1633 = vpop.f32.mrf.mxu0
  %v1634 = vadd.f32 %v1557, %v1633
  %v1635 = vpop.f32.mrf.mxu0
  %1636 = vmatprep.mubr.f32.mxu0 0.0
  %1637 = vmatmul.mubr.f32.gmra.mxu0 %v1562
  %v1638 = vpop.f32.mrf.mxu0
  %v1639 = vadd.f32 %v1557, %v1638
  %v1640 = vpop.f32.mrf.mxu0
  %1641 = vmatprep.mubr.f32.mxu0 0.0
  %1642 = vmatmul.mubr.f32.gmra.mxu0 %v1565
  %v1643 = vpop.f32.mrf.mxu0
  %v1644 = vadd.f32 %v1557, %v1643
  %v1645 = vpop.f32.mrf.mxu0
  %1646 = vdwg.mxu0
  %v1647 = vmul.f32 %v1634, 0.5
  %v1648 = vmul.f32 %v1639, 0.5
  %v1649 = vmul.f32 %v1644, 0.5
  %v1650 = vmul.f32 %v1634, 0.70710677
  %v1651 = vmul.f32 %v1639, 0.70710677
  %v1652 = vmul.f32 %v1644, 0.70710677
  %v1653 = vand.u32 2147483647, %v1650
  %v1654 = vand.u32 2147483647, %v1651
  %v1655 = vand.u32 2147483647, %v1652
  %v1656 = vmul.f32 %v1653, 0.3275911
  %v1657 = vmul.f32 %v1654, 0.3275911
  %v1658 = vmul.f32 %v1655, 0.3275911
  %v1659 = vadd.f32 %v1656, 1.0
  %v1660 = vadd.f32 %v1657, 1.0
  %v1661 = vadd.f32 %v1658, 1.0
  %v1662 = vrcp.pop %v1659
  %v1663 = vmul.f32 1.0, %v1662
  %v1664 = vrcp.pop %v1660
  %v1665 = vmul.f32 1.0, %v1664
  %v1666 = vrcp.pop %v1661
  %v1667 = vmul.f32 1.0, %v1666
  %v1668 = vmul.f32 %v1663, 1.0614054
  %v1669 = vmul.f32 %v1665, 1.0614054
  %v1670 = vmul.f32 %v1667, 1.0614054
  %v1671 = vadd.f32 %v1668, -1.4531521
  %v1672 = vadd.f32 %v1669, -1.4531521
  %v1673 = vadd.f32 %v1670, -1.4531521
  %v1674 = vmul.f32 %v1671, %v1663
  %v1675 = vmul.f32 %v1672, %v1665
  %v1676 = vmul.f32 %v1673, %v1667
  %v1677 = vadd.f32 %v1674, 1.4214138
  %v1678 = vadd.f32 %v1675, 1.4214138
  %v1679 = vadd.f32 %v1676, 1.4214138
  %v1680 = vmul.f32 %v1677, %v1663
  %v1681 = vmul.f32 %v1678, %v1665
  %v1682 = vmul.f32 %v1679, %v1667
  %v1683 = vadd.f32 %v1680, -0.28449672
  %v1684 = vadd.f32 %v1681, -0.28449672
  %v1685 = vadd.f32 %v1682, -0.28449672
  %v1686 = vmul.f32 %v1683, %v1663
  %v1687 = vmul.f32 %v1684, %v1665
  %v1688 = vmul.f32 %v1685, %v1667
  %v1689 = vadd.f32 %v1686, 0.2548296
  %v1690 = vadd.f32 %v1687, 0.2548296
  %v1691 = vadd.f32 %v1688, 0.2548296
  %v1692 = vmul.f32 %v1689, %v1663
  %v1693 = vmul.f32 %v1690, %v1665
  %v1694 = vmul.f32 %v1691, %v1667
  %v1695 = vsub.f32 0.0, %v1653
  %v1696 = vsub.f32 0.0, %v1654
  %v1697 = vsub.f32 0.0, %v1655
  %v1698 = vmul.f32 %v1695, %v1653
  %v1699 = vmul.f32 %v1696, %v1654
  %v1700 = vmul.f32 %v1697, %v1655
  %v1701 = vmul.f32 %v1698, 1.442695
  %v1702 = vpow.pop %v1701
  %v1703 = vmul.f32 %v1699, 1.442695
  %v1704 = vpow.pop %v1703
  %v1705 = vmul.f32 %v1700, 1.442695
  %v1706 = vpow.pop %v1705
  %v1707 = vmul.f32 %v1692, %v1702
  %v1708 = vmul.f32 %v1693, %v1704
  %v1709 = vmul.f32 %v1694, %v1706
  %v1710 = vsub.f32 1.0, %v1707
  %v1711 = vsub.f32 1.0, %v1708
  %v1712 = vsub.f32 1.0, %v1709
  %vm1713 = vcmp.ge.f32.partialorder %v1650, 0.0
  %vm1714 = vcmp.ge.f32.partialorder %v1651, 0.0
  %vm1715 = vcmp.ge.f32.partialorder %v1652, 0.0
  %v1716 = vsub.f32 0.0, %v1710
  %v1717 = vsub.f32 0.0, %v1711
  %v1718 = vsub.f32 0.0, %v1712
  %v1719 = vsel %vm1713, %v1710, %v1716
  %v1720 = vsel %vm1714, %v1711, %v1717
  %v1721 = vsel %vm1715, %v1712, %v1718
  %v1722 = vadd.f32 %v1719, 1.0
  %v1723 = vadd.f32 %v1720, 1.0
  %v1724 = vadd.f32 %v1721, 1.0
  %v1725 = vmul.f32 %v1647, %v1722
  %v1726 = vmul.f32 %v1648, %v1723
  %v1727 = vmul.f32 %v1649, %v1724
  %v1728 = vld [vmem:[%s1 + $0x160] sm:$0xff]
  %v1729 = vld [vmem:[%s1 + $0x168] sm:$0xff]
  %v1730 = vld [vmem:[%s1 + $0x170] sm:$0xff]
  %v1731 = vld [vmem:[%s1 + $0x178] sm:$0xff]
  %v1732 = vld [vmem:[%s1 + $0x180] sm:$0xff]
  %v1733 = vld [vmem:[%s1 + $0x188] sm:$0xff]
  %v1734 = vld [vmem:[%s1 + $0x190] sm:$0xff]
  %v1735 = vld [vmem:[%s1 + $0x198] sm:$0xff]
  %v1736 = vld [vmem:[%s1 + $0x1a0] sm:$0xff]
  %v1737 = vld [vmem:[%s1 + $0x1a8] sm:$0xff]
  %v1738 = vld [vmem:[%s1 + $0x1b0] sm:$0xff]
  %v1739 = vld [vmem:[%s1 + $0x1b8] sm:$0xff]
  %v1740 = vld [vmem:[%s1 + $0x1c0] sm:$0xff]
  %v1741 = vld [vmem:[%s1 + $0x1c8] sm:$0xff]
  %v1742 = vld [vmem:[%s1 + $0x1d0] sm:$0xff]
  %v1743 = vld [vmem:[%s1 + $0x1d8] sm:$0xff]
  %1744 = vmatprep.subr.mxu0 0.0
  %1745 = vmatpush1.msra.mxu0 %v1743
  %1746 = vmatprep.subr.mxu0 0.0
  %1747 = vmatpush1.msra.mxu0 %v1742
  %1748 = vmatprep.subr.mxu0 0.0
  %1749 = vmatpush1.msra.mxu0 %v1741
  %1750 = vmatprep.subr.mxu0 0.0
  %1751 = vmatpush1.msra.mxu0 %v1740
  %1752 = vmatprep.subr.mxu0 0.0
  %1753 = vmatpush1.msra.mxu0 %v1739
  %1754 = vmatprep.subr.mxu0 0.0
  %1755 = vmatpush1.msra.mxu0 %v1738
  %1756 = vmatprep.subr.mxu0 0.0
  %1757 = vmatpush1.msra.mxu0 %v1737
  %1758 = vmatprep.subr.mxu0 0.0
  %1759 = vmatpush1.msra.mxu0 %v1736
  %1760 = vmatprep.subr.mxu0 0.0
  %1761 = vmatpush1.msra.mxu0 %v1735
  %1762 = vmatprep.subr.mxu0 0.0
  %1763 = vmatpush1.msra.mxu0 %v1734
  %1764 = vmatprep.subr.mxu0 0.0
  %1765 = vmatpush1.msra.mxu0 %v1733
  %1766 = vmatprep.subr.mxu0 0.0
  %1767 = vmatpush1.msra.mxu0 %v1732
  %1768 = vmatprep.subr.mxu0 0.0
  %1769 = vmatpush1.msra.mxu0 %v1731
  %1770 = vmatprep.subr.mxu0 0.0
  %1771 = vmatpush1.msra.mxu0 %v1730
  %1772 = vmatprep.subr.mxu0 0.0
  %1773 = vmatpush1.msra.mxu0 %v1729
  %1774 = vmatprep.subr.mxu0 0.0
  %1775 = vmatpush1.msra.mxu0 %v1728
  %1776 = vmatprep.subr.mxu0 0.0
  %1777 = vmatpush2.msra.mxu0 0.0
  %1778 = vmatprep.subr.mxu0 0.0
  %1779 = vmatpush2.msra.mxu0 0.0
  %1780 = vmatprep.subr.mxu0 0.0
  %1781 = vmatpush2.msra.mxu0 0.0
  %1782 = vmatprep.subr.mxu0 0.0
  %1783 = vmatpush2.msra.mxu0 0.0
  %1784 = vmatprep.subr.mxu0 0.0
  %1785 = vmatpush2.msra.mxu0 0.0
  %1786 = vmatprep.subr.mxu0 0.0
  %1787 = vmatpush2.msra.mxu0 0.0
  %1788 = vmatprep.subr.mxu0 0.0
  %1789 = vmatpush2.msra.mxu0 0.0
  %1790 = vmatprep.subr.mxu0 0.0
  %1791 = vmatpush2.msra.mxu0 0.0
  %1792 = vmatprep.subr.mxu0 0.0
  %1793 = vmatpush2.msra.mxu0 0.0
  %1794 = vmatprep.subr.mxu0 0.0
  %1795 = vmatpush2.msra.mxu0 0.0
  %1796 = vmatprep.subr.mxu0 0.0
  %1797 = vmatpush2.msra.mxu0 0.0
  %1798 = vmatprep.subr.mxu0 0.0
  %1799 = vmatpush2.msra.mxu0 0.0
  %1800 = vmatprep.subr.mxu0 0.0
  %1801 = vmatpush2.msra.mxu0 0.0
  %1802 = vmatprep.subr.mxu0 0.0
  %1803 = vmatpush2.msra.mxu0 0.0
  %1804 = vmatprep.subr.mxu0 0.0
  %1805 = vmatpush2.msra.mxu0 0.0
  %1806 = vmatprep.subr.mxu0 0.0
  %1807 = vmatpush2.msra.mxu0 0.0
  %1808 = vmatprep.mubr.f32.mxu0 0.0
  %1809 = vmatmul.mubr.f32.gmra.mxu0 %v1725
  %v1810 = vpop.f32.mrf.mxu0
  %v1811 = vadd.f32 0.0, %v1810
  %v1812 = vpop.f32.mrf.mxu0
  %1813 = vmatprep.mubr.f32.mxu0 0.0
  %1814 = vmatmul.mubr.f32.gmra.mxu0 %v1726
  %v1815 = vpop.f32.mrf.mxu0
  %v1816 = vadd.f32 0.0, %v1815
  %v1817 = vpop.f32.mrf.mxu0
  %1818 = vmatprep.mubr.f32.mxu0 0.0
  %1819 = vmatmul.mubr.f32.gmra.mxu0 %v1727
  %v1820 = vpop.f32.mrf.mxu0
  %v1821 = vadd.f32 0.0, %v1820
  %v1822 = vpop.f32.mrf.mxu0
  %1823 = vdwg.mxu0
  %v1824 = vadd.f32 %v1494, %v1811
  %v1825 = vadd.f32 %v1495, %v1816
  %v1826 = vadd.f32 %v1496, %v1821
  %v1827 = vlaneseq
  %v1828 = vshrl.u32 %v1827, 7
  %v1829 = vsub.s32 0, %v1828
  %v1830 = vrot.slane %v188, %v1829
  %v1831 = vadd.f32 %v1824, %v1830
  %v1832 = vadd.f32 %v1825, %v1830
  %v1833 = vadd.f32 %v1826, %v1830
  %v1834 = vld [vmem:[%s2 + $0x8] sm:$0x1]
  %v1835 = vld [vmem:[%s2 + $0x9] sm:$0x1]
  %v1836 = vld [vmem:[%s2 + $0xa] sm:$0x1]
  %v1837 = vld [vmem:[%s2 + $0xb] sm:$0x1]
  %v1838 = vld [vmem:[%s2 + $0xc] sm:$0x1]
  %v1839 = vld [vmem:[%s2 + $0xd] sm:$0x1]
  %v1840 = vld [vmem:[%s2 + $0xe] sm:$0x1]
  %v1841 = vld [vmem:[%s2 + $0xf] sm:$0x1]
  %v1842 = vsel %vm189, %v1831, 0.0
  %1843 = vadd.xlane.f32.xlu0 %v1842
  %v1844 = vpop.xlane.xlu0 %1843
  %v1845 = vsel %vm189, %v1832, 0.0
  %1846 = vadd.xlane.f32.xlu0 %v1845
  %v1847 = vpop.xlane.xlu0 %1846
  %v1848 = vsel %vm196, %v1833, 0.0
  %1849 = vadd.xlane.f32.xlu0 %v1848
  %v1850 = vpop.xlane.xlu0 %1849
  %v1851 = vmul.f32 %v1844, %v200
  %v1852 = vmul.f32 %v1847, %v200
  %v1853 = vmul.f32 %v1850, %v200
  %v1854 = vsub.f32 %v1831, %v1851
  %v1855 = vsub.f32 %v1832, %v1852
  %v1856 = vsub.f32 %v1833, %v1853
  %v1857 = vmul.f32 %v1854, %v1854
  %v1858 = vmul.f32 %v1855, %v1855
  %v1859 = vmul.f32 %v1856, %v1856
  %v1860 = vsel %vm189, %v1857, 0.0
  %1861 = vadd.xlane.f32.xlu0 %v1860
  %v1862 = vpop.xlane.xlu0 %1861
  %v1863 = vsel %vm189, %v1858, 0.0
  %1864 = vadd.xlane.f32.xlu0 %v1863
  %v1865 = vpop.xlane.xlu0 %1864
  %v1866 = vsel %vm196, %v1859, 0.0
  %1867 = vadd.xlane.f32.xlu0 %v1866
  %v1868 = vpop.xlane.xlu0 %1867
  %v1869 = vmul.f32 %v1862, %v200
  %v1870 = vmul.f32 %v1865, %v200
  %v1871 = vmul.f32 %v1868, %v200
  %v1872 = vadd.f32 %v1869, 1e-06
  %v1873 = vadd.f32 %v1870, 1e-06
  %v1874 = vadd.f32 %v1871, 1e-06
  %v1875 = vrsqrt.pop %v1872
  %v1876 = vrsqrt.pop %v1873
  %v1877 = vrsqrt.pop %v1874
  %v1878 = vmul.f32 %v1854, %v1875
  %v1879 = vmul.f32 %v1855, %v1876
  %v1880 = vmul.f32 %v1856, %v1877
  %v1881 = vlaneseq
  %v1882 = vshrl.u32 %v1881, 7
  %v1883 = vsub.s32 0, %v1882
  %v1884 = vrot.slane %v1834, %v1883
  %v1885 = vmul.f32 %v1878, %v1884
  %v1886 = vmul.f32 %v1879, %v1884
  %v1887 = vmul.f32 %v1880, %v1884
  %v1888 = vlaneseq
  %v1889 = vshrl.u32 %v1888, 7
  %v1890 = vsub.s32 0, %v1889
  %v1891 = vrot.slane %v1835, %v1890
  %v1892 = vadd.f32 %v1885, %v1891
  %v1893 = vadd.f32 %v1886, %v1891
  %v1894 = vadd.f32 %v1887, %v1891
  %v1895 = vld [vmem:[%s1 + $0x1e0] sm:$0xff]
  %v1896 = vld [vmem:[%s1 + $0x1e8] sm:$0xff]
  %v1897 = vld [vmem:[%s1 + $0x1f0] sm:$0xff]
  %v1898 = vld [vmem:[%s1 + $0x1f8] sm:$0xff]
  %v1899 = vlaneseq
  %v1900 = vshrl.u32 %v1899, 7
  %v1901 = vsub.s32 0, %v1900
  %v1902 = vrot.slane %v1836, %v1901
  %v1904 = vsel %vm189, %v1892, 0
  %v1907 = vsel %vm189, %v1893, 0
  %v1910 = vsel %vm189, %v1894, 0
  %1912 = vmatprep.subr.mxu0 0.0
  %1913 = vmatpush1.msra.mxu0 0.0
  %1914 = vmatprep.subr.mxu0 0.0
  %1915 = vmatpush1.msra.mxu0 0.0
  %1916 = vmatprep.subr.mxu0 0.0
  %1917 = vmatpush1.msra.mxu0 0.0
  %1918 = vmatprep.subr.mxu0 0.0
  %1919 = vmatpush1.msra.mxu0 0.0
  %1920 = vmatprep.subr.mxu0 0.0
  %1921 = vmatpush1.msra.mxu0 0.0
  %1922 = vmatprep.subr.mxu0 0.0
  %1923 = vmatpush1.msra.mxu0 0.0
  %1924 = vmatprep.subr.mxu0 0.0
  %1925 = vmatpush1.msra.mxu0 0.0
  %1926 = vmatprep.subr.mxu0 0.0
  %1927 = vmatpush1.msra.mxu0 0.0
  %1928 = vmatprep.subr.mxu0 0.0
  %1929 = vmatpush1.msra.mxu0 0.0
  %1930 = vmatprep.subr.mxu0 0.0
  %1931 = vmatpush1.msra.mxu0 0.0
  %1932 = vmatprep.subr.mxu0 0.0
  %1933 = vmatpush1.msra.mxu0 0.0
  %1934 = vmatprep.subr.mxu0 0.0
  %1935 = vmatpush1.msra.mxu0 0.0
  %1936 = vmatprep.subr.mxu0 0.0
  %1937 = vmatpush1.msra.mxu0 %v1898
  %1938 = vmatprep.subr.mxu0 0.0
  %1939 = vmatpush1.msra.mxu0 %v1897
  %1940 = vmatprep.subr.mxu0 0.0
  %1941 = vmatpush1.msra.mxu0 %v1896
  %1942 = vmatprep.subr.mxu0 0.0
  %1943 = vmatpush1.msra.mxu0 %v1895
  %1944 = vmatprep.subr.mxu0 0.0
  %1945 = vmatpush2.msra.mxu0 0.0
  %1946 = vmatprep.subr.mxu0 0.0
  %1947 = vmatpush2.msra.mxu0 0.0
  %1948 = vmatprep.subr.mxu0 0.0
  %1949 = vmatpush2.msra.mxu0 0.0
  %1950 = vmatprep.subr.mxu0 0.0
  %1951 = vmatpush2.msra.mxu0 0.0
  %1952 = vmatprep.subr.mxu0 0.0
  %1953 = vmatpush2.msra.mxu0 0.0
  %1954 = vmatprep.subr.mxu0 0.0
  %1955 = vmatpush2.msra.mxu0 0.0
  %1956 = vmatprep.subr.mxu0 0.0
  %1957 = vmatpush2.msra.mxu0 0.0
  %1958 = vmatprep.subr.mxu0 0.0
  %1959 = vmatpush2.msra.mxu0 0.0
  %1960 = vmatprep.subr.mxu0 0.0
  %1961 = vmatpush2.msra.mxu0 0.0
  %1962 = vmatprep.subr.mxu0 0.0
  %1963 = vmatpush2.msra.mxu0 0.0
  %1964 = vmatprep.subr.mxu0 0.0
  %1965 = vmatpush2.msra.mxu0 0.0
  %1966 = vmatprep.subr.mxu0 0.0
  %1967 = vmatpush2.msra.mxu0 0.0
  %1968 = vmatprep.subr.mxu0 0.0
  %1969 = vmatpush2.msra.mxu0 0.0
  %1970 = vmatprep.subr.mxu0 0.0
  %1971 = vmatpush2.msra.mxu0 0.0
  %1972 = vmatprep.subr.mxu0 0.0
  %1973 = vmatpush2.msra.mxu0 0.0
  %1974 = vmatprep.subr.mxu0 0.0
  %1975 = vmatpush2.msra.mxu0 0.0
  %1976 = vmatprep.mubr.f32.mxu0 0.0
  %1977 = vmatmul.mubr.f32.gmra.mxu0 %v1904
  %v1978 = vpop.f32.mrf.mxu0
  %v1979 = vadd.f32 %v1902, %v1978
  %v1980 = vpop.f32.mrf.mxu0
  %1981 = vmatprep.mubr.f32.mxu0 0.0
  %1982 = vmatmul.mubr.f32.gmra.mxu0 %v1907
  %v1983 = vpop.f32.mrf.mxu0
  %v1984 = vadd.f32 %v1902, %v1983
  %v1985 = vpop.f32.mrf.mxu0
  %1986 = vmatprep.mubr.f32.mxu0 0.0
  %1987 = vmatmul.mubr.f32.gmra.mxu0 %v1910
  %v1988 = vpop.f32.mrf.mxu0
  %v1989 = vadd.f32 %v1902, %v1988
  %v1990 = vpop.f32.mrf.mxu0
  %1991 = vdwg.mxu0
  %1995 = vrot.lane.b32.xlu0 %v1979, 96
  %v1996 = vpop.permute.xlu0 %1995
  %1997 = vrot.lane.b32.xlu0 %v1984, 96
  %v1998 = vpop.permute.xlu0 %1997
  %1999 = vrot.lane.b32.xlu0 %v1989, 96
  %v2000 = vpop.permute.xlu0 %1999
  %v2001 = vsel %vm351, %v1979, 0
  %v2003 = vsel %vm351, %v1984, 0
  %v2005 = vsel %vm351, %v1989, 0
  %v2007 = vsel %vm351, %v1996, 0
  %v2009 = vsel %vm351, %v1998, 0
  %v2011 = vsel %vm351, %v2000, 0
  %2013 = vmatprep.subr.mxu0 0.0
  %2014 = vmatpush1.xpose.msra.mxu0 0.0
  %2015 = vmatprep.subr.mxu0 0.0
  %2016 = vmatpush1.xpose.msra.mxu0 0.0
  %2017 = vmatprep.subr.mxu0 0.0
  %2018 = vmatpush1.xpose.msra.mxu0 0.0
  %2019 = vmatprep.subr.mxu0 0.0
  %2020 = vmatpush1.xpose.msra.mxu0 0.0
  %2021 = vmatprep.subr.mxu0 0.0
  %2022 = vmatpush1.xpose.msra.mxu0 0.0
  %2023 = vmatprep.subr.mxu0 0.0
  %2024 = vmatpush1.xpose.msra.mxu0 0.0
  %2025 = vmatprep.subr.mxu0 0.0
  %2026 = vmatpush1.xpose.msra.mxu0 0.0
  %2027 = vmatprep.subr.mxu0 0.0
  %2028 = vmatpush1.xpose.msra.mxu0 0.0
  %2029 = vmatprep.subr.mxu0 0.0
  %2030 = vmatpush1.xpose.msra.mxu0 0.0
  %2031 = vmatprep.subr.mxu0 0.0
  %2032 = vmatpush1.xpose.msra.mxu0 0.0
  %2033 = vmatprep.subr.mxu0 0.0
  %2034 = vmatpush1.xpose.msra.mxu0 0.0
  %2035 = vmatprep.subr.mxu0 0.0
  %2036 = vmatpush1.xpose.msra.mxu0 0.0
  %2037 = vmatprep.subr.mxu0 0.0
  %2038 = vmatpush1.xpose.msra.mxu0 0.0
  %2039 = vmatprep.subr.mxu0 0.0
  %2040 = vmatpush1.xpose.msra.mxu0 %v2011
  %2041 = vmatprep.subr.mxu0 0.0
  %2042 = vmatpush1.xpose.msra.mxu0 %v2009
  %2043 = vmatprep.subr.mxu0 0.0
  %2044 = vmatpush1.xpose.msra.mxu0 %v2007
  %2045 = vmatprep.subr.mxu0 0.0
  %2046 = vmatpush2.xpose.msra.mxu0 0.0
  %2047 = vmatprep.subr.mxu0 0.0
  %2048 = vmatpush2.xpose.msra.mxu0 0.0
  %2049 = vmatprep.subr.mxu0 0.0
  %2050 = vmatpush2.xpose.msra.mxu0 0.0
  %2051 = vmatprep.subr.mxu0 0.0
  %2052 = vmatpush2.xpose.msra.mxu0 0.0
  %2053 = vmatprep.subr.mxu0 0.0
  %2054 = vmatpush2.xpose.msra.mxu0 0.0
  %2055 = vmatprep.subr.mxu0 0.0
  %2056 = vmatpush2.xpose.msra.mxu0 0.0
  %2057 = vmatprep.subr.mxu0 0.0
  %2058 = vmatpush2.xpose.msra.mxu0 0.0
  %2059 = vmatprep.subr.mxu0 0.0
  %2060 = vmatpush2.xpose.msra.mxu0 0.0
  %2061 = vmatprep.subr.mxu0 0.0
  %2062 = vmatpush2.xpose.msra.mxu0 0.0
  %2063 = vmatprep.subr.mxu0 0.0
  %2064 = vmatpush2.xpose.msra.mxu0 0.0
  %2065 = vmatprep.subr.mxu0 0.0
  %2066 = vmatpush2.xpose.msra.mxu0 0.0
  %2067 = vmatprep.subr.mxu0 0.0
  %2068 = vmatpush2.xpose.msra.mxu0 0.0
  %2069 = vmatprep.subr.mxu0 0.0
  %2070 = vmatpush2.xpose.msra.mxu0 0.0
  %2071 = vmatprep.subr.mxu0 0.0
  %2072 = vmatpush2.xpose.msra.mxu0 0.0
  %2073 = vmatprep.subr.mxu0 0.0
  %2074 = vmatpush2.xpose.msra.mxu0 0.0
  %2075 = vmatprep.subr.mxu0 0.0
  %2076 = vmatpush2.xpose.msra.mxu0 0.0
  %2077 = vmatprep.mubr.f32.mxu0 0.0
  %2078 = vmatmul.mubr.f32.gmra.mxu0 %v2001
  %v2079 = vpop.f32.mrf.mxu0
  %v2080 = vadd.f32 0.0, %v2079
  %v2081 = vpop.f32.mrf.mxu0
  %2082 = vmatprep.mubr.f32.mxu0 0.0
  %2083 = vmatmul.mubr.f32.gmra.mxu0 %v2003
  %v2084 = vpop.f32.mrf.mxu0
  %v2085 = vadd.f32 0.0, %v2084
  %v2086 = vpop.f32.mrf.mxu0
  %2087 = vmatprep.mubr.f32.mxu0 0.0
  %2088 = vmatmul.mubr.f32.gmra.mxu0 %v2005
  %v2089 = vpop.f32.mrf.mxu0
  %v2090 = vadd.f32 0.0, %v2089
  %v2091 = vpop.f32.mrf.mxu0
  %2092 = vdwg.mxu0
  %v2093 = vmul.f32 %v2080, 0.35355338
  %v2094 = vmul.f32 %v2085, 0.35355338
  %v2095 = vmul.f32 %v2090, 0.35355338
  %v2096 = vadd.f32 %v2093, %v178
  %v2097 = vadd.f32 %v2094, %v179
  %v2098 = vadd.f32 %v2095, %v180
  %v2099 = vsel %vm450, %v2096, -inf
  %2100 = vmax.xlane.f32.xlu0 %v2099
  %v2101 = vpop.xlane.xlu0 %2100
  %v2102 = vsel %vm450, %v2097, -inf
  %2103 = vmax.xlane.f32.xlu0 %v2102
  %v2104 = vpop.xlane.xlu0 %2103
  %v2105 = vsel %vm457, %v2098, -inf
  %2106 = vmax.xlane.f32.xlu0 %v2105
  %v2107 = vpop.xlane.xlu0 %2106
  %v2108 = vsub.f32 %v2096, %v2101
  %v2109 = vsub.f32 %v2097, %v2104
  %v2110 = vsub.f32 %v2098, %v2107
  %v2111 = vmul.f32 %v2108, 1.442695
  %v2112 = vpow.pop %v2111
  %v2113 = vmul.f32 %v2109, 1.442695
  %v2114 = vpow.pop %v2113
  %v2115 = vmul.f32 %v2110, 1.442695
  %v2116 = vpow.pop %v2115
  %v2117 = vsel %vm450, %v2112, 0.0
  %2118 = vadd.xlane.f32.xlu0 %v2117
  %v2119 = vpop.xlane.xlu0 %2118
  %v2120 = vsel %vm450, %v2114, 0.0
  %2121 = vadd.xlane.f32.xlu0 %v2120
  %v2122 = vpop.xlane.xlu0 %2121
  %v2123 = vsel %vm457, %v2116, 0.0
  %2124 = vadd.xlane.f32.xlu0 %v2123
  %v2125 = vpop.xlane.xlu0 %2124
  %v2126 = vrcp.pop %v2119
  %v2127 = vrcp.pop %v2122
  %v2128 = vrcp.pop %v2125
  %v2129 = vmul.f32 %v2119, %v2126
  %v2130 = vmul.f32 %v2122, %v2127
  %v2131 = vmul.f32 %v2125, %v2128
  %v2132 = vsub.f32 2.0, %v2129
  %v2133 = vsub.f32 2.0, %v2130
  %v2134 = vsub.f32 2.0, %v2131
  %v2135 = vmul.f32 %v2126, %v2132
  %v2136 = vmul.f32 %v2127, %v2133
  %v2137 = vmul.f32 %v2128, %v2134
  %v2138 = vmul.f32 %v2112, %v2135
  %v2139 = vmul.f32 %v2114, %v2136
  %v2140 = vmul.f32 %v2116, %v2137
  %2141 = vrot.lane.b32.xlu0 %v1979, 64
  %v2142 = vpop.permute.xlu0 %2141
  %2143 = vrot.lane.b32.xlu0 %v1984, 64
  %v2144 = vpop.permute.xlu0 %2143
  %2145 = vrot.lane.b32.xlu0 %v1989, 64
  %v2146 = vpop.permute.xlu0 %2145
  %v2150 = vsel %vm450, %v2138, 0
  %v2153 = vsel %vm450, %v2139, 0
  %v2156 = vsel %vm450, %v2140, 0
  %v2158 = vsel %vm511, %v2146, 0
  %2160 = vmatprep.subr.mxu0 0.0
  %2161 = vmatpush1.msra.mxu0 0.0
  %2162 = vmatprep.subr.mxu0 0.0
  %2163 = vmatpush1.msra.mxu0 0.0
  %2164 = vmatprep.subr.mxu0 0.0
  %2165 = vmatpush1.msra.mxu0 0.0
  %2166 = vmatprep.subr.mxu0 0.0
  %2167 = vmatpush1.msra.mxu0 0.0
  %2168 = vmatprep.subr.mxu0 0.0
  %2169 = vmatpush1.msra.mxu0 0.0
  %2170 = vmatprep.subr.mxu0 0.0
  %2171 = vmatpush1.msra.mxu0 0.0
  %2172 = vmatprep.subr.mxu0 0.0
  %2173 = vmatpush1.msra.mxu0 0.0
  %2174 = vmatprep.subr.mxu0 0.0
  %2175 = vmatpush1.msra.mxu0 0.0
  %2176 = vmatprep.subr.mxu0 0.0
  %2177 = vmatpush1.msra.mxu0 0.0
  %2178 = vmatprep.subr.mxu0 0.0
  %2179 = vmatpush1.msra.mxu0 0.0
  %2180 = vmatprep.subr.mxu0 0.0
  %2181 = vmatpush1.msra.mxu0 0.0
  %2182 = vmatprep.subr.mxu0 0.0
  %2183 = vmatpush1.msra.mxu0 0.0
  %2184 = vmatprep.subr.mxu0 0.0
  %2185 = vmatpush1.msra.mxu0 0.0
  %2186 = vmatprep.subr.mxu0 0.0
  %2187 = vmatpush1.msra.mxu0 %v2158
  %2188 = vmatprep.subr.mxu0 0.0
  %2189 = vmatpush1.msra.mxu0 %v2144
  %2190 = vmatprep.subr.mxu0 0.0
  %2191 = vmatpush1.msra.mxu0 %v2142
  %2192 = vmatprep.subr.mxu0 0.0
  %2193 = vmatpush2.msra.mxu0 0.0
  %2194 = vmatprep.subr.mxu0 0.0
  %2195 = vmatpush2.msra.mxu0 0.0
  %2196 = vmatprep.subr.mxu0 0.0
  %2197 = vmatpush2.msra.mxu0 0.0
  %2198 = vmatprep.subr.mxu0 0.0
  %2199 = vmatpush2.msra.mxu0 0.0
  %2200 = vmatprep.subr.mxu0 0.0
  %2201 = vmatpush2.msra.mxu0 0.0
  %2202 = vmatprep.subr.mxu0 0.0
  %2203 = vmatpush2.msra.mxu0 0.0
  %2204 = vmatprep.subr.mxu0 0.0
  %2205 = vmatpush2.msra.mxu0 0.0
  %2206 = vmatprep.subr.mxu0 0.0
  %2207 = vmatpush2.msra.mxu0 0.0
  %2208 = vmatprep.subr.mxu0 0.0
  %2209 = vmatpush2.msra.mxu0 0.0
  %2210 = vmatprep.subr.mxu0 0.0
  %2211 = vmatpush2.msra.mxu0 0.0
  %2212 = vmatprep.subr.mxu0 0.0
  %2213 = vmatpush2.msra.mxu0 0.0
  %2214 = vmatprep.subr.mxu0 0.0
  %2215 = vmatpush2.msra.mxu0 0.0
  %2216 = vmatprep.subr.mxu0 0.0
  %2217 = vmatpush2.msra.mxu0 0.0
  %2218 = vmatprep.subr.mxu0 0.0
  %2219 = vmatpush2.msra.mxu0 0.0
  %2220 = vmatprep.subr.mxu0 0.0
  %2221 = vmatpush2.msra.mxu0 0.0
  %2222 = vmatprep.subr.mxu0 0.0
  %2223 = vmatpush2.msra.mxu0 0.0
  %2224 = vmatprep.mubr.f32.mxu0 0.0
  %2225 = vmatmul.mubr.f32.gmra.mxu0 %v2150
  %v2226 = vpop.f32.mrf.mxu0
  %v2227 = vadd.f32 0.0, %v2226
  %v2228 = vpop.f32.mrf.mxu0
  %2229 = vmatprep.mubr.f32.mxu0 0.0
  %2230 = vmatmul.mubr.f32.gmra.mxu0 %v2153
  %v2231 = vpop.f32.mrf.mxu0
  %v2232 = vadd.f32 0.0, %v2231
  %v2233 = vpop.f32.mrf.mxu0
  %2234 = vmatprep.mubr.f32.mxu0 0.0
  %2235 = vmatmul.mubr.f32.gmra.mxu0 %v2156
  %v2236 = vpop.f32.mrf.mxu0
  %v2237 = vadd.f32 0.0, %v2236
  %v2238 = vpop.f32.mrf.mxu0
  %2239 = vdwg.mxu0
  %2240 = vrot.lane.b32.xlu0 %v1979, 120
  %v2241 = vpop.permute.xlu0 %2240
  %2242 = vrot.lane.b32.xlu0 %v1984, 120
  %v2243 = vpop.permute.xlu0 %2242
  %2244 = vrot.lane.b32.xlu0 %v1989, 120
  %v2245 = vpop.permute.xlu0 %2244
  %2246 = vrot.lane.b32.xlu0 %v1979, 88
  %v2247 = vpop.permute.xlu0 %2246
  %2248 = vrot.lane.b32.xlu0 %v1984, 88
  %v2249 = vpop.permute.xlu0 %2248
  %2250 = vrot.lane.b32.xlu0 %v1989, 88
  %v2251 = vpop.permute.xlu0 %2250
  %v2252 = vsel %vm351, %v2241, 0
  %v2254 = vsel %vm351, %v2243, 0
  %v2256 = vsel %vm351, %v2245, 0
  %v2258 = vsel %vm351, %v2247, 0
  %v2260 = vsel %vm351, %v2249, 0
  %v2262 = vsel %vm351, %v2251, 0
  %2264 = vmatprep.subr.mxu0 0.0
  %2265 = vmatpush1.xpose.msra.mxu0 0.0
  %2266 = vmatprep.subr.mxu0 0.0
  %2267 = vmatpush1.xpose.msra.mxu0 0.0
  %2268 = vmatprep.subr.mxu0 0.0
  %2269 = vmatpush1.xpose.msra.mxu0 0.0
  %2270 = vmatprep.subr.mxu0 0.0
  %2271 = vmatpush1.xpose.msra.mxu0 0.0
  %2272 = vmatprep.subr.mxu0 0.0
  %2273 = vmatpush1.xpose.msra.mxu0 0.0
  %2274 = vmatprep.subr.mxu0 0.0
  %2275 = vmatpush1.xpose.msra.mxu0 0.0
  %2276 = vmatprep.subr.mxu0 0.0
  %2277 = vmatpush1.xpose.msra.mxu0 0.0
  %2278 = vmatprep.subr.mxu0 0.0
  %2279 = vmatpush1.xpose.msra.mxu0 0.0
  %2280 = vmatprep.subr.mxu0 0.0
  %2281 = vmatpush1.xpose.msra.mxu0 0.0
  %2282 = vmatprep.subr.mxu0 0.0
  %2283 = vmatpush1.xpose.msra.mxu0 0.0
  %2284 = vmatprep.subr.mxu0 0.0
  %2285 = vmatpush1.xpose.msra.mxu0 0.0
  %2286 = vmatprep.subr.mxu0 0.0
  %2287 = vmatpush1.xpose.msra.mxu0 0.0
  %2288 = vmatprep.subr.mxu0 0.0
  %2289 = vmatpush1.xpose.msra.mxu0 0.0
  %2290 = vmatprep.subr.mxu0 0.0
  %2291 = vmatpush1.xpose.msra.mxu0 %v2262
  %2292 = vmatprep.subr.mxu0 0.0
  %2293 = vmatpush1.xpose.msra.mxu0 %v2260
  %2294 = vmatprep.subr.mxu0 0.0
  %2295 = vmatpush1.xpose.msra.mxu0 %v2258
  %2296 = vmatprep.subr.mxu0 0.0
  %2297 = vmatpush2.xpose.msra.mxu0 0.0
  %2298 = vmatprep.subr.mxu0 0.0
  %2299 = vmatpush2.xpose.msra.mxu0 0.0
  %2300 = vmatprep.subr.mxu0 0.0
  %2301 = vmatpush2.xpose.msra.mxu0 0.0
  %2302 = vmatprep.subr.mxu0 0.0
  %2303 = vmatpush2.xpose.msra.mxu0 0.0
  %2304 = vmatprep.subr.mxu0 0.0
  %2305 = vmatpush2.xpose.msra.mxu0 0.0
  %2306 = vmatprep.subr.mxu0 0.0
  %2307 = vmatpush2.xpose.msra.mxu0 0.0
  %2308 = vmatprep.subr.mxu0 0.0
  %2309 = vmatpush2.xpose.msra.mxu0 0.0
  %2310 = vmatprep.subr.mxu0 0.0
  %2311 = vmatpush2.xpose.msra.mxu0 0.0
  %2312 = vmatprep.subr.mxu0 0.0
  %2313 = vmatpush2.xpose.msra.mxu0 0.0
  %2314 = vmatprep.subr.mxu0 0.0
  %2315 = vmatpush2.xpose.msra.mxu0 0.0
  %2316 = vmatprep.subr.mxu0 0.0
  %2317 = vmatpush2.xpose.msra.mxu0 0.0
  %2318 = vmatprep.subr.mxu0 0.0
  %2319 = vmatpush2.xpose.msra.mxu0 0.0
  %2320 = vmatprep.subr.mxu0 0.0
  %2321 = vmatpush2.xpose.msra.mxu0 0.0
  %2322 = vmatprep.subr.mxu0 0.0
  %2323 = vmatpush2.xpose.msra.mxu0 0.0
  %2324 = vmatprep.subr.mxu0 0.0
  %2325 = vmatpush2.xpose.msra.mxu0 0.0
  %2326 = vmatprep.subr.mxu0 0.0
  %2327 = vmatpush2.xpose.msra.mxu0 0.0
  %2328 = vmatprep.mubr.f32.mxu0 0.0
  %2329 = vmatmul.mubr.f32.gmra.mxu0 %v2252
  %v2330 = vpop.f32.mrf.mxu0
  %v2331 = vadd.f32 0.0, %v2330
  %v2332 = vpop.f32.mrf.mxu0
  %2333 = vmatprep.mubr.f32.mxu0 0.0
  %2334 = vmatmul.mubr.f32.gmra.mxu0 %v2254
  %v2335 = vpop.f32.mrf.mxu0
  %v2336 = vadd.f32 0.0, %v2335
  %v2337 = vpop.f32.mrf.mxu0
  %2338 = vmatprep.mubr.f32.mxu0 0.0
  %2339 = vmatmul.mubr.f32.gmra.mxu0 %v2256
  %v2340 = vpop.f32.mrf.mxu0
  %v2341 = vadd.f32 0.0, %v2340
  %v2342 = vpop.f32.mrf.mxu0
  %2343 = vdwg.mxu0
  %v2344 = vmul.f32 %v2331, 0.35355338
  %v2345 = vmul.f32 %v2336, 0.35355338
  %v2346 = vmul.f32 %v2341, 0.35355338
  %v2347 = vadd.f32 %v2344, %v178
  %v2348 = vadd.f32 %v2345, %v179
  %v2349 = vadd.f32 %v2346, %v180
  %v2350 = vsel %vm450, %v2347, -inf
  %2351 = vmax.xlane.f32.xlu0 %v2350
  %v2352 = vpop.xlane.xlu0 %2351
  %v2353 = vsel %vm450, %v2348, -inf
  %2354 = vmax.xlane.f32.xlu0 %v2353
  %v2355 = vpop.xlane.xlu0 %2354
  %v2356 = vsel %vm457, %v2349, -inf
  %2357 = vmax.xlane.f32.xlu0 %v2356
  %v2358 = vpop.xlane.xlu0 %2357
  %v2359 = vsub.f32 %v2347, %v2352
  %v2360 = vsub.f32 %v2348, %v2355
  %v2361 = vsub.f32 %v2349, %v2358
  %v2362 = vmul.f32 %v2359, 1.442695
  %v2363 = vpow.pop %v2362
  %v2364 = vmul.f32 %v2360, 1.442695
  %v2365 = vpow.pop %v2364
  %v2366 = vmul.f32 %v2361, 1.442695
  %v2367 = vpow.pop %v2366
  %v2368 = vsel %vm450, %v2363, 0.0
  %2369 = vadd.xlane.f32.xlu0 %v2368
  %v2370 = vpop.xlane.xlu0 %2369
  %v2371 = vsel %vm450, %v2365, 0.0
  %2372 = vadd.xlane.f32.xlu0 %v2371
  %v2373 = vpop.xlane.xlu0 %2372
  %v2374 = vsel %vm457, %v2367, 0.0
  %2375 = vadd.xlane.f32.xlu0 %v2374
  %v2376 = vpop.xlane.xlu0 %2375
  %v2377 = vrcp.pop %v2370
  %v2378 = vrcp.pop %v2373
  %v2379 = vrcp.pop %v2376
  %v2380 = vmul.f32 %v2370, %v2377
  %v2381 = vmul.f32 %v2373, %v2378
  %v2382 = vmul.f32 %v2376, %v2379
  %v2383 = vsub.f32 2.0, %v2380
  %v2384 = vsub.f32 2.0, %v2381
  %v2385 = vsub.f32 2.0, %v2382
  %v2386 = vmul.f32 %v2377, %v2383
  %v2387 = vmul.f32 %v2378, %v2384
  %v2388 = vmul.f32 %v2379, %v2385
  %v2389 = vmul.f32 %v2363, %v2386
  %v2390 = vmul.f32 %v2365, %v2387
  %v2391 = vmul.f32 %v2367, %v2388
  %2392 = vrot.lane.b32.xlu0 %v1979, 56
  %v2393 = vpop.permute.xlu0 %2392
  %2394 = vrot.lane.b32.xlu0 %v1984, 56
  %v2395 = vpop.permute.xlu0 %2394
  %2396 = vrot.lane.b32.xlu0 %v1989, 56
  %v2397 = vpop.permute.xlu0 %2396
  %v2401 = vsel %vm450, %v2389, 0
  %v2404 = vsel %vm450, %v2390, 0
  %v2407 = vsel %vm450, %v2391, 0
  %v2409 = vsel %vm511, %v2397, 0
  %2411 = vmatprep.subr.mxu0 0.0
  %2412 = vmatpush1.msra.mxu0 0.0
  %2413 = vmatprep.subr.mxu0 0.0
  %2414 = vmatpush1.msra.mxu0 0.0
  %2415 = vmatprep.subr.mxu0 0.0
  %2416 = vmatpush1.msra.mxu0 0.0
  %2417 = vmatprep.subr.mxu0 0.0
  %2418 = vmatpush1.msra.mxu0 0.0
  %2419 = vmatprep.subr.mxu0 0.0
  %2420 = vmatpush1.msra.mxu0 0.0
  %2421 = vmatprep.subr.mxu0 0.0
  %2422 = vmatpush1.msra.mxu0 0.0
  %2423 = vmatprep.subr.mxu0 0.0
  %2424 = vmatpush1.msra.mxu0 0.0
  %2425 = vmatprep.subr.mxu0 0.0
  %2426 = vmatpush1.msra.mxu0 0.0
  %2427 = vmatprep.subr.mxu0 0.0
  %2428 = vmatpush1.msra.mxu0 0.0
  %2429 = vmatprep.subr.mxu0 0.0
  %2430 = vmatpush1.msra.mxu0 0.0
  %2431 = vmatprep.subr.mxu0 0.0
  %2432 = vmatpush1.msra.mxu0 0.0
  %2433 = vmatprep.subr.mxu0 0.0
  %2434 = vmatpush1.msra.mxu0 0.0
  %2435 = vmatprep.subr.mxu0 0.0
  %2436 = vmatpush1.msra.mxu0 0.0
  %2437 = vmatprep.subr.mxu0 0.0
  %2438 = vmatpush1.msra.mxu0 %v2409
  %2439 = vmatprep.subr.mxu0 0.0
  %2440 = vmatpush1.msra.mxu0 %v2395
  %2441 = vmatprep.subr.mxu0 0.0
  %2442 = vmatpush1.msra.mxu0 %v2393
  %2443 = vmatprep.subr.mxu0 0.0
  %2444 = vmatpush2.msra.mxu0 0.0
  %2445 = vmatprep.subr.mxu0 0.0
  %2446 = vmatpush2.msra.mxu0 0.0
  %2447 = vmatprep.subr.mxu0 0.0
  %2448 = vmatpush2.msra.mxu0 0.0
  %2449 = vmatprep.subr.mxu0 0.0
  %2450 = vmatpush2.msra.mxu0 0.0
  %2451 = vmatprep.subr.mxu0 0.0
  %2452 = vmatpush2.msra.mxu0 0.0
  %2453 = vmatprep.subr.mxu0 0.0
  %2454 = vmatpush2.msra.mxu0 0.0
  %2455 = vmatprep.subr.mxu0 0.0
  %2456 = vmatpush2.msra.mxu0 0.0
  %2457 = vmatprep.subr.mxu0 0.0
  %2458 = vmatpush2.msra.mxu0 0.0
  %2459 = vmatprep.subr.mxu0 0.0
  %2460 = vmatpush2.msra.mxu0 0.0
  %2461 = vmatprep.subr.mxu0 0.0
  %2462 = vmatpush2.msra.mxu0 0.0
  %2463 = vmatprep.subr.mxu0 0.0
  %2464 = vmatpush2.msra.mxu0 0.0
  %2465 = vmatprep.subr.mxu0 0.0
  %2466 = vmatpush2.msra.mxu0 0.0
  %2467 = vmatprep.subr.mxu0 0.0
  %2468 = vmatpush2.msra.mxu0 0.0
  %2469 = vmatprep.subr.mxu0 0.0
  %2470 = vmatpush2.msra.mxu0 0.0
  %2471 = vmatprep.subr.mxu0 0.0
  %2472 = vmatpush2.msra.mxu0 0.0
  %2473 = vmatprep.subr.mxu0 0.0
  %2474 = vmatpush2.msra.mxu0 0.0
  %2475 = vmatprep.mubr.f32.mxu0 0.0
  %2476 = vmatmul.mubr.f32.gmra.mxu0 %v2401
  %v2477 = vpop.f32.mrf.mxu0
  %v2478 = vadd.f32 0.0, %v2477
  %v2479 = vpop.f32.mrf.mxu0
  %2480 = vmatprep.mubr.f32.mxu0 0.0
  %2481 = vmatmul.mubr.f32.gmra.mxu0 %v2404
  %v2482 = vpop.f32.mrf.mxu0
  %v2483 = vadd.f32 0.0, %v2482
  %v2484 = vpop.f32.mrf.mxu0
  %2485 = vmatprep.mubr.f32.mxu0 0.0
  %2486 = vmatmul.mubr.f32.gmra.mxu0 %v2407
  %v2487 = vpop.f32.mrf.mxu0
  %v2488 = vadd.f32 0.0, %v2487
  %v2489 = vpop.f32.mrf.mxu0
  %2490 = vdwg.mxu0
  %2491 = vrot.lane.b32.xlu0 %v1979, 112
  %v2492 = vpop.permute.xlu0 %2491
  %2493 = vrot.lane.b32.xlu0 %v1984, 112
  %v2494 = vpop.permute.xlu0 %2493
  %2495 = vrot.lane.b32.xlu0 %v1989, 112
  %v2496 = vpop.permute.xlu0 %2495
  %2497 = vrot.lane.b32.xlu0 %v1979, 80
  %v2498 = vpop.permute.xlu0 %2497
  %2499 = vrot.lane.b32.xlu0 %v1984, 80
  %v2500 = vpop.permute.xlu0 %2499
  %2501 = vrot.lane.b32.xlu0 %v1989, 80
  %v2502 = vpop.permute.xlu0 %2501
  %v2503 = vsel %vm351, %v2492, 0
  %v2505 = vsel %vm351, %v2494, 0
  %v2507 = vsel %vm351, %v2496, 0
  %v2509 = vsel %vm351, %v2498, 0
  %v2511 = vsel %vm351, %v2500, 0
  %v2513 = vsel %vm351, %v2502, 0
  %2515 = vmatprep.subr.mxu0 0.0
  %2516 = vmatpush1.xpose.msra.mxu0 0.0
  %2517 = vmatprep.subr.mxu0 0.0
  %2518 = vmatpush1.xpose.msra.mxu0 0.0
  %2519 = vmatprep.subr.mxu0 0.0
  %2520 = vmatpush1.xpose.msra.mxu0 0.0
  %2521 = vmatprep.subr.mxu0 0.0
  %2522 = vmatpush1.xpose.msra.mxu0 0.0
  %2523 = vmatprep.subr.mxu0 0.0
  %2524 = vmatpush1.xpose.msra.mxu0 0.0
  %2525 = vmatprep.subr.mxu0 0.0
  %2526 = vmatpush1.xpose.msra.mxu0 0.0
  %2527 = vmatprep.subr.mxu0 0.0
  %2528 = vmatpush1.xpose.msra.mxu0 0.0
  %2529 = vmatprep.subr.mxu0 0.0
  %2530 = vmatpush1.xpose.msra.mxu0 0.0
  %2531 = vmatprep.subr.mxu0 0.0
  %2532 = vmatpush1.xpose.msra.mxu0 0.0
  %2533 = vmatprep.subr.mxu0 0.0
  %2534 = vmatpush1.xpose.msra.mxu0 0.0
  %2535 = vmatprep.subr.mxu0 0.0
  %2536 = vmatpush1.xpose.msra.mxu0 0.0
  %2537 = vmatprep.subr.mxu0 0.0
  %2538 = vmatpush1.xpose.msra.mxu0 0.0
  %2539 = vmatprep.subr.mxu0 0.0
  %2540 = vmatpush1.xpose.msra.mxu0 0.0
  %2541 = vmatprep.subr.mxu0 0.0
  %2542 = vmatpush1.xpose.msra.mxu0 %v2513
  %2543 = vmatprep.subr.mxu0 0.0
  %2544 = vmatpush1.xpose.msra.mxu0 %v2511
  %2545 = vmatprep.subr.mxu0 0.0
  %2546 = vmatpush1.xpose.msra.mxu0 %v2509
  %2547 = vmatprep.subr.mxu0 0.0
  %2548 = vmatpush2.xpose.msra.mxu0 0.0
  %2549 = vmatprep.subr.mxu0 0.0
  %2550 = vmatpush2.xpose.msra.mxu0 0.0
  %2551 = vmatprep.subr.mxu0 0.0
  %2552 = vmatpush2.xpose.msra.mxu0 0.0
  %2553 = vmatprep.subr.mxu0 0.0
  %2554 = vmatpush2.xpose.msra.mxu0 0.0
  %2555 = vmatprep.subr.mxu0 0.0
  %2556 = vmatpush2.xpose.msra.mxu0 0.0
  %2557 = vmatprep.subr.mxu0 0.0
  %2558 = vmatpush2.xpose.msra.mxu0 0.0
  %2559 = vmatprep.subr.mxu0 0.0
  %2560 = vmatpush2.xpose.msra.mxu0 0.0
  %2561 = vmatprep.subr.mxu0 0.0
  %2562 = vmatpush2.xpose.msra.mxu0 0.0
  %2563 = vmatprep.subr.mxu0 0.0
  %2564 = vmatpush2.xpose.msra.mxu0 0.0
  %2565 = vmatprep.subr.mxu0 0.0
  %2566 = vmatpush2.xpose.msra.mxu0 0.0
  %2567 = vmatprep.subr.mxu0 0.0
  %2568 = vmatpush2.xpose.msra.mxu0 0.0
  %2569 = vmatprep.subr.mxu0 0.0
  %2570 = vmatpush2.xpose.msra.mxu0 0.0
  %2571 = vmatprep.subr.mxu0 0.0
  %2572 = vmatpush2.xpose.msra.mxu0 0.0
  %2573 = vmatprep.subr.mxu0 0.0
  %2574 = vmatpush2.xpose.msra.mxu0 0.0
  %2575 = vmatprep.subr.mxu0 0.0
  %2576 = vmatpush2.xpose.msra.mxu0 0.0
  %2577 = vmatprep.subr.mxu0 0.0
  %2578 = vmatpush2.xpose.msra.mxu0 0.0
  %2579 = vmatprep.mubr.f32.mxu0 0.0
  %2580 = vmatmul.mubr.f32.gmra.mxu0 %v2503
  %v2581 = vpop.f32.mrf.mxu0
  %v2582 = vadd.f32 0.0, %v2581
  %v2583 = vpop.f32.mrf.mxu0
  %2584 = vmatprep.mubr.f32.mxu0 0.0
  %2585 = vmatmul.mubr.f32.gmra.mxu0 %v2505
  %v2586 = vpop.f32.mrf.mxu0
  %v2587 = vadd.f32 0.0, %v2586
  %v2588 = vpop.f32.mrf.mxu0
  %2589 = vmatprep.mubr.f32.mxu0 0.0
  %2590 = vmatmul.mubr.f32.gmra.mxu0 %v2507
  %v2591 = vpop.f32.mrf.mxu0
  %v2592 = vadd.f32 0.0, %v2591
  %v2593 = vpop.f32.mrf.mxu0
  %2594 = vdwg.mxu0
  %v2595 = vmul.f32 %v2582, 0.35355338
  %v2596 = vmul.f32 %v2587, 0.35355338
  %v2597 = vmul.f32 %v2592, 0.35355338
  %v2598 = vadd.f32 %v2595, %v178
  %v2599 = vadd.f32 %v2596, %v179
  %v2600 = vadd.f32 %v2597, %v180
  %v2601 = vsel %vm450, %v2598, -inf
  %2602 = vmax.xlane.f32.xlu0 %v2601
  %v2603 = vpop.xlane.xlu0 %2602
  %v2604 = vsel %vm450, %v2599, -inf
  %2605 = vmax.xlane.f32.xlu0 %v2604
  %v2606 = vpop.xlane.xlu0 %2605
  %v2607 = vsel %vm457, %v2600, -inf
  %2608 = vmax.xlane.f32.xlu0 %v2607
  %v2609 = vpop.xlane.xlu0 %2608
  %v2610 = vsub.f32 %v2598, %v2603
  %v2611 = vsub.f32 %v2599, %v2606
  %v2612 = vsub.f32 %v2600, %v2609
  %v2613 = vmul.f32 %v2610, 1.442695
  %v2614 = vpow.pop %v2613
  %v2615 = vmul.f32 %v2611, 1.442695
  %v2616 = vpow.pop %v2615
  %v2617 = vmul.f32 %v2612, 1.442695
  %v2618 = vpow.pop %v2617
  %v2619 = vsel %vm450, %v2614, 0.0
  %2620 = vadd.xlane.f32.xlu0 %v2619
  %v2621 = vpop.xlane.xlu0 %2620
  %v2622 = vsel %vm450, %v2616, 0.0
  %2623 = vadd.xlane.f32.xlu0 %v2622
  %v2624 = vpop.xlane.xlu0 %2623
  %v2625 = vsel %vm457, %v2618, 0.0
  %2626 = vadd.xlane.f32.xlu0 %v2625
  %v2627 = vpop.xlane.xlu0 %2626
  %v2628 = vrcp.pop %v2621
  %v2629 = vrcp.pop %v2624
  %v2630 = vrcp.pop %v2627
  %v2631 = vmul.f32 %v2621, %v2628
  %v2632 = vmul.f32 %v2624, %v2629
  %v2633 = vmul.f32 %v2627, %v2630
  %v2634 = vsub.f32 2.0, %v2631
  %v2635 = vsub.f32 2.0, %v2632
  %v2636 = vsub.f32 2.0, %v2633
  %v2637 = vmul.f32 %v2628, %v2634
  %v2638 = vmul.f32 %v2629, %v2635
  %v2639 = vmul.f32 %v2630, %v2636
  %v2640 = vmul.f32 %v2614, %v2637
  %v2641 = vmul.f32 %v2616, %v2638
  %v2642 = vmul.f32 %v2618, %v2639
  %2643 = vrot.lane.b32.xlu0 %v1979, 48
  %v2644 = vpop.permute.xlu0 %2643
  %2645 = vrot.lane.b32.xlu0 %v1984, 48
  %v2646 = vpop.permute.xlu0 %2645
  %2647 = vrot.lane.b32.xlu0 %v1989, 48
  %v2648 = vpop.permute.xlu0 %2647
  %v2652 = vsel %vm450, %v2640, 0
  %v2655 = vsel %vm450, %v2641, 0
  %v2658 = vsel %vm450, %v2642, 0
  %v2660 = vsel %vm511, %v2648, 0
  %2662 = vmatprep.subr.mxu0 0.0
  %2663 = vmatpush1.msra.mxu0 0.0
  %2664 = vmatprep.subr.mxu0 0.0
  %2665 = vmatpush1.msra.mxu0 0.0
  %2666 = vmatprep.subr.mxu0 0.0
  %2667 = vmatpush1.msra.mxu0 0.0
  %2668 = vmatprep.subr.mxu0 0.0
  %2669 = vmatpush1.msra.mxu0 0.0
  %2670 = vmatprep.subr.mxu0 0.0
  %2671 = vmatpush1.msra.mxu0 0.0
  %2672 = vmatprep.subr.mxu0 0.0
  %2673 = vmatpush1.msra.mxu0 0.0
  %2674 = vmatprep.subr.mxu0 0.0
  %2675 = vmatpush1.msra.mxu0 0.0
  %2676 = vmatprep.subr.mxu0 0.0
  %2677 = vmatpush1.msra.mxu0 0.0
  %2678 = vmatprep.subr.mxu0 0.0
  %2679 = vmatpush1.msra.mxu0 0.0
  %2680 = vmatprep.subr.mxu0 0.0
  %2681 = vmatpush1.msra.mxu0 0.0
  %2682 = vmatprep.subr.mxu0 0.0
  %2683 = vmatpush1.msra.mxu0 0.0
  %2684 = vmatprep.subr.mxu0 0.0
  %2685 = vmatpush1.msra.mxu0 0.0
  %2686 = vmatprep.subr.mxu0 0.0
  %2687 = vmatpush1.msra.mxu0 0.0
  %2688 = vmatprep.subr.mxu0 0.0
  %2689 = vmatpush1.msra.mxu0 %v2660
  %2690 = vmatprep.subr.mxu0 0.0
  %2691 = vmatpush1.msra.mxu0 %v2646
  %2692 = vmatprep.subr.mxu0 0.0
  %2693 = vmatpush1.msra.mxu0 %v2644
  %2694 = vmatprep.subr.mxu0 0.0
  %2695 = vmatpush2.msra.mxu0 0.0
  %2696 = vmatprep.subr.mxu0 0.0
  %2697 = vmatpush2.msra.mxu0 0.0
  %2698 = vmatprep.subr.mxu0 0.0
  %2699 = vmatpush2.msra.mxu0 0.0
  %2700 = vmatprep.subr.mxu0 0.0
  %2701 = vmatpush2.msra.mxu0 0.0
  %2702 = vmatprep.subr.mxu0 0.0
  %2703 = vmatpush2.msra.mxu0 0.0
  %2704 = vmatprep.subr.mxu0 0.0
  %2705 = vmatpush2.msra.mxu0 0.0
  %2706 = vmatprep.subr.mxu0 0.0
  %2707 = vmatpush2.msra.mxu0 0.0
  %2708 = vmatprep.subr.mxu0 0.0
  %2709 = vmatpush2.msra.mxu0 0.0
  %2710 = vmatprep.subr.mxu0 0.0
  %2711 = vmatpush2.msra.mxu0 0.0
  %2712 = vmatprep.subr.mxu0 0.0
  %2713 = vmatpush2.msra.mxu0 0.0
  %2714 = vmatprep.subr.mxu0 0.0
  %2715 = vmatpush2.msra.mxu0 0.0
  %2716 = vmatprep.subr.mxu0 0.0
  %2717 = vmatpush2.msra.mxu0 0.0
  %2718 = vmatprep.subr.mxu0 0.0
  %2719 = vmatpush2.msra.mxu0 0.0
  %2720 = vmatprep.subr.mxu0 0.0
  %2721 = vmatpush2.msra.mxu0 0.0
  %2722 = vmatprep.subr.mxu0 0.0
  %2723 = vmatpush2.msra.mxu0 0.0
  %2724 = vmatprep.subr.mxu0 0.0
  %2725 = vmatpush2.msra.mxu0 0.0
  %2726 = vmatprep.mubr.f32.mxu0 0.0
  %2727 = vmatmul.mubr.f32.gmra.mxu0 %v2652
  %v2728 = vpop.f32.mrf.mxu0
  %v2729 = vadd.f32 0.0, %v2728
  %v2730 = vpop.f32.mrf.mxu0
  %2731 = vmatprep.mubr.f32.mxu0 0.0
  %2732 = vmatmul.mubr.f32.gmra.mxu0 %v2655
  %v2733 = vpop.f32.mrf.mxu0
  %v2734 = vadd.f32 0.0, %v2733
  %v2735 = vpop.f32.mrf.mxu0
  %2736 = vmatprep.mubr.f32.mxu0 0.0
  %2737 = vmatmul.mubr.f32.gmra.mxu0 %v2658
  %v2738 = vpop.f32.mrf.mxu0
  %v2739 = vadd.f32 0.0, %v2738
  %v2740 = vpop.f32.mrf.mxu0
  %2741 = vdwg.mxu0
  %2742 = vrot.lane.b32.xlu0 %v1979, 104
  %v2743 = vpop.permute.xlu0 %2742
  %2744 = vrot.lane.b32.xlu0 %v1984, 104
  %v2745 = vpop.permute.xlu0 %2744
  %2746 = vrot.lane.b32.xlu0 %v1989, 104
  %v2747 = vpop.permute.xlu0 %2746
  %2748 = vrot.lane.b32.xlu0 %v1979, 72
  %v2749 = vpop.permute.xlu0 %2748
  %2750 = vrot.lane.b32.xlu0 %v1984, 72
  %v2751 = vpop.permute.xlu0 %2750
  %2752 = vrot.lane.b32.xlu0 %v1989, 72
  %v2753 = vpop.permute.xlu0 %2752
  %v2754 = vsel %vm351, %v2743, 0
  %v2756 = vsel %vm351, %v2745, 0
  %v2758 = vsel %vm351, %v2747, 0
  %v2760 = vsel %vm351, %v2749, 0
  %v2762 = vsel %vm351, %v2751, 0
  %v2764 = vsel %vm351, %v2753, 0
  %2766 = vmatprep.subr.mxu0 0.0
  %2767 = vmatpush1.xpose.msra.mxu0 0.0
  %2768 = vmatprep.subr.mxu0 0.0
  %2769 = vmatpush1.xpose.msra.mxu0 0.0
  %2770 = vmatprep.subr.mxu0 0.0
  %2771 = vmatpush1.xpose.msra.mxu0 0.0
  %2772 = vmatprep.subr.mxu0 0.0
  %2773 = vmatpush1.xpose.msra.mxu0 0.0
  %2774 = vmatprep.subr.mxu0 0.0
  %2775 = vmatpush1.xpose.msra.mxu0 0.0
  %2776 = vmatprep.subr.mxu0 0.0
  %2777 = vmatpush1.xpose.msra.mxu0 0.0
  %2778 = vmatprep.subr.mxu0 0.0
  %2779 = vmatpush1.xpose.msra.mxu0 0.0
  %2780 = vmatprep.subr.mxu0 0.0
  %2781 = vmatpush1.xpose.msra.mxu0 0.0
  %2782 = vmatprep.subr.mxu0 0.0
  %2783 = vmatpush1.xpose.msra.mxu0 0.0
  %2784 = vmatprep.subr.mxu0 0.0
  %2785 = vmatpush1.xpose.msra.mxu0 0.0
  %2786 = vmatprep.subr.mxu0 0.0
  %2787 = vmatpush1.xpose.msra.mxu0 0.0
  %2788 = vmatprep.subr.mxu0 0.0
  %2789 = vmatpush1.xpose.msra.mxu0 0.0
  %2790 = vmatprep.subr.mxu0 0.0
  %2791 = vmatpush1.xpose.msra.mxu0 0.0
  %2792 = vmatprep.subr.mxu0 0.0
  %2793 = vmatpush1.xpose.msra.mxu0 %v2764
  %2794 = vmatprep.subr.mxu0 0.0
  %2795 = vmatpush1.xpose.msra.mxu0 %v2762
  %2796 = vmatprep.subr.mxu0 0.0
  %2797 = vmatpush1.xpose.msra.mxu0 %v2760
  %2798 = vmatprep.subr.mxu0 0.0
  %2799 = vmatpush2.xpose.msra.mxu0 0.0
  %2800 = vmatprep.subr.mxu0 0.0
  %2801 = vmatpush2.xpose.msra.mxu0 0.0
  %2802 = vmatprep.subr.mxu0 0.0
  %2803 = vmatpush2.xpose.msra.mxu0 0.0
  %2804 = vmatprep.subr.mxu0 0.0
  %2805 = vmatpush2.xpose.msra.mxu0 0.0
  %2806 = vmatprep.subr.mxu0 0.0
  %2807 = vmatpush2.xpose.msra.mxu0 0.0
  %2808 = vmatprep.subr.mxu0 0.0
  %2809 = vmatpush2.xpose.msra.mxu0 0.0
  %2810 = vmatprep.subr.mxu0 0.0
  %2811 = vmatpush2.xpose.msra.mxu0 0.0
  %2812 = vmatprep.subr.mxu0 0.0
  %2813 = vmatpush2.xpose.msra.mxu0 0.0
  %2814 = vmatprep.subr.mxu0 0.0
  %2815 = vmatpush2.xpose.msra.mxu0 0.0
  %2816 = vmatprep.subr.mxu0 0.0
  %2817 = vmatpush2.xpose.msra.mxu0 0.0
  %2818 = vmatprep.subr.mxu0 0.0
  %2819 = vmatpush2.xpose.msra.mxu0 0.0
  %2820 = vmatprep.subr.mxu0 0.0
  %2821 = vmatpush2.xpose.msra.mxu0 0.0
  %2822 = vmatprep.subr.mxu0 0.0
  %2823 = vmatpush2.xpose.msra.mxu0 0.0
  %2824 = vmatprep.subr.mxu0 0.0
  %2825 = vmatpush2.xpose.msra.mxu0 0.0
  %2826 = vmatprep.subr.mxu0 0.0
  %2827 = vmatpush2.xpose.msra.mxu0 0.0
  %2828 = vmatprep.subr.mxu0 0.0
  %2829 = vmatpush2.xpose.msra.mxu0 0.0
  %2830 = vmatprep.mubr.f32.mxu0 0.0
  %2831 = vmatmul.mubr.f32.gmra.mxu0 %v2754
  %v2832 = vpop.f32.mrf.mxu0
  %v2833 = vadd.f32 0.0, %v2832
  %v2834 = vpop.f32.mrf.mxu0
  %2835 = vmatprep.mubr.f32.mxu0 0.0
  %2836 = vmatmul.mubr.f32.gmra.mxu0 %v2756
  %v2837 = vpop.f32.mrf.mxu0
  %v2838 = vadd.f32 0.0, %v2837
  %v2839 = vpop.f32.mrf.mxu0
  %2840 = vmatprep.mubr.f32.mxu0 0.0
  %2841 = vmatmul.mubr.f32.gmra.mxu0 %v2758
  %v2842 = vpop.f32.mrf.mxu0
  %v2843 = vadd.f32 0.0, %v2842
  %v2844 = vpop.f32.mrf.mxu0
  %2845 = vdwg.mxu0
  %v2846 = vmul.f32 %v2833, 0.35355338
  %v2847 = vmul.f32 %v2838, 0.35355338
  %v2848 = vmul.f32 %v2843, 0.35355338
  %v2849 = vadd.f32 %v2846, %v178
  %v2850 = vadd.f32 %v2847, %v179
  %v2851 = vadd.f32 %v2848, %v180
  %v2852 = vsel %vm450, %v2849, -inf
  %2853 = vmax.xlane.f32.xlu0 %v2852
  %v2854 = vpop.xlane.xlu0 %2853
  %v2855 = vsel %vm450, %v2850, -inf
  %2856 = vmax.xlane.f32.xlu0 %v2855
  %v2857 = vpop.xlane.xlu0 %2856
  %v2858 = vsel %vm457, %v2851, -inf
  %2859 = vmax.xlane.f32.xlu0 %v2858
  %v2860 = vpop.xlane.xlu0 %2859
  %v2861 = vsub.f32 %v2849, %v2854
  %v2862 = vsub.f32 %v2850, %v2857
  %v2863 = vsub.f32 %v2851, %v2860
  %v2864 = vmul.f32 %v2861, 1.442695
  %v2865 = vpow.pop %v2864
  %v2866 = vmul.f32 %v2862, 1.442695
  %v2867 = vpow.pop %v2866
  %v2868 = vmul.f32 %v2863, 1.442695
  %v2869 = vpow.pop %v2868
  %v2870 = vsel %vm450, %v2865, 0.0
  %2871 = vadd.xlane.f32.xlu0 %v2870
  %v2872 = vpop.xlane.xlu0 %2871
  %v2873 = vsel %vm450, %v2867, 0.0
  %2874 = vadd.xlane.f32.xlu0 %v2873
  %v2875 = vpop.xlane.xlu0 %2874
  %v2876 = vsel %vm457, %v2869, 0.0
  %2877 = vadd.xlane.f32.xlu0 %v2876
  %v2878 = vpop.xlane.xlu0 %2877
  %v2879 = vrcp.pop %v2872
  %v2880 = vrcp.pop %v2875
  %v2881 = vrcp.pop %v2878
  %v2882 = vmul.f32 %v2872, %v2879
  %v2883 = vmul.f32 %v2875, %v2880
  %v2884 = vmul.f32 %v2878, %v2881
  %v2885 = vsub.f32 2.0, %v2882
  %v2886 = vsub.f32 2.0, %v2883
  %v2887 = vsub.f32 2.0, %v2884
  %v2888 = vmul.f32 %v2879, %v2885
  %v2889 = vmul.f32 %v2880, %v2886
  %v2890 = vmul.f32 %v2881, %v2887
  %v2891 = vmul.f32 %v2865, %v2888
  %v2892 = vmul.f32 %v2867, %v2889
  %v2893 = vmul.f32 %v2869, %v2890
  %2894 = vrot.lane.b32.xlu0 %v1979, 40
  %v2895 = vpop.permute.xlu0 %2894
  %2896 = vrot.lane.b32.xlu0 %v1984, 40
  %v2897 = vpop.permute.xlu0 %2896
  %2898 = vrot.lane.b32.xlu0 %v1989, 40
  %v2899 = vpop.permute.xlu0 %2898
  %v2903 = vsel %vm450, %v2891, 0
  %v2906 = vsel %vm450, %v2892, 0
  %v2909 = vsel %vm450, %v2893, 0
  %v2911 = vsel %vm511, %v2899, 0
  %2913 = vmatprep.subr.mxu0 0.0
  %2914 = vmatpush1.msra.mxu0 0.0
  %2915 = vmatprep.subr.mxu0 0.0
  %2916 = vmatpush1.msra.mxu0 0.0
  %2917 = vmatprep.subr.mxu0 0.0
  %2918 = vmatpush1.msra.mxu0 0.0
  %2919 = vmatprep.subr.mxu0 0.0
  %2920 = vmatpush1.msra.mxu0 0.0
  %2921 = vmatprep.subr.mxu0 0.0
  %2922 = vmatpush1.msra.mxu0 0.0
  %2923 = vmatprep.subr.mxu0 0.0
  %2924 = vmatpush1.msra.mxu0 0.0
  %2925 = vmatprep.subr.mxu0 0.0
  %2926 = vmatpush1.msra.mxu0 0.0
  %2927 = vmatprep.subr.mxu0 0.0
  %2928 = vmatpush1.msra.mxu0 0.0
  %2929 = vmatprep.subr.mxu0 0.0
  %2930 = vmatpush1.msra.mxu0 0.0
  %2931 = vmatprep.subr.mxu0 0.0
  %2932 = vmatpush1.msra.mxu0 0.0
  %2933 = vmatprep.subr.mxu0 0.0
  %2934 = vmatpush1.msra.mxu0 0.0
  %2935 = vmatprep.subr.mxu0 0.0
  %2936 = vmatpush1.msra.mxu0 0.0
  %2937 = vmatprep.subr.mxu0 0.0
  %2938 = vmatpush1.msra.mxu0 0.0
  %2939 = vmatprep.subr.mxu0 0.0
  %2940 = vmatpush1.msra.mxu0 %v2911
  %2941 = vmatprep.subr.mxu0 0.0
  %2942 = vmatpush1.msra.mxu0 %v2897
  %2943 = vmatprep.subr.mxu0 0.0
  %2944 = vmatpush1.msra.mxu0 %v2895
  %2945 = vmatprep.subr.mxu0 0.0
  %2946 = vmatpush2.msra.mxu0 0.0
  %2947 = vmatprep.subr.mxu0 0.0
  %2948 = vmatpush2.msra.mxu0 0.0
  %2949 = vmatprep.subr.mxu0 0.0
  %2950 = vmatpush2.msra.mxu0 0.0
  %2951 = vmatprep.subr.mxu0 0.0
  %2952 = vmatpush2.msra.mxu0 0.0
  %2953 = vmatprep.subr.mxu0 0.0
  %2954 = vmatpush2.msra.mxu0 0.0
  %2955 = vmatprep.subr.mxu0 0.0
  %2956 = vmatpush2.msra.mxu0 0.0
  %2957 = vmatprep.subr.mxu0 0.0
  %2958 = vmatpush2.msra.mxu0 0.0
  %2959 = vmatprep.subr.mxu0 0.0
  %2960 = vmatpush2.msra.mxu0 0.0
  %2961 = vmatprep.subr.mxu0 0.0
  %2962 = vmatpush2.msra.mxu0 0.0
  %2963 = vmatprep.subr.mxu0 0.0
  %2964 = vmatpush2.msra.mxu0 0.0
  %2965 = vmatprep.subr.mxu0 0.0
  %2966 = vmatpush2.msra.mxu0 0.0
  %2967 = vmatprep.subr.mxu0 0.0
  %2968 = vmatpush2.msra.mxu0 0.0
  %2969 = vmatprep.subr.mxu0 0.0
  %2970 = vmatpush2.msra.mxu0 0.0
  %2971 = vmatprep.subr.mxu0 0.0
  %2972 = vmatpush2.msra.mxu0 0.0
  %2973 = vmatprep.subr.mxu0 0.0
  %2974 = vmatpush2.msra.mxu0 0.0
  %2975 = vmatprep.subr.mxu0 0.0
  %2976 = vmatpush2.msra.mxu0 0.0
  %2977 = vmatprep.mubr.f32.mxu0 0.0
  %2978 = vmatmul.mubr.f32.gmra.mxu0 %v2903
  %v2979 = vpop.f32.mrf.mxu0
  %v2980 = vadd.f32 0.0, %v2979
  %v2981 = vpop.f32.mrf.mxu0
  %2982 = vmatprep.mubr.f32.mxu0 0.0
  %2983 = vmatmul.mubr.f32.gmra.mxu0 %v2906
  %v2984 = vpop.f32.mrf.mxu0
  %v2985 = vadd.f32 0.0, %v2984
  %v2986 = vpop.f32.mrf.mxu0
  %2987 = vmatprep.mubr.f32.mxu0 0.0
  %2988 = vmatmul.mubr.f32.gmra.mxu0 %v2909
  %v2989 = vpop.f32.mrf.mxu0
  %v2990 = vadd.f32 0.0, %v2989
  %v2991 = vpop.f32.mrf.mxu0
  %2992 = vdwg.mxu0
  %2996 = vrot.lane.b32.xlu0 %v2478, 8
  %v2997 = vpop.permute.xlu0 %2996
  %2998 = vrot.lane.b32.xlu0 %v2483, 8
  %v2999 = vpop.permute.xlu0 %2998
  %3000 = vrot.lane.b32.xlu0 %v2488, 8
  %v3001 = vpop.permute.xlu0 %3000
  %3008 = vrot.lane.b32.xlu0 %v2729, 16
  %v3009 = vpop.permute.xlu0 %3008
  %3010 = vrot.lane.b32.xlu0 %v2734, 16
  %v3011 = vpop.permute.xlu0 %3010
  %3012 = vrot.lane.b32.xlu0 %v2739, 16
  %v3013 = vpop.permute.xlu0 %3012
  %3020 = vrot.lane.b32.xlu0 %v2980, 24
  %v3021 = vpop.permute.xlu0 %3020
  %3022 = vrot.lane.b32.xlu0 %v2985, 24
  %v3023 = vpop.permute.xlu0 %3022
  %3024 = vrot.lane.b32.xlu0 %v2990, 24
  %v3025 = vpop.permute.xlu0 %3024
  %v3029 = vsel %vm351, %v2227, %v2997
  %v3030 = vsel %vm351, %v2232, %v2999
  %v3031 = vsel %vm351, %v2237, %v3001
  %v3032 = vsel %vm1386, %v3029, %v3009
  %v3033 = vsel %vm1386, %v3030, %v3011
  %v3034 = vsel %vm1386, %v3031, %v3013
  %v3035 = vsel %vm1390, %v3032, %v3021
  %v3036 = vsel %vm1390, %v3033, %v3023
  %v3037 = vsel %vm1390, %v3034, %v3025
  %v3038 = vld [vmem:[%s1 + $0x200] sm:$0xff]
  %v3039 = vld [vmem:[%s1 + $0x208] sm:$0xff]
  %v3040 = vld [vmem:[%s1 + $0x210] sm:$0xff]
  %v3041 = vld [vmem:[%s1 + $0x218] sm:$0xff]
  %v3043 = vsel %vm189, %v3035, 0
  %v3046 = vsel %vm189, %v3036, 0
  %v3049 = vsel %vm189, %v3037, 0
  %3051 = vmatprep.subr.mxu0 0.0
  %3052 = vmatpush1.msra.mxu0 0.0
  %3053 = vmatprep.subr.mxu0 0.0
  %3054 = vmatpush1.msra.mxu0 0.0
  %3055 = vmatprep.subr.mxu0 0.0
  %3056 = vmatpush1.msra.mxu0 0.0
  %3057 = vmatprep.subr.mxu0 0.0
  %3058 = vmatpush1.msra.mxu0 0.0
  %3059 = vmatprep.subr.mxu0 0.0
  %3060 = vmatpush1.msra.mxu0 0.0
  %3061 = vmatprep.subr.mxu0 0.0
  %3062 = vmatpush1.msra.mxu0 0.0
  %3063 = vmatprep.subr.mxu0 0.0
  %3064 = vmatpush1.msra.mxu0 0.0
  %3065 = vmatprep.subr.mxu0 0.0
  %3066 = vmatpush1.msra.mxu0 0.0
  %3067 = vmatprep.subr.mxu0 0.0
  %3068 = vmatpush1.msra.mxu0 0.0
  %3069 = vmatprep.subr.mxu0 0.0
  %3070 = vmatpush1.msra.mxu0 0.0
  %3071 = vmatprep.subr.mxu0 0.0
  %3072 = vmatpush1.msra.mxu0 0.0
  %3073 = vmatprep.subr.mxu0 0.0
  %3074 = vmatpush1.msra.mxu0 0.0
  %3075 = vmatprep.subr.mxu0 0.0
  %3076 = vmatpush1.msra.mxu0 %v3041
  %3077 = vmatprep.subr.mxu0 0.0
  %3078 = vmatpush1.msra.mxu0 %v3040
  %3079 = vmatprep.subr.mxu0 0.0
  %3080 = vmatpush1.msra.mxu0 %v3039
  %3081 = vmatprep.subr.mxu0 0.0
  %3082 = vmatpush1.msra.mxu0 %v3038
  %3083 = vmatprep.subr.mxu0 0.0
  %3084 = vmatpush2.msra.mxu0 0.0
  %3085 = vmatprep.subr.mxu0 0.0
  %3086 = vmatpush2.msra.mxu0 0.0
  %3087 = vmatprep.subr.mxu0 0.0
  %3088 = vmatpush2.msra.mxu0 0.0
  %3089 = vmatprep.subr.mxu0 0.0
  %3090 = vmatpush2.msra.mxu0 0.0
  %3091 = vmatprep.subr.mxu0 0.0
  %3092 = vmatpush2.msra.mxu0 0.0
  %3093 = vmatprep.subr.mxu0 0.0
  %3094 = vmatpush2.msra.mxu0 0.0
  %3095 = vmatprep.subr.mxu0 0.0
  %3096 = vmatpush2.msra.mxu0 0.0
  %3097 = vmatprep.subr.mxu0 0.0
  %3098 = vmatpush2.msra.mxu0 0.0
  %3099 = vmatprep.subr.mxu0 0.0
  %3100 = vmatpush2.msra.mxu0 0.0
  %3101 = vmatprep.subr.mxu0 0.0
  %3102 = vmatpush2.msra.mxu0 0.0
  %3103 = vmatprep.subr.mxu0 0.0
  %3104 = vmatpush2.msra.mxu0 0.0
  %3105 = vmatprep.subr.mxu0 0.0
  %3106 = vmatpush2.msra.mxu0 0.0
  %3107 = vmatprep.subr.mxu0 0.0
  %3108 = vmatpush2.msra.mxu0 0.0
  %3109 = vmatprep.subr.mxu0 0.0
  %3110 = vmatpush2.msra.mxu0 0.0
  %3111 = vmatprep.subr.mxu0 0.0
  %3112 = vmatpush2.msra.mxu0 0.0
  %3113 = vmatprep.subr.mxu0 0.0
  %3114 = vmatpush2.msra.mxu0 0.0
  %3115 = vmatprep.mubr.f32.mxu0 0.0
  %3116 = vmatmul.mubr.f32.gmra.mxu0 %v3043
  %v3117 = vpop.f32.mrf.mxu0
  %v3118 = vadd.f32 0.0, %v3117
  %v3119 = vpop.f32.mrf.mxu0
  %3120 = vmatprep.mubr.f32.mxu0 0.0
  %3121 = vmatmul.mubr.f32.gmra.mxu0 %v3046
  %v3122 = vpop.f32.mrf.mxu0
  %v3123 = vadd.f32 0.0, %v3122
  %v3124 = vpop.f32.mrf.mxu0
  %3125 = vmatprep.mubr.f32.mxu0 0.0
  %3126 = vmatmul.mubr.f32.gmra.mxu0 %v3049
  %v3127 = vpop.f32.mrf.mxu0
  %v3128 = vadd.f32 0.0, %v3127
  %v3129 = vpop.f32.mrf.mxu0
  %3130 = vdwg.mxu0
  %v3131 = vadd.f32 %v1831, %v3118
  %v3132 = vadd.f32 %v1832, %v3123
  %v3133 = vadd.f32 %v1833, %v3128
  %v3134 = vlaneseq
  %v3135 = vshrl.u32 %v3134, 7
  %v3136 = vsub.s32 0, %v3135
  %v3137 = vrot.slane %v1837, %v3136
  %v3138 = vadd.f32 %v3131, %v3137
  %v3139 = vadd.f32 %v3132, %v3137
  %v3140 = vadd.f32 %v3133, %v3137
  %v3141 = vsel %vm189, %v3138, 0.0
  %3142 = vadd.xlane.f32.xlu0 %v3141
  %v3143 = vpop.xlane.xlu0 %3142
  %v3144 = vsel %vm189, %v3139, 0.0
  %3145 = vadd.xlane.f32.xlu0 %v3144
  %v3146 = vpop.xlane.xlu0 %3145
  %v3147 = vsel %vm196, %v3140, 0.0
  %3148 = vadd.xlane.f32.xlu0 %v3147
  %v3149 = vpop.xlane.xlu0 %3148
  %v3150 = vmul.f32 %v3143, %v200
  %v3151 = vmul.f32 %v3146, %v200
  %v3152 = vmul.f32 %v3149, %v200
  %v3153 = vsub.f32 %v3138, %v3150
  %v3154 = vsub.f32 %v3139, %v3151
  %v3155 = vsub.f32 %v3140, %v3152
  %v3156 = vmul.f32 %v3153, %v3153
  %v3157 = vmul.f32 %v3154, %v3154
  %v3158 = vmul.f32 %v3155, %v3155
  %v3159 = vsel %vm189, %v3156, 0.0
  %3160 = vadd.xlane.f32.xlu0 %v3159
  %v3161 = vpop.xlane.xlu0 %3160
  %v3162 = vsel %vm189, %v3157, 0.0
  %3163 = vadd.xlane.f32.xlu0 %v3162
  %v3164 = vpop.xlane.xlu0 %3163
  %v3165 = vsel %vm196, %v3158, 0.0
  %3166 = vadd.xlane.f32.xlu0 %v3165
  %v3167 = vpop.xlane.xlu0 %3166
  %v3168 = vmul.f32 %v3161, %v200
  %v3169 = vmul.f32 %v3164, %v200
  %v3170 = vmul.f32 %v3167, %v200
  %v3171 = vadd.f32 %v3168, 1e-06
  %v3172 = vadd.f32 %v3169, 1e-06
  %v3173 = vadd.f32 %v3170, 1e-06
  %v3174 = vrsqrt.pop %v3171
  %v3175 = vrsqrt.pop %v3172
  %v3176 = vrsqrt.pop %v3173
  %v3177 = vmul.f32 %v3153, %v3174
  %v3178 = vmul.f32 %v3154, %v3175
  %v3179 = vmul.f32 %v3155, %v3176
  %v3180 = vlaneseq
  %v3181 = vshrl.u32 %v3180, 7
  %v3182 = vsub.s32 0, %v3181
  %v3183 = vrot.slane %v1838, %v3182
  %v3184 = vmul.f32 %v3177, %v3183
  %v3185 = vmul.f32 %v3178, %v3183
  %v3186 = vmul.f32 %v3179, %v3183
  %v3187 = vlaneseq
  %v3188 = vshrl.u32 %v3187, 7
  %v3189 = vsub.s32 0, %v3188
  %v3190 = vrot.slane %v1839, %v3189
  %v3191 = vadd.f32 %v3184, %v3190
  %v3192 = vadd.f32 %v3185, %v3190
  %v3193 = vadd.f32 %v3186, %v3190
  %v3194 = vld [vmem:[%s1 + $0x220] sm:$0xff]
  %v3195 = vld [vmem:[%s1 + $0x228] sm:$0xff]
  %v3196 = vld [vmem:[%s1 + $0x230] sm:$0xff]
  %v3197 = vld [vmem:[%s1 + $0x238] sm:$0xff]
  %v3198 = vlaneseq
  %v3199 = vshrl.u32 %v3198, 7
  %v3200 = vsub.s32 0, %v3199
  %v3201 = vrot.slane %v1840, %v3200
  %v3203 = vsel %vm189, %v3191, 0
  %v3206 = vsel %vm189, %v3192, 0
  %v3209 = vsel %vm189, %v3193, 0
  %3211 = vmatprep.subr.mxu0 0.0
  %3212 = vmatpush1.msra.mxu0 0.0
  %3213 = vmatprep.subr.mxu0 0.0
  %3214 = vmatpush1.msra.mxu0 0.0
  %3215 = vmatprep.subr.mxu0 0.0
  %3216 = vmatpush1.msra.mxu0 0.0
  %3217 = vmatprep.subr.mxu0 0.0
  %3218 = vmatpush1.msra.mxu0 0.0
  %3219 = vmatprep.subr.mxu0 0.0
  %3220 = vmatpush1.msra.mxu0 0.0
  %3221 = vmatprep.subr.mxu0 0.0
  %3222 = vmatpush1.msra.mxu0 0.0
  %3223 = vmatprep.subr.mxu0 0.0
  %3224 = vmatpush1.msra.mxu0 0.0
  %3225 = vmatprep.subr.mxu0 0.0
  %3226 = vmatpush1.msra.mxu0 0.0
  %3227 = vmatprep.subr.mxu0 0.0
  %3228 = vmatpush1.msra.mxu0 0.0
  %3229 = vmatprep.subr.mxu0 0.0
  %3230 = vmatpush1.msra.mxu0 0.0
  %3231 = vmatprep.subr.mxu0 0.0
  %3232 = vmatpush1.msra.mxu0 0.0
  %3233 = vmatprep.subr.mxu0 0.0
  %3234 = vmatpush1.msra.mxu0 0.0
  %3235 = vmatprep.subr.mxu0 0.0
  %3236 = vmatpush1.msra.mxu0 %v3197
  %3237 = vmatprep.subr.mxu0 0.0
  %3238 = vmatpush1.msra.mxu0 %v3196
  %3239 = vmatprep.subr.mxu0 0.0
  %3240 = vmatpush1.msra.mxu0 %v3195
  %3241 = vmatprep.subr.mxu0 0.0
  %3242 = vmatpush1.msra.mxu0 %v3194
  %3243 = vmatprep.subr.mxu0 0.0
  %3244 = vmatpush2.msra.mxu0 0.0
  %3245 = vmatprep.subr.mxu0 0.0
  %3246 = vmatpush2.msra.mxu0 0.0
  %3247 = vmatprep.subr.mxu0 0.0
  %3248 = vmatpush2.msra.mxu0 0.0
  %3249 = vmatprep.subr.mxu0 0.0
  %3250 = vmatpush2.msra.mxu0 0.0
  %3251 = vmatprep.subr.mxu0 0.0
  %3252 = vmatpush2.msra.mxu0 0.0
  %3253 = vmatprep.subr.mxu0 0.0
  %3254 = vmatpush2.msra.mxu0 0.0
  %3255 = vmatprep.subr.mxu0 0.0
  %3256 = vmatpush2.msra.mxu0 0.0
  %3257 = vmatprep.subr.mxu0 0.0
  %3258 = vmatpush2.msra.mxu0 0.0
  %3259 = vmatprep.subr.mxu0 0.0
  %3260 = vmatpush2.msra.mxu0 0.0
  %3261 = vmatprep.subr.mxu0 0.0
  %3262 = vmatpush2.msra.mxu0 0.0
  %3263 = vmatprep.subr.mxu0 0.0
  %3264 = vmatpush2.msra.mxu0 0.0
  %3265 = vmatprep.subr.mxu0 0.0
  %3266 = vmatpush2.msra.mxu0 0.0
  %3267 = vmatprep.subr.mxu0 0.0
  %3268 = vmatpush2.msra.mxu0 0.0
  %3269 = vmatprep.subr.mxu0 0.0
  %3270 = vmatpush2.msra.mxu0 0.0
  %3271 = vmatprep.subr.mxu0 0.0
  %3272 = vmatpush2.msra.mxu0 0.0
  %3273 = vmatprep.subr.mxu0 0.0
  %3274 = vmatpush2.msra.mxu0 0.0
  %3275 = vmatprep.mubr.f32.mxu0 0.0
  %3276 = vmatmul.mubr.f32.gmra.mxu0 %v3203
  %v3277 = vpop.f32.mrf.mxu0
  %v3278 = vadd.f32 %v3201, %v3277
  %v3279 = vpop.f32.mrf.mxu0
  %3280 = vmatprep.mubr.f32.mxu0 0.0
  %3281 = vmatmul.mubr.f32.gmra.mxu0 %v3206
  %v3282 = vpop.f32.mrf.mxu0
  %v3283 = vadd.f32 %v3201, %v3282
  %v3284 = vpop.f32.mrf.mxu0
  %3285 = vmatprep.mubr.f32.mxu0 0.0
  %3286 = vmatmul.mubr.f32.gmra.mxu0 %v3209
  %v3287 = vpop.f32.mrf.mxu0
  %v3288 = vadd.f32 %v3201, %v3287
  %v3289 = vpop.f32.mrf.mxu0
  %3290 = vdwg.mxu0
  %v3291 = vmul.f32 %v3278, 0.5
  %v3292 = vmul.f32 %v3283, 0.5
  %v3293 = vmul.f32 %v3288, 0.5
  %v3294 = vmul.f32 %v3278, 0.70710677
  %v3295 = vmul.f32 %v3283, 0.70710677
  %v3296 = vmul.f32 %v3288, 0.70710677
  %v3297 = vand.u32 2147483647, %v3294
  %v3298 = vand.u32 2147483647, %v3295
  %v3299 = vand.u32 2147483647, %v3296
  %v3300 = vmul.f32 %v3297, 0.3275911
  %v3301 = vmul.f32 %v3298, 0.3275911
  %v3302 = vmul.f32 %v3299, 0.3275911
  %v3303 = vadd.f32 %v3300, 1.0
  %v3304 = vadd.f32 %v3301, 1.0
  %v3305 = vadd.f32 %v3302, 1.0
  %v3306 = vrcp.pop %v3303
  %v3307 = vmul.f32 1.0, %v3306
  %v3308 = vrcp.pop %v3304
  %v3309 = vmul.f32 1.0, %v3308
  %v3310 = vrcp.pop %v3305
  %v3311 = vmul.f32 1.0, %v3310
  %v3312 = vmul.f32 %v3307, 1.0614054
  %v3313 = vmul.f32 %v3309, 1.0614054
  %v3314 = vmul.f32 %v3311, 1.0614054
  %v3315 = vadd.f32 %v3312, -1.4531521
  %v3316 = vadd.f32 %v3313, -1.4531521
  %v3317 = vadd.f32 %v3314, -1.4531521
  %v3318 = vmul.f32 %v3315, %v3307
  %v3319 = vmul.f32 %v3316, %v3309
  %v3320 = vmul.f32 %v3317, %v3311
  %v3321 = vadd.f32 %v3318, 1.4214138
  %v3322 = vadd.f32 %v3319, 1.4214138
  %v3323 = vadd.f32 %v3320, 1.4214138
  %v3324 = vmul.f32 %v3321, %v3307
  %v3325 = vmul.f32 %v3322, %v3309
  %v3326 = vmul.f32 %v3323, %v3311
  %v3327 = vadd.f32 %v3324, -0.28449672
  %v3328 = vadd.f32 %v3325, -0.28449672
  %v3329 = vadd.f32 %v3326, -0.28449672
  %v3330 = vmul.f32 %v3327, %v3307
  %v3331 = vmul.f32 %v3328, %v3309
  %v3332 = vmul.f32 %v3329, %v3311
  %v3333 = vadd.f32 %v3330, 0.2548296
  %v3334 = vadd.f32 %v3331, 0.2548296
  %v3335 = vadd.f32 %v3332, 0.2548296
  %v3336 = vmul.f32 %v3333, %v3307
  %v3337 = vmul.f32 %v3334, %v3309
  %v3338 = vmul.f32 %v3335, %v3311
  %v3339 = vsub.f32 0.0, %v3297
  %v3340 = vsub.f32 0.0, %v3298
  %v3341 = vsub.f32 0.0, %v3299
  %v3342 = vmul.f32 %v3339, %v3297
  %v3343 = vmul.f32 %v3340, %v3298
  %v3344 = vmul.f32 %v3341, %v3299
  %v3345 = vmul.f32 %v3342, 1.442695
  %v3346 = vpow.pop %v3345
  %v3347 = vmul.f32 %v3343, 1.442695
  %v3348 = vpow.pop %v3347
  %v3349 = vmul.f32 %v3344, 1.442695
  %v3350 = vpow.pop %v3349
  %v3351 = vmul.f32 %v3336, %v3346
  %v3352 = vmul.f32 %v3337, %v3348
  %v3353 = vmul.f32 %v3338, %v3350
  %v3354 = vsub.f32 1.0, %v3351
  %v3355 = vsub.f32 1.0, %v3352
  %v3356 = vsub.f32 1.0, %v3353
  %vm3357 = vcmp.ge.f32.partialorder %v3294, 0.0
  %vm3358 = vcmp.ge.f32.partialorder %v3295, 0.0
  %vm3359 = vcmp.ge.f32.partialorder %v3296, 0.0
  %v3360 = vsub.f32 0.0, %v3354
  %v3361 = vsub.f32 0.0, %v3355
  %v3362 = vsub.f32 0.0, %v3356
  %v3363 = vsel %vm3357, %v3354, %v3360
  %v3364 = vsel %vm3358, %v3355, %v3361
  %v3365 = vsel %vm3359, %v3356, %v3362
  %v3366 = vadd.f32 %v3363, 1.0
  %v3367 = vadd.f32 %v3364, 1.0
  %v3368 = vadd.f32 %v3365, 1.0
  %v3369 = vmul.f32 %v3291, %v3366
  %v3370 = vmul.f32 %v3292, %v3367
  %v3371 = vmul.f32 %v3293, %v3368
  %v3372 = vld [vmem:[%s1 + $0x240] sm:$0xff]
  %v3373 = vld [vmem:[%s1 + $0x248] sm:$0xff]
  %v3374 = vld [vmem:[%s1 + $0x250] sm:$0xff]
  %v3375 = vld [vmem:[%s1 + $0x258] sm:$0xff]
  %v3376 = vld [vmem:[%s1 + $0x260] sm:$0xff]
  %v3377 = vld [vmem:[%s1 + $0x268] sm:$0xff]
  %v3378 = vld [vmem:[%s1 + $0x270] sm:$0xff]
  %v3379 = vld [vmem:[%s1 + $0x278] sm:$0xff]
  %v3380 = vld [vmem:[%s1 + $0x280] sm:$0xff]
  %v3381 = vld [vmem:[%s1 + $0x288] sm:$0xff]
  %v3382 = vld [vmem:[%s1 + $0x290] sm:$0xff]
  %v3383 = vld [vmem:[%s1 + $0x298] sm:$0xff]
  %v3384 = vld [vmem:[%s1 + $0x2a0] sm:$0xff]
  %v3385 = vld [vmem:[%s1 + $0x2a8] sm:$0xff]
  %v3386 = vld [vmem:[%s1 + $0x2b0] sm:$0xff]
  %v3387 = vld [vmem:[%s1 + $0x2b8] sm:$0xff]
  %3388 = vmatprep.subr.mxu0 0.0
  %3389 = vmatpush1.msra.mxu0 %v3387
  %3390 = vmatprep.subr.mxu0 0.0
  %3391 = vmatpush1.msra.mxu0 %v3386
  %3392 = vmatprep.subr.mxu0 0.0
  %3393 = vmatpush1.msra.mxu0 %v3385
  %3394 = vmatprep.subr.mxu0 0.0
  %3395 = vmatpush1.msra.mxu0 %v3384
  %3396 = vmatprep.subr.mxu0 0.0
  %3397 = vmatpush1.msra.mxu0 %v3383
  %3398 = vmatprep.subr.mxu0 0.0
  %3399 = vmatpush1.msra.mxu0 %v3382
  %3400 = vmatprep.subr.mxu0 0.0
  %3401 = vmatpush1.msra.mxu0 %v3381
  %3402 = vmatprep.subr.mxu0 0.0
  %3403 = vmatpush1.msra.mxu0 %v3380
  %3404 = vmatprep.subr.mxu0 0.0
  %3405 = vmatpush1.msra.mxu0 %v3379
  %3406 = vmatprep.subr.mxu0 0.0
  %3407 = vmatpush1.msra.mxu0 %v3378
  %3408 = vmatprep.subr.mxu0 0.0
  %3409 = vmatpush1.msra.mxu0 %v3377
  %3410 = vmatprep.subr.mxu0 0.0
  %3411 = vmatpush1.msra.mxu0 %v3376
  %3412 = vmatprep.subr.mxu0 0.0
  %3413 = vmatpush1.msra.mxu0 %v3375
  %3414 = vmatprep.subr.mxu0 0.0
  %3415 = vmatpush1.msra.mxu0 %v3374
  %3416 = vmatprep.subr.mxu0 0.0
  %3417 = vmatpush1.msra.mxu0 %v3373
  %3418 = vmatprep.subr.mxu0 0.0
  %3419 = vmatpush1.msra.mxu0 %v3372
  %3420 = vmatprep.subr.mxu0 0.0
  %3421 = vmatpush2.msra.mxu0 0.0
  %3422 = vmatprep.subr.mxu0 0.0
  %3423 = vmatpush2.msra.mxu0 0.0
  %3424 = vmatprep.subr.mxu0 0.0
  %3425 = vmatpush2.msra.mxu0 0.0
  %3426 = vmatprep.subr.mxu0 0.0
  %3427 = vmatpush2.msra.mxu0 0.0
  %3428 = vmatprep.subr.mxu0 0.0
  %3429 = vmatpush2.msra.mxu0 0.0
  %3430 = vmatprep.subr.mxu0 0.0
  %3431 = vmatpush2.msra.mxu0 0.0
  %3432 = vmatprep.subr.mxu0 0.0
  %3433 = vmatpush2.msra.mxu0 0.0
  %3434 = vmatprep.subr.mxu0 0.0
  %3435 = vmatpush2.msra.mxu0 0.0
  %3436 = vmatprep.subr.mxu0 0.0
  %3437 = vmatpush2.msra.mxu0 0.0
  %3438 = vmatprep.subr.mxu0 0.0
  %3439 = vmatpush2.msra.mxu0 0.0
  %3440 = vmatprep.subr.mxu0 0.0
  %3441 = vmatpush2.msra.mxu0 0.0
  %3442 = vmatprep.subr.mxu0 0.0
  %3443 = vmatpush2.msra.mxu0 0.0
  %3444 = vmatprep.subr.mxu0 0.0
  %3445 = vmatpush2.msra.mxu0 0.0
  %3446 = vmatprep.subr.mxu0 0.0
  %3447 = vmatpush2.msra.mxu0 0.0
  %3448 = vmatprep.subr.mxu0 0.0
  %3449 = vmatpush2.msra.mxu0 0.0
  %3450 = vmatprep.subr.mxu0 0.0
  %3451 = vmatpush2.msra.mxu0 0.0
  %3452 = vmatprep.mubr.f32.mxu0 0.0
  %3453 = vmatmul.mubr.f32.gmra.mxu0 %v3369
  %v3454 = vpop.f32.mrf.mxu0
  %v3455 = vadd.f32 0.0, %v3454
  %v3456 = vpop.f32.mrf.mxu0
  %3457 = vmatprep.mubr.f32.mxu0 0.0
  %3458 = vmatmul.mubr.f32.gmra.mxu0 %v3370
  %v3459 = vpop.f32.mrf.mxu0
  %v3460 = vadd.f32 0.0, %v3459
  %v3461 = vpop.f32.mrf.mxu0
  %3462 = vmatprep.mubr.f32.mxu0 0.0
  %3463 = vmatmul.mubr.f32.gmra.mxu0 %v3371
  %v3464 = vpop.f32.mrf.mxu0
  %v3465 = vadd.f32 0.0, %v3464
  %v3466 = vpop.f32.mrf.mxu0
  %3467 = vdwg.mxu0
  %v3468 = vadd.f32 %v3138, %v3455
  %v3469 = vadd.f32 %v3139, %v3460
  %v3470 = vadd.f32 %v3140, %v3465
  %v3471 = vlaneseq
  %v3472 = vshrl.u32 %v3471, 7
  %v3473 = vsub.s32 0, %v3472
  %v3474 = vrot.slane %v1841, %v3473
  %v3475 = vadd.f32 %v3468, %v3474
  %v3476 = vadd.f32 %v3469, %v3474
  %v3477 = vadd.f32 %v3470, %v3474
  %v3478 = vld [vmem:[%s2 + $0x10] sm:$0x1]
  %v3479 = vld [vmem:[%s2 + $0x11] sm:$0x1]
  %v3480 = vsel %vm189, %v3475, 0.0
  %3481 = vadd.xlane.f32.xlu0 %v3480
  %v3482 = vpop.xlane.xlu0 %3481
  %v3483 = vsel %vm189, %v3476, 0.0
  %3484 = vadd.xlane.f32.xlu0 %v3483
  %v3485 = vpop.xlane.xlu0 %3484
  %v3486 = vsel %vm196, %v3477, 0.0
  %3487 = vadd.xlane.f32.xlu0 %v3486
  %v3488 = vpop.xlane.xlu0 %3487
  %v3489 = vmul.f32 %v3482, %v200
  %v3490 = vmul.f32 %v3485, %v200
  %v3491 = vmul.f32 %v3488, %v200
  %v3492 = vsub.f32 %v3475, %v3489
  %v3493 = vsub.f32 %v3476, %v3490
  %v3494 = vsub.f32 %v3477, %v3491
  %v3495 = vmul.f32 %v3492, %v3492
  %v3496 = vmul.f32 %v3493, %v3493
  %v3497 = vmul.f32 %v3494, %v3494
  %v3498 = vsel %vm189, %v3495, 0.0
  %3499 = vadd.xlane.f32.xlu0 %v3498
  %v3500 = vpop.xlane.xlu0 %3499
  %v3501 = vsel %vm189, %v3496, 0.0
  %3502 = vadd.xlane.f32.xlu0 %v3501
  %v3503 = vpop.xlane.xlu0 %3502
  %v3504 = vsel %vm196, %v3497, 0.0
  %3505 = vadd.xlane.f32.xlu0 %v3504
  %v3506 = vpop.xlane.xlu0 %3505
  %v3507 = vmul.f32 %v3500, %v200
  %v3508 = vmul.f32 %v3503, %v200
  %v3509 = vmul.f32 %v3506, %v200
  %v3510 = vadd.f32 %v3507, 1e-06
  %v3511 = vadd.f32 %v3508, 1e-06
  %v3512 = vadd.f32 %v3509, 1e-06
  %v3513 = vrsqrt.pop %v3510
  %v3514 = vrsqrt.pop %v3511
  %v3515 = vrsqrt.pop %v3512
  %v3516 = vmul.f32 %v3492, %v3513
  %v3517 = vmul.f32 %v3493, %v3514
  %v3518 = vmul.f32 %v3494, %v3515
  %v3519 = vlaneseq
  %v3520 = vshrl.u32 %v3519, 7
  %v3521 = vsub.s32 0, %v3520
  %v3522 = vrot.slane %v3478, %v3521
  %v3523 = vmul.f32 %v3516, %v3522
  %v3524 = vmul.f32 %v3517, %v3522
  %v3525 = vmul.f32 %v3518, %v3522
  %v3526 = vlaneseq
  %v3527 = vshrl.u32 %v3526, 7
  %v3528 = vsub.s32 0, %v3527
  %v3529 = vrot.slane %v3479, %v3528
  %v3530 = vadd.f32 %v3523, %v3529
  %v3531 = vadd.f32 %v3524, %v3529
  %v3532 = vadd.f32 %v3525, %v3529
  %3533 = vst.msk [vmem:[%s3] sm:$0xff] %vm189, %v3530
  %3534 = vst.msk [vmem:[%s3 + $0x8] sm:$0xff] %vm189, %v3531
  %3535 = vst.msk [vmem:[%s3 + $0x10] sm:$0x3] %vm196, %v3532
  // Predicated region
  $region14: #{mbt_unimodal_forward.1} parent=0 // pred_check
    _
  $region15: #{mbt_unimodal_forward.1} parent=0 // pred_check_branch
    %3537 = sbr.rel (0) target = $region17
  $region16: #{mbt_unimodal_forward.1} parent=0 // pred_region
    _
  $region17: #{mbt_unimodal_forward.1} parent=0 // pred_fallthru
    _
  // Predicated region
  $region18: #{mbt_unimodal_forward.1} parent=0 // pred_check
    _
  $region19: #{mbt_unimodal_forward.1} parent=0 // pred_check_branch
    %3539 = sbr.rel (0) target = $region21
  $region20: #{mbt_unimodal_forward.1} parent=0 // pred_region
    _
  $region21: #{mbt_unimodal_forward.1} parent=0 // pred_fallthru
    _

</llo_original>
